<compile_context>
chip_gen: v6e
topology: v6e:2x2x1
jax: 0.10.0
libtpu: 0.0.40
codegen_flags: <defaults>
</compile_context>

<pallas_src>
import numpy as np
import jax
import jax.numpy as jnp
from jax import lax
from jax.experimental import pallas as pl
from jax.experimental.pallas import tpu as pltpu

CHANNEL = 4
BN_EPS = 1e-5


# ----------------------------------------------------------------------------
# Host-side (trace-time, numpy) constant builders.
# ----------------------------------------------------------------------------
def _conv_geom(H, W, pad, dil, stride):
    Hp, Wp = H + 2 * pad, W + 2 * pad
    Ho = (H + 2 * pad - 2 * dil - 1) // stride + 1
    Wo = (W + 2 * pad - 2 * dil - 1) // stride + 1
    off_max = 2 * dil * Wp + 2 * dil            # flat offset of the (kh=2, kw=2) tap
    return Hp, Wp, Ho, Wo, off_max


def _tap_offsets(Wp, dil):
    return tuple(kh * dil * Wp + kw * dil for kh in range(3) for kw in range(3))


def _sel_matrix(B, H, W, pad, dil, stride):
    """0/1 gather: (L window-start positions) -> (B*Ho*Wo valid conv outputs)."""
    Hp, Wp, Ho, Wo, off_max = _conv_geom(H, W, pad, dil, stride)
    L = B * Hp * Wp - off_max
    M = np.zeros((L, B * Ho * Wo), np.float32)
    for b in range(B):
        for ho in range(Ho):
            for wo in range(Wo):
                q = b * Hp * Wp + ho * stride * Wp + wo * stride
                M[q, b * Ho * Wo + ho * Wo + wo] = 1.0
    return M


def _valid_mask(B, H, W, pad, dil, stride):
    """(L,) mask of window-start positions that are real conv outputs."""
    Hp, Wp, Ho, Wo, off_max = _conv_geom(H, W, pad, dil, stride)
    L = B * Hp * Wp - off_max
    m = np.zeros((L,), np.float32)
    for b in range(B):
        for ho in range(Ho):
            for wo in range(Wo):
                m[b * Hp * Wp + ho * stride * Wp + wo * stride] = 1.0
    return m


def _pad_matrix(B, H, W, pad):
    """0/1 scatter: valid flat (B*H*W) -> zero-padded flat (B*Hp*Wp)."""
    Hp, Wp = H + 2 * pad, W + 2 * pad
    M = np.zeros((B * H * W, B * Hp * Wp), np.float32)
    for b in range(B):
        for h in range(H):
            for w in range(W):
                M[b * H * W + h * W + w,
                  b * Hp * Wp + (h + pad) * Wp + (w + pad)] = 1.0
    return M


def _interp_1d(dst, src):
    """align_corners=True linear interpolation matrix (dst, src)."""
    if dst == 1:
        pos = np.zeros((1,), np.float64)
    else:
        pos = np.arange(dst, dtype=np.float64) * (src - 1) / (dst - 1)
    i0 = np.clip(np.floor(pos).astype(np.int64), 0, src - 1)
    i1 = np.minimum(i0 + 1, src - 1)
    frac = (pos - i0).astype(np.float32)
    m = np.zeros((dst, src), np.float32)
    m[np.arange(dst), i0] += 1.0 - frac
    m[np.arange(dst), i1] += frac
    return m


def _resize_matrix(B, Hs, Ws, Hd, Wd):
    """(B*Hs*Ws) -> (B*Hd*Wd) separable bilinear (align_corners=True)."""
    Rh = _interp_1d(Hd, Hs)
    Rw = _interp_1d(Wd, Ws)
    Msm = np.einsum('dh,ew->hwde', Rh, Rw).reshape(Hs * Ws, Hd * Wd)
    return np.kron(np.eye(B, dtype=np.float32), Msm).astype(np.float32)


# ----------------------------------------------------------------------------
# Parameters (Conv2d weights, BN gamma=1 / beta=0; BN runs in training mode,
# i.e. batch statistics, like the torch reference).
# ----------------------------------------------------------------------------
def init_params(key, channel):
    names = ["conv1", "conv2", "conv3", "conv_rev1", "conv_rev2", "conv_sum"]
    keys = jax.random.split(key, len(names))
    fan_in = channel * 9
    params = {}
    for name, k in zip(names, keys):
        w = jax.random.normal(k, (channel, channel, 3, 3), jnp.float32) * np.sqrt(2.0 / fan_in)
        params[name] = (w, jnp.ones((channel,), jnp.float32), jnp.zeros((channel,), jnp.float32))
    return params


# ----------------------------------------------------------------------------
# Fused USRM3 forward: one grid-less pallas_call.
# ----------------------------------------------------------------------------
def usrm3_forward(x_nchw, params):
    B, C, H, W = map(int, x_nchw.shape)
    H1, W1 = H // 2, W // 2          # y1 grid
    H2, W2 = H1 // 2, W1 // 2        # y2 / y3 grid
    n0, n1, n2 = float(B * H * W), float(B * H1 * W1), float(B * H2 * W2)

    def tap_info(Hin, Win, pad, dil):
        Hp, Wp, _, _, off_max = _conv_geom(Hin, Win, pad, dil, 1)
        return _tap_offsets(Wp, dil), B * Hp * Wp - off_max

    offs1, L1 = tap_info(H, W, 1, 1)      # conv1 / conv_sum  (pad 1, dil 1)
    offs2, L2 = tap_info(H1, W1, 1, 1)    # conv2 / conv_rev2 (pad 1, dil 1)
    offs3, L3 = tap_info(H2, W2, 2, 2)    # conv3             (pad 2, dil 2)
    offs4, L4 = tap_info(H2, W2, 1, 1)    # conv_rev1         (pad 1, dil 1)

    P41 = B * (H2 + 2) * (W2 + 2)         # width of the pad-1 y2 scatter domain
    CO = ((max(C, 8) + 7) // 8) * 8       # output sublanes, padded to 8
    LOUT = ((max(L1, L2, L3, L4) + 127) // 128) * 128   # padded lane width (640)

    # --- composed projection matrices (valid-gather x resize x zero-pad scatter) ---
    SEL1 = _sel_matrix(B, H, W, 1, 1, 2)
    SEL2 = _sel_matrix(B, H1, W1, 1, 1, 2)
    SEL3 = _sel_matrix(B, H2, W2, 2, 2, 1)
    SEL4 = _sel_matrix(B, H2, W2, 1, 1, 1)
    SEL5 = _sel_matrix(B, H1, W1, 1, 1, 1)
    PAD81 = _pad_matrix(B, H1, W1, 1)
    PAD42 = _pad_matrix(B, H2, W2, 2)
    PAD41 = _pad_matrix(B, H2, W2, 1)
    PAD161 = _pad_matrix(B, H, W, 1)
    R44 = _resize_matrix(B, H2, W2, H2, W2)      # identity at this shape
    R48 = _resize_matrix(B, H2, W2, H1, W1)
    R816 = _resize_matrix(B, H1, W1, H, W)

    as_bf16 = lambda a: jnp.asarray(a, jnp.bfloat16)
    G1 = as_bf16(SEL1 @ PAD81)                                       # (L1, 200)
    G2 = as_bf16(np.concatenate([SEL2 @ PAD41, SEL2 @ PAD42], axis=1))  # (L2, 72+128)
    G3 = as_bf16(SEL3 @ R44 @ PAD41)                                 # (L3, 72)
    G4 = as_bf16(SEL4 @ R48 @ PAD81)                                 # (L4, 200)
    G5 = as_bf16(SEL5 @ R816 @ PAD161)                               # (L2, B*(H+2)*(W+2))

    # --- BN validity masks packed into one lane-dense (6, LOUT) slab ---
    def mk_mask(m):
        row = np.zeros((LOUT,), np.float32)
        row[:m.shape[0]] = m
        return row
    MASKS = jnp.asarray(np.stack([
        mk_mask(_valid_mask(B, H, W, 1, 1, 2)),
        mk_mask(_valid_mask(B, H1, W1, 1, 1, 2)),
        mk_mask(_valid_mask(B, H2, W2, 2, 2, 1)),
        mk_mask(_valid_mask(B, H2, W2, 1, 1, 1)),
        mk_mask(_valid_mask(B, H1, W1, 1, 1, 1)),
        mk_mask(_valid_mask(B, H, W, 1, 1, 1))], axis=0))

    # --- weights (tap-major (C, 9C) per conv, stacked) and gamma|beta slab ---
    names = ["conv1", "conv2", "conv3", "conv_rev1", "conv_rev2", "conv_sum"]
    WALL = jnp.concatenate(
        [jnp.transpose(params[n][0], (0, 2, 3, 1)).reshape(C, 9 * C) for n in names],
        axis=0)                                                      # (6C, 9C)
    GB = jnp.concatenate(
        [jnp.stack([params[n][1] for n in names], axis=1),
         jnp.stack([params[n][2] for n in names], axis=1)], axis=1)  # (C, 12)

    # input: channels on sublanes, zero-padded flat spatial on lanes
    xcf = jnp.transpose(x_nchw, (1, 0, 2, 3)).astype(jnp.float32)
    xpad = jnp.pad(xcf, ((0, 0), (0, 0), (1, 1), (1, 1))).reshape(C, B * (H + 2) * (W + 2))

    def kernel(x_ref, w_ref, gb_ref, m_ref, g1_ref, g2_ref, g3_ref, g4_ref, g5_ref, o_ref):
        wall = w_ref[...]            # (6C, 9C)  f32
        gb = gb_ref[...]             # (C, 12)   f32  (gamma | beta)
        masks = m_ref[...]           # (6, LOUT) f32
        xp = x_ref[...]              # (C, B*(H+2)*(W+2)) f32

        def conv(a, idx, offs, L):
            # in-kernel im2col: 9 static unit-stride lane slices stacked on
            # sublanes, then one lane-dense (C, 9C) @ (9C, L) MXU matmul.
            p9 = jnp.concatenate([a[:, o:o + L] for o in offs], axis=0)      # (9C, L)
            wf = wall[idx * C:(idx + 1) * C, :]                              # (C, 9C)
            return jnp.dot(wf, p9, preferred_element_type=jnp.float32)       # (C, L)

        def bn(v, idx, n, L):
            # train-mode BatchNorm over the valid conv outputs only (masked),
            # one pass (sum and sum-of-squares); affine folded into scale/shift.
            m = masks[idx:idx + 1, :L]
            vm = v * m
            mean = jnp.sum(vm, axis=1, keepdims=True) * (1.0 / n)
            ex2 = jnp.sum(vm * v, axis=1, keepdims=True) * (1.0 / n)
            s = gb[:, idx:idx + 1] * lax.rsqrt(ex2 - mean * mean + BN_EPS)
            return v * s + (gb[:, 6 + idx:7 + idx] - mean * s)

        def proj(v, g_ref):
            # fused valid-gather / bilinear-resize / zero-pad scatter: one bf16
            # matmul (f32 accumulate); invalid wide lanes hit all-zero rows.
            return jnp.dot(v.astype(jnp.bfloat16), g_ref[...],
                           preferred_element_type=jnp.float32)

        # conv1 -> y1 scattered straight into conv2's zero-padded input domain
        v1 = bn(conv(xp, 0, offs1, L1), 0, n1, L1)
        y1p = proj(v1, g1_ref)                                   # (C, padded 10x10 flat)
        # conv2 -> y2 scattered into both the pad-1 (skip / conv_rev1) and the
        # pad-2 (dilated conv3) domains with a single projection matmul
        v2 = bn(conv(y1p, 1, offs2, L2), 1, n2, L2)
        y2p = proj(v2, g2_ref)
        y2p1, y2p2 = y2p[:, :P41], y2p[:, P41:]
        # conv3 (dilated); y2up = bilinear(y3) (same grid) fused into the projection
        v3 = bn(conv(y2p2, 2, offs3, L3), 2, n2, L3)
        z2 = y2p1 + proj(v3, g3_ref)                             # y2 + y2up (pad-1 domain)
        # conv_rev1; y1up = bilinear(.) + scatter fused into the projection
        v4 = bn(conv(z2, 3, offs4, L4), 3, n2, L4)
        z1 = y1p + proj(v4, g4_ref)                              # y1 + y1up (pad-1 domain)
        # conv_rev2; y = bilinear(.) to the input grid + conv_sum zero-pad fused
        v5 = bn(conv(z1, 4, offs2, L2), 4, n1, L2)
        zs = jnp.maximum(xp + proj(v5, g5_ref), 0.0)             # relu(x + y), padded
        # conv_sum (masked BN); zero invalid lanes so the output slab is clean
        out = bn(conv(zs, 5, offs1, L1), 5, n0, L1) * masks[5:6, :L1]

        o_ref[...] = jnp.zeros_like(o_ref)                       # dense (CO, LOUT) store
        o_ref[0:C, 0:L1] = out

    inputs = (xpad, WALL, GB, MASKS, G1, G2, G3, G4, G5)
    out_slab = pl.pallas_call(
        kernel,
        out_shape=jax.ShapeDtypeStruct((CO, LOUT), jnp.float32),
        in_specs=[pl.BlockSpec(memory_space=pltpu.MemorySpace.VMEM)] * len(inputs),
        out_specs=pl.BlockSpec(memory_space=pltpu.MemorySpace.VMEM),
    )(*inputs)

    # (CO, LOUT) slab -> (B, C, H, W): valid window-start lanes form the HxW grid.
    Hp, Wp = H + 2, W + 2
    full = jnp.pad(out_slab[:C, :L1], ((0, 0), (0, B * Hp * Wp - L1)))
    out = full.reshape(C, B, Hp, Wp)[:, :, :H, :W]
    return jnp.transpose(out, (1, 0, 2, 3))


# ----------------------------------------------------------------------------
# Pure-JAX (XLA) reference of the PyTorch forward, for a correctness check.
# ----------------------------------------------------------------------------
def _ref_basic_conv(x, params3, stride, pad, dil):
    w, gamma, beta = params3
    y = lax.conv_general_dilated(
        x, w, window_strides=(stride, stride),
        padding=[(pad, pad), (pad, pad)], rhs_dilation=(dil, dil),
        dimension_numbers=('NCHW', 'OIHW', 'NCHW'))
    mean = jnp.mean(y, axis=(0, 2, 3), keepdims=True)
    var = jnp.mean((y - mean) ** 2, axis=(0, 2, 3), keepdims=True)
    return ((y - mean) * lax.rsqrt(var + BN_EPS) * gamma.reshape(1, -1, 1, 1)
            + beta.reshape(1, -1, 1, 1))


def _ref_resize(x, hd, wd):
    _, _, hs, ws = x.shape
    Rh = jnp.asarray(_interp_1d(hd, hs))
    Rw = jnp.asarray(_interp_1d(wd, ws))
    return jnp.einsum('dh,ew,bchw->bcde', Rh, Rw, x)


def usrm3_reference(x, params):
    y1 = _ref_basic_conv(x, params['conv1'], 2, 1, 1)
    y2 = _ref_basic_conv(y1, params['conv2'], 2, 1, 1)
    y3 = _ref_basic_conv(y2, params['conv3'], 1, 2, 2)
    y2 = _ref_basic_conv(y2 + _ref_resize(y3, *y2.shape[2:]), params['conv_rev1'], 1, 1, 1)
    y1 = _ref_basic_conv(y1 + _ref_resize(y2, *y1.shape[2:]), params['conv_rev2'], 1, 1, 1)
    y = _ref_resize(y1, *x.shape[2:])
    return _ref_basic_conv(jax.nn.relu(x + y), params['conv_sum'], 1, 1, 1)


if __name__ == "__main__":
    key = jax.random.PRNGKey(0)
    kx, kp = jax.random.split(key)
    x = jax.random.normal(kx, (2, CHANNEL, 16, 16), jnp.float32)
    params = init_params(kp, CHANNEL)

    out = jax.block_until_ready(jax.jit(usrm3_forward)(x, params))
    assert out.shape == (2, CHANNEL, 16, 16), out.shape
    assert bool(jnp.all(jnp.isfinite(out)))

    with jax.default_matmul_precision("float32"):
        ref = jax.block_until_ready(jax.jit(usrm3_reference)(x, params))
    err = float(jnp.max(jnp.abs(out - ref)))
    # default-precision MXU dots truncate operands to bf16 -> loose tolerance
    assert err < 1e-1, f"kernel/reference mismatch: max abs err = {err}"
    print("KERNEL_OK")
</pallas_src>

<mosaic_0001>
module attributes {stable_mosaic.version = 11 : i64} {
  func.func @kernel(%arg0: memref<4x648xf32, #tpu.memory_space<vmem>>, %arg1: memref<24x36xf32, #tpu.memory_space<vmem>>, %arg2: memref<4x12xf32, #tpu.memory_space<vmem>>, %arg3: memref<6x640xf32, #tpu.memory_space<vmem>>, %arg4: memref<610x200xbf16, #tpu.memory_space<vmem>>, %arg5: memref<178x200xbf16, #tpu.memory_space<vmem>>, %arg6: memref<92x72xbf16, #tpu.memory_space<vmem>>, %arg7: memref<58x200xbf16, #tpu.memory_space<vmem>>, %arg8: memref<178x648xbf16, #tpu.memory_space<vmem>>, %arg9: memref<8x640xf32, #tpu.memory_space<vmem>>) attributes {dimension_semantics = [], scalar_prefetch = 0 : i64, scratch_operands = 0 : i64, tpu.core_type = #tpu.core_type<tc>} {
    %c0 = arith.constant 0 : index
    %c0_0 = arith.constant 0 : index
    %0 = vector.load %arg1[%c0, %c0_0] : memref<24x36xf32, #tpu.memory_space<vmem>>, vector<24x36xf32>
    %c0_1 = arith.constant 0 : index
    %c0_2 = arith.constant 0 : index
    %1 = vector.load %arg2[%c0_1, %c0_2] : memref<4x12xf32, #tpu.memory_space<vmem>>, vector<4x12xf32>
    %c0_3 = arith.constant 0 : index
    %c0_4 = arith.constant 0 : index
    %2 = vector.load %arg3[%c0_3, %c0_4] : memref<6x640xf32, #tpu.memory_space<vmem>>, vector<6x640xf32>
    %c0_5 = arith.constant 0 : index
    %c0_6 = arith.constant 0 : index
    %3 = vector.load %arg0[%c0_5, %c0_6] : memref<4x648xf32, #tpu.memory_space<vmem>>, vector<4x648xf32>
    %4 = vector.extract_strided_slice %3 {offsets = [0, 0], sizes = [4, 610], strides = [1, 1]} : vector<4x648xf32> to vector<4x610xf32>
    %5 = vector.extract_strided_slice %3 {offsets = [0, 1], sizes = [4, 610], strides = [1, 1]} : vector<4x648xf32> to vector<4x610xf32>
    %6 = vector.extract_strided_slice %3 {offsets = [0, 2], sizes = [4, 610], strides = [1, 1]} : vector<4x648xf32> to vector<4x610xf32>
    %7 = vector.extract_strided_slice %3 {offsets = [0, 18], sizes = [4, 610], strides = [1, 1]} : vector<4x648xf32> to vector<4x610xf32>
    %8 = vector.extract_strided_slice %3 {offsets = [0, 19], sizes = [4, 610], strides = [1, 1]} : vector<4x648xf32> to vector<4x610xf32>
    %9 = vector.extract_strided_slice %3 {offsets = [0, 20], sizes = [4, 610], strides = [1, 1]} : vector<4x648xf32> to vector<4x610xf32>
    %10 = vector.extract_strided_slice %3 {offsets = [0, 36], sizes = [4, 610], strides = [1, 1]} : vector<4x648xf32> to vector<4x610xf32>
    %11 = vector.extract_strided_slice %3 {offsets = [0, 37], sizes = [4, 610], strides = [1, 1]} : vector<4x648xf32> to vector<4x610xf32>
    %12 = vector.extract_strided_slice %3 {offsets = [0, 38], sizes = [4, 610], strides = [1, 1]} : vector<4x648xf32> to vector<4x610xf32>
    %13 = tpu.concatenate %4, %5, %6, %7, %8, %9, %10, %11, %12 in 0 : vector<4x610xf32>, vector<4x610xf32>, vector<4x610xf32>, vector<4x610xf32>, vector<4x610xf32>, vector<4x610xf32>, vector<4x610xf32>, vector<4x610xf32>, vector<4x610xf32> -> vector<36x610xf32>
    %14 = vector.extract_strided_slice %0 {offsets = [0, 0], sizes = [4, 36], strides = [1, 1]} : vector<24x36xf32> to vector<4x36xf32>
    %cst = arith.constant dense<0.000000e+00> : vector<4x610xf32>
    %15 = tpu.matmul %14, %13, %cst {dimension_numbers = #tpu.dot_dimension_numbers<[1], [0], [0], [1], [0, 0, 1, 1], [], []>} : vector<4x36xf32>, vector<36x610xf32>, vector<4x610xf32> -> vector<4x610xf32>
    %16 = vector.extract_strided_slice %2 {offsets = [0, 0], sizes = [1, 610], strides = [1, 1]} : vector<6x640xf32> to vector<1x610xf32>
    %17 = vector.broadcast %16 : vector<1x610xf32> to vector<4x610xf32>
    %18 = arith.mulf %15, %17 : vector<4x610xf32>
    %cst_7 = arith.constant dense<0.000000e+00> : vector<4xf32>
    %19 = vector.multi_reduction <add>, %18, %cst_7 [1] : vector<4x610xf32> to vector<4xf32>
    %20 = vector.shape_cast %19 : vector<4xf32> to vector<4x1xf32>
    %cst_8 = arith.constant 7.812500e-03 : f32
    %21 = vector.broadcast %cst_8 : f32 to vector<4x1xf32>
    %22 = arith.mulf %20, %21 : vector<4x1xf32>
    %23 = arith.mulf %18, %15 : vector<4x610xf32>
    %cst_9 = arith.constant dense<0.000000e+00> : vector<4xf32>
    %24 = vector.multi_reduction <add>, %23, %cst_9 [1] : vector<4x610xf32> to vector<4xf32>
    %25 = vector.shape_cast %24 : vector<4xf32> to vector<4x1xf32>
    %cst_10 = arith.constant 7.812500e-03 : f32
    %26 = vector.broadcast %cst_10 : f32 to vector<4x1xf32>
    %27 = arith.mulf %25, %26 : vector<4x1xf32>
    %28 = vector.extract_strided_slice %1 {offsets = [0, 0], sizes = [4, 1], strides = [1, 1]} : vector<4x12xf32> to vector<4x1xf32>
    %29 = arith.mulf %22, %22 : vector<4x1xf32>
    %30 = arith.subf %27, %29 : vector<4x1xf32>
    %cst_11 = arith.constant 9.99999974E-6 : f32
    %31 = vector.broadcast %cst_11 : f32 to vector<4x1xf32>
    %32 = arith.addf %30, %31 : vector<4x1xf32>
    %33 = math.rsqrt %32 : vector<4x1xf32>
    %34 = arith.mulf %28, %33 : vector<4x1xf32>
    %35 = vector.broadcast %34 : vector<4x1xf32> to vector<4x610xf32>
    %36 = arith.mulf %15, %35 : vector<4x610xf32>
    %37 = vector.extract_strided_slice %1 {offsets = [0, 6], sizes = [4, 1], strides = [1, 1]} : vector<4x12xf32> to vector<4x1xf32>
    %38 = arith.mulf %22, %34 : vector<4x1xf32>
    %39 = arith.subf %37, %38 : vector<4x1xf32>
    %40 = vector.broadcast %39 : vector<4x1xf32> to vector<4x610xf32>
    %41 = arith.addf %36, %40 : vector<4x610xf32>
    %42 = arith.truncf %41 : vector<4x610xf32> to vector<4x610xbf16>
    %c0_12 = arith.constant 0 : index
    %c0_13 = arith.constant 0 : index
    %43 = vector.load %arg4[%c0_12, %c0_13] : memref<610x200xbf16, #tpu.memory_space<vmem>>, vector<610x200xbf16>
    %cst_14 = arith.constant dense<0.000000e+00> : vector<4x200xf32>
    %44 = tpu.matmul %42, %43, %cst_14 {dimension_numbers = #tpu.dot_dimension_numbers<[1], [0], [0], [1], [0, 0, 1, 1], [], []>} : vector<4x610xbf16>, vector<610x200xbf16>, vector<4x200xf32> -> vector<4x200xf32>
    %45 = vector.extract_strided_slice %44 {offsets = [0, 0], sizes = [4, 178], strides = [1, 1]} : vector<4x200xf32> to vector<4x178xf32>
    %46 = vector.extract_strided_slice %44 {offsets = [0, 1], sizes = [4, 178], strides = [1, 1]} : vector<4x200xf32> to vector<4x178xf32>
    %47 = vector.extract_strided_slice %44 {offsets = [0, 2], sizes = [4, 178], strides = [1, 1]} : vector<4x200xf32> to vector<4x178xf32>
    %48 = vector.extract_strided_slice %44 {offsets = [0, 10], sizes = [4, 178], strides = [1, 1]} : vector<4x200xf32> to vector<4x178xf32>
    %49 = vector.extract_strided_slice %44 {offsets = [0, 11], sizes = [4, 178], strides = [1, 1]} : vector<4x200xf32> to vector<4x178xf32>
    %50 = vector.extract_strided_slice %44 {offsets = [0, 12], sizes = [4, 178], strides = [1, 1]} : vector<4x200xf32> to vector<4x178xf32>
    %51 = vector.extract_strided_slice %44 {offsets = [0, 20], sizes = [4, 178], strides = [1, 1]} : vector<4x200xf32> to vector<4x178xf32>
    %52 = vector.extract_strided_slice %44 {offsets = [0, 21], sizes = [4, 178], strides = [1, 1]} : vector<4x200xf32> to vector<4x178xf32>
    %53 = vector.extract_strided_slice %44 {offsets = [0, 22], sizes = [4, 178], strides = [1, 1]} : vector<4x200xf32> to vector<4x178xf32>
    %54 = tpu.concatenate %45, %46, %47, %48, %49, %50, %51, %52, %53 in 0 : vector<4x178xf32>, vector<4x178xf32>, vector<4x178xf32>, vector<4x178xf32>, vector<4x178xf32>, vector<4x178xf32>, vector<4x178xf32>, vector<4x178xf32>, vector<4x178xf32> -> vector<36x178xf32>
    %55 = vector.extract_strided_slice %0 {offsets = [4, 0], sizes = [4, 36], strides = [1, 1]} : vector<24x36xf32> to vector<4x36xf32>
    %cst_15 = arith.constant dense<0.000000e+00> : vector<4x178xf32>
    %56 = tpu.matmul %55, %54, %cst_15 {dimension_numbers = #tpu.dot_dimension_numbers<[1], [0], [0], [1], [0, 0, 1, 1], [], []>} : vector<4x36xf32>, vector<36x178xf32>, vector<4x178xf32> -> vector<4x178xf32>
    %57 = vector.extract_strided_slice %2 {offsets = [1, 0], sizes = [1, 178], strides = [1, 1]} : vector<6x640xf32> to vector<1x178xf32>
    %58 = vector.broadcast %57 : vector<1x178xf32> to vector<4x178xf32>
    %59 = arith.mulf %56, %58 : vector<4x178xf32>
    %cst_16 = arith.constant dense<0.000000e+00> : vector<4xf32>
    %60 = vector.multi_reduction <add>, %59, %cst_16 [1] : vector<4x178xf32> to vector<4xf32>
    %61 = vector.shape_cast %60 : vector<4xf32> to vector<4x1xf32>
    %cst_17 = arith.constant 3.125000e-02 : f32
    %62 = vector.broadcast %cst_17 : f32 to vector<4x1xf32>
    %63 = arith.mulf %61, %62 : vector<4x1xf32>
    %64 = arith.mulf %59, %56 : vector<4x178xf32>
    %cst_18 = arith.constant dense<0.000000e+00> : vector<4xf32>
    %65 = vector.multi_reduction <add>, %64, %cst_18 [1] : vector<4x178xf32> to vector<4xf32>
    %66 = vector.shape_cast %65 : vector<4xf32> to vector<4x1xf32>
    %cst_19 = arith.constant 3.125000e-02 : f32
    %67 = vector.broadcast %cst_19 : f32 to vector<4x1xf32>
    %68 = arith.mulf %66, %67 : vector<4x1xf32>
    %69 = vector.extract_strided_slice %1 {offsets = [0, 1], sizes = [4, 1], strides = [1, 1]} : vector<4x12xf32> to vector<4x1xf32>
    %70 = arith.mulf %63, %63 : vector<4x1xf32>
    %71 = arith.subf %68, %70 : vector<4x1xf32>
    %cst_20 = arith.constant 9.99999974E-6 : f32
    %72 = vector.broadcast %cst_20 : f32 to vector<4x1xf32>
    %73 = arith.addf %71, %72 : vector<4x1xf32>
    %74 = math.rsqrt %73 : vector<4x1xf32>
    %75 = arith.mulf %69, %74 : vector<4x1xf32>
    %76 = vector.broadcast %75 : vector<4x1xf32> to vector<4x178xf32>
    %77 = arith.mulf %56, %76 : vector<4x178xf32>
    %78 = vector.extract_strided_slice %1 {offsets = [0, 7], sizes = [4, 1], strides = [1, 1]} : vector<4x12xf32> to vector<4x1xf32>
    %79 = arith.mulf %63, %75 : vector<4x1xf32>
    %80 = arith.subf %78, %79 : vector<4x1xf32>
    %81 = vector.broadcast %80 : vector<4x1xf32> to vector<4x178xf32>
    %82 = arith.addf %77, %81 : vector<4x178xf32>
    %83 = arith.truncf %82 : vector<4x178xf32> to vector<4x178xbf16>
    %c0_21 = arith.constant 0 : index
    %c0_22 = arith.constant 0 : index
    %84 = vector.load %arg5[%c0_21, %c0_22] : memref<178x200xbf16, #tpu.memory_space<vmem>>, vector<178x200xbf16>
    %cst_23 = arith.constant dense<0.000000e+00> : vector<4x200xf32>
    %85 = tpu.matmul %83, %84, %cst_23 {dimension_numbers = #tpu.dot_dimension_numbers<[1], [0], [0], [1], [0, 0, 1, 1], [], []>} : vector<4x178xbf16>, vector<178x200xbf16>, vector<4x200xf32> -> vector<4x200xf32>
    %86 = vector.extract_strided_slice %85 {offsets = [0, 0], sizes = [4, 72], strides = [1, 1]} : vector<4x200xf32> to vector<4x72xf32>
    %87 = vector.extract_strided_slice %85 {offsets = [0, 72], sizes = [4, 128], strides = [1, 1]} : vector<4x200xf32> to vector<4x128xf32>
    %88 = vector.extract_strided_slice %87 {offsets = [0, 0], sizes = [4, 92], strides = [1, 1]} : vector<4x128xf32> to vector<4x92xf32>
    %89 = vector.extract_strided_slice %87 {offsets = [0, 2], sizes = [4, 92], strides = [1, 1]} : vector<4x128xf32> to vector<4x92xf32>
    %90 = vector.extract_strided_slice %87 {offsets = [0, 4], sizes = [4, 92], strides = [1, 1]} : vector<4x128xf32> to vector<4x92xf32>
    %91 = vector.extract_strided_slice %87 {offsets = [0, 16], sizes = [4, 92], strides = [1, 1]} : vector<4x128xf32> to vector<4x92xf32>
    %92 = vector.extract_strided_slice %87 {offsets = [0, 18], sizes = [4, 92], strides = [1, 1]} : vector<4x128xf32> to vector<4x92xf32>
    %93 = vector.extract_strided_slice %87 {offsets = [0, 20], sizes = [4, 92], strides = [1, 1]} : vector<4x128xf32> to vector<4x92xf32>
    %94 = vector.extract_strided_slice %87 {offsets = [0, 32], sizes = [4, 92], strides = [1, 1]} : vector<4x128xf32> to vector<4x92xf32>
    %95 = vector.extract_strided_slice %87 {offsets = [0, 34], sizes = [4, 92], strides = [1, 1]} : vector<4x128xf32> to vector<4x92xf32>
    %96 = vector.extract_strided_slice %87 {offsets = [0, 36], sizes = [4, 92], strides = [1, 1]} : vector<4x128xf32> to vector<4x92xf32>
    %97 = tpu.concatenate %88, %89, %90, %91, %92, %93, %94, %95, %96 in 0 : vector<4x92xf32>, vector<4x92xf32>, vector<4x92xf32>, vector<4x92xf32>, vector<4x92xf32>, vector<4x92xf32>, vector<4x92xf32>, vector<4x92xf32>, vector<4x92xf32> -> vector<36x92xf32>
    %98 = vector.extract_strided_slice %0 {offsets = [8, 0], sizes = [4, 36], strides = [1, 1]} : vector<24x36xf32> to vector<4x36xf32>
    %cst_24 = arith.constant dense<0.000000e+00> : vector<4x92xf32>
    %99 = tpu.matmul %98, %97, %cst_24 {dimension_numbers = #tpu.dot_dimension_numbers<[1], [0], [0], [1], [0, 0, 1, 1], [], []>} : vector<4x36xf32>, vector<36x92xf32>, vector<4x92xf32> -> vector<4x92xf32>
    %100 = vector.extract_strided_slice %2 {offsets = [2, 0], sizes = [1, 92], strides = [1, 1]} : vector<6x640xf32> to vector<1x92xf32>
    %101 = vector.broadcast %100 : vector<1x92xf32> to vector<4x92xf32>
    %102 = arith.mulf %99, %101 : vector<4x92xf32>
    %cst_25 = arith.constant dense<0.000000e+00> : vector<4xf32>
    %103 = vector.multi_reduction <add>, %102, %cst_25 [1] : vector<4x92xf32> to vector<4xf32>
    %104 = vector.shape_cast %103 : vector<4xf32> to vector<4x1xf32>
    %cst_26 = arith.constant 3.125000e-02 : f32
    %105 = vector.broadcast %cst_26 : f32 to vector<4x1xf32>
    %106 = arith.mulf %104, %105 : vector<4x1xf32>
    %107 = arith.mulf %102, %99 : vector<4x92xf32>
    %cst_27 = arith.constant dense<0.000000e+00> : vector<4xf32>
    %108 = vector.multi_reduction <add>, %107, %cst_27 [1] : vector<4x92xf32> to vector<4xf32>
    %109 = vector.shape_cast %108 : vector<4xf32> to vector<4x1xf32>
    %cst_28 = arith.constant 3.125000e-02 : f32
    %110 = vector.broadcast %cst_28 : f32 to vector<4x1xf32>
    %111 = arith.mulf %109, %110 : vector<4x1xf32>
    %112 = vector.extract_strided_slice %1 {offsets = [0, 2], sizes = [4, 1], strides = [1, 1]} : vector<4x12xf32> to vector<4x1xf32>
    %113 = arith.mulf %106, %106 : vector<4x1xf32>
    %114 = arith.subf %111, %113 : vector<4x1xf32>
    %cst_29 = arith.constant 9.99999974E-6 : f32
    %115 = vector.broadcast %cst_29 : f32 to vector<4x1xf32>
    %116 = arith.addf %114, %115 : vector<4x1xf32>
    %117 = math.rsqrt %116 : vector<4x1xf32>
    %118 = arith.mulf %112, %117 : vector<4x1xf32>
    %119 = vector.broadcast %118 : vector<4x1xf32> to vector<4x92xf32>
    %120 = arith.mulf %99, %119 : vector<4x92xf32>
    %121 = vector.extract_strided_slice %1 {offsets = [0, 8], sizes = [4, 1], strides = [1, 1]} : vector<4x12xf32> to vector<4x1xf32>
    %122 = arith.mulf %106, %118 : vector<4x1xf32>
    %123 = arith.subf %121, %122 : vector<4x1xf32>
    %124 = vector.broadcast %123 : vector<4x1xf32> to vector<4x92xf32>
    %125 = arith.addf %120, %124 : vector<4x92xf32>
    %126 = arith.truncf %125 : vector<4x92xf32> to vector<4x92xbf16>
    %c0_30 = arith.constant 0 : index
    %c0_31 = arith.constant 0 : index
    %127 = vector.load %arg6[%c0_30, %c0_31] : memref<92x72xbf16, #tpu.memory_space<vmem>>, vector<92x72xbf16>
    %cst_32 = arith.constant dense<0.000000e+00> : vector<4x72xf32>
    %128 = tpu.matmul %126, %127, %cst_32 {dimension_numbers = #tpu.dot_dimension_numbers<[1], [0], [0], [1], [0, 0, 1, 1], [], []>} : vector<4x92xbf16>, vector<92x72xbf16>, vector<4x72xf32> -> vector<4x72xf32>
    %129 = arith.addf %86, %128 : vector<4x72xf32>
    %130 = vector.extract_strided_slice %129 {offsets = [0, 0], sizes = [4, 58], strides = [1, 1]} : vector<4x72xf32> to vector<4x58xf32>
    %131 = vector.extract_strided_slice %129 {offsets = [0, 1], sizes = [4, 58], strides = [1, 1]} : vector<4x72xf32> to vector<4x58xf32>
    %132 = vector.extract_strided_slice %129 {offsets = [0, 2], sizes = [4, 58], strides = [1, 1]} : vector<4x72xf32> to vector<4x58xf32>
    %133 = vector.extract_strided_slice %129 {offsets = [0, 6], sizes = [4, 58], strides = [1, 1]} : vector<4x72xf32> to vector<4x58xf32>
    %134 = vector.extract_strided_slice %129 {offsets = [0, 7], sizes = [4, 58], strides = [1, 1]} : vector<4x72xf32> to vector<4x58xf32>
    %135 = vector.extract_strided_slice %129 {offsets = [0, 8], sizes = [4, 58], strides = [1, 1]} : vector<4x72xf32> to vector<4x58xf32>
    %136 = vector.extract_strided_slice %129 {offsets = [0, 12], sizes = [4, 58], strides = [1, 1]} : vector<4x72xf32> to vector<4x58xf32>
    %137 = vector.extract_strided_slice %129 {offsets = [0, 13], sizes = [4, 58], strides = [1, 1]} : vector<4x72xf32> to vector<4x58xf32>
    %138 = vector.extract_strided_slice %129 {offsets = [0, 14], sizes = [4, 58], strides = [1, 1]} : vector<4x72xf32> to vector<4x58xf32>
    %139 = tpu.concatenate %130, %131, %132, %133, %134, %135, %136, %137, %138 in 0 : vector<4x58xf32>, vector<4x58xf32>, vector<4x58xf32>, vector<4x58xf32>, vector<4x58xf32>, vector<4x58xf32>, vector<4x58xf32>, vector<4x58xf32>, vector<4x58xf32> -> vector<36x58xf32>
    %140 = vector.extract_strided_slice %0 {offsets = [12, 0], sizes = [4, 36], strides = [1, 1]} : vector<24x36xf32> to vector<4x36xf32>
    %cst_33 = arith.constant dense<0.000000e+00> : vector<4x58xf32>
    %141 = tpu.matmul %140, %139, %cst_33 {dimension_numbers = #tpu.dot_dimension_numbers<[1], [0], [0], [1], [0, 0, 1, 1], [], []>} : vector<4x36xf32>, vector<36x58xf32>, vector<4x58xf32> -> vector<4x58xf32>
    %142 = vector.extract_strided_slice %2 {offsets = [3, 0], sizes = [1, 58], strides = [1, 1]} : vector<6x640xf32> to vector<1x58xf32>
    %143 = vector.broadcast %142 : vector<1x58xf32> to vector<4x58xf32>
    %144 = arith.mulf %141, %143 : vector<4x58xf32>
    %cst_34 = arith.constant dense<0.000000e+00> : vector<4xf32>
    %145 = vector.multi_reduction <add>, %144, %cst_34 [1] : vector<4x58xf32> to vector<4xf32>
    %146 = vector.shape_cast %145 : vector<4xf32> to vector<4x1xf32>
    %cst_35 = arith.constant 3.125000e-02 : f32
    %147 = vector.broadcast %cst_35 : f32 to vector<4x1xf32>
    %148 = arith.mulf %146, %147 : vector<4x1xf32>
    %149 = arith.mulf %144, %141 : vector<4x58xf32>
    %cst_36 = arith.constant dense<0.000000e+00> : vector<4xf32>
    %150 = vector.multi_reduction <add>, %149, %cst_36 [1] : vector<4x58xf32> to vector<4xf32>
    %151 = vector.shape_cast %150 : vector<4xf32> to vector<4x1xf32>
    %cst_37 = arith.constant 3.125000e-02 : f32
    %152 = vector.broadcast %cst_37 : f32 to vector<4x1xf32>
    %153 = arith.mulf %151, %152 : vector<4x1xf32>
    %154 = vector.extract_strided_slice %1 {offsets = [0, 3], sizes = [4, 1], strides = [1, 1]} : vector<4x12xf32> to vector<4x1xf32>
    %155 = arith.mulf %148, %148 : vector<4x1xf32>
    %156 = arith.subf %153, %155 : vector<4x1xf32>
    %cst_38 = arith.constant 9.99999974E-6 : f32
    %157 = vector.broadcast %cst_38 : f32 to vector<4x1xf32>
    %158 = arith.addf %156, %157 : vector<4x1xf32>
    %159 = math.rsqrt %158 : vector<4x1xf32>
    %160 = arith.mulf %154, %159 : vector<4x1xf32>
    %161 = vector.broadcast %160 : vector<4x1xf32> to vector<4x58xf32>
    %162 = arith.mulf %141, %161 : vector<4x58xf32>
    %163 = vector.extract_strided_slice %1 {offsets = [0, 9], sizes = [4, 1], strides = [1, 1]} : vector<4x12xf32> to vector<4x1xf32>
    %164 = arith.mulf %148, %160 : vector<4x1xf32>
    %165 = arith.subf %163, %164 : vector<4x1xf32>
    %166 = vector.broadcast %165 : vector<4x1xf32> to vector<4x58xf32>
    %167 = arith.addf %162, %166 : vector<4x58xf32>
    %168 = arith.truncf %167 : vector<4x58xf32> to vector<4x58xbf16>
    %c0_39 = arith.constant 0 : index
    %c0_40 = arith.constant 0 : index
    %169 = vector.load %arg7[%c0_39, %c0_40] : memref<58x200xbf16, #tpu.memory_space<vmem>>, vector<58x200xbf16>
    %cst_41 = arith.constant dense<0.000000e+00> : vector<4x200xf32>
    %170 = tpu.matmul %168, %169, %cst_41 {dimension_numbers = #tpu.dot_dimension_numbers<[1], [0], [0], [1], [0, 0, 1, 1], [], []>} : vector<4x58xbf16>, vector<58x200xbf16>, vector<4x200xf32> -> vector<4x200xf32>
    %171 = arith.addf %44, %170 : vector<4x200xf32>
    %172 = vector.extract_strided_slice %171 {offsets = [0, 0], sizes = [4, 178], strides = [1, 1]} : vector<4x200xf32> to vector<4x178xf32>
    %173 = vector.extract_strided_slice %171 {offsets = [0, 1], sizes = [4, 178], strides = [1, 1]} : vector<4x200xf32> to vector<4x178xf32>
    %174 = vector.extract_strided_slice %171 {offsets = [0, 2], sizes = [4, 178], strides = [1, 1]} : vector<4x200xf32> to vector<4x178xf32>
    %175 = vector.extract_strided_slice %171 {offsets = [0, 10], sizes = [4, 178], strides = [1, 1]} : vector<4x200xf32> to vector<4x178xf32>
    %176 = vector.extract_strided_slice %171 {offsets = [0, 11], sizes = [4, 178], strides = [1, 1]} : vector<4x200xf32> to vector<4x178xf32>
    %177 = vector.extract_strided_slice %171 {offsets = [0, 12], sizes = [4, 178], strides = [1, 1]} : vector<4x200xf32> to vector<4x178xf32>
    %178 = vector.extract_strided_slice %171 {offsets = [0, 20], sizes = [4, 178], strides = [1, 1]} : vector<4x200xf32> to vector<4x178xf32>
    %179 = vector.extract_strided_slice %171 {offsets = [0, 21], sizes = [4, 178], strides = [1, 1]} : vector<4x200xf32> to vector<4x178xf32>
    %180 = vector.extract_strided_slice %171 {offsets = [0, 22], sizes = [4, 178], strides = [1, 1]} : vector<4x200xf32> to vector<4x178xf32>
    %181 = tpu.concatenate %172, %173, %174, %175, %176, %177, %178, %179, %180 in 0 : vector<4x178xf32>, vector<4x178xf32>, vector<4x178xf32>, vector<4x178xf32>, vector<4x178xf32>, vector<4x178xf32>, vector<4x178xf32>, vector<4x178xf32>, vector<4x178xf32> -> vector<36x178xf32>
    %182 = vector.extract_strided_slice %0 {offsets = [16, 0], sizes = [4, 36], strides = [1, 1]} : vector<24x36xf32> to vector<4x36xf32>
    %cst_42 = arith.constant dense<0.000000e+00> : vector<4x178xf32>
    %183 = tpu.matmul %182, %181, %cst_42 {dimension_numbers = #tpu.dot_dimension_numbers<[1], [0], [0], [1], [0, 0, 1, 1], [], []>} : vector<4x36xf32>, vector<36x178xf32>, vector<4x178xf32> -> vector<4x178xf32>
    %184 = vector.extract_strided_slice %2 {offsets = [4, 0], sizes = [1, 178], strides = [1, 1]} : vector<6x640xf32> to vector<1x178xf32>
    %185 = vector.broadcast %184 : vector<1x178xf32> to vector<4x178xf32>
    %186 = arith.mulf %183, %185 : vector<4x178xf32>
    %cst_43 = arith.constant dense<0.000000e+00> : vector<4xf32>
    %187 = vector.multi_reduction <add>, %186, %cst_43 [1] : vector<4x178xf32> to vector<4xf32>
    %188 = vector.shape_cast %187 : vector<4xf32> to vector<4x1xf32>
    %cst_44 = arith.constant 7.812500e-03 : f32
    %189 = vector.broadcast %cst_44 : f32 to vector<4x1xf32>
    %190 = arith.mulf %188, %189 : vector<4x1xf32>
    %191 = arith.mulf %186, %183 : vector<4x178xf32>
    %cst_45 = arith.constant dense<0.000000e+00> : vector<4xf32>
    %192 = vector.multi_reduction <add>, %191, %cst_45 [1] : vector<4x178xf32> to vector<4xf32>
    %193 = vector.shape_cast %192 : vector<4xf32> to vector<4x1xf32>
    %cst_46 = arith.constant 7.812500e-03 : f32
    %194 = vector.broadcast %cst_46 : f32 to vector<4x1xf32>
    %195 = arith.mulf %193, %194 : vector<4x1xf32>
    %196 = vector.extract_strided_slice %1 {offsets = [0, 4], sizes = [4, 1], strides = [1, 1]} : vector<4x12xf32> to vector<4x1xf32>
    %197 = arith.mulf %190, %190 : vector<4x1xf32>
    %198 = arith.subf %195, %197 : vector<4x1xf32>
    %cst_47 = arith.constant 9.99999974E-6 : f32
    %199 = vector.broadcast %cst_47 : f32 to vector<4x1xf32>
    %200 = arith.addf %198, %199 : vector<4x1xf32>
    %201 = math.rsqrt %200 : vector<4x1xf32>
    %202 = arith.mulf %196, %201 : vector<4x1xf32>
    %203 = vector.broadcast %202 : vector<4x1xf32> to vector<4x178xf32>
    %204 = arith.mulf %183, %203 : vector<4x178xf32>
    %205 = vector.extract_strided_slice %1 {offsets = [0, 10], sizes = [4, 1], strides = [1, 1]} : vector<4x12xf32> to vector<4x1xf32>
    %206 = arith.mulf %190, %202 : vector<4x1xf32>
    %207 = arith.subf %205, %206 : vector<4x1xf32>
    %208 = vector.broadcast %207 : vector<4x1xf32> to vector<4x178xf32>
    %209 = arith.addf %204, %208 : vector<4x178xf32>
    %210 = arith.truncf %209 : vector<4x178xf32> to vector<4x178xbf16>
    %c0_48 = arith.constant 0 : index
    %c0_49 = arith.constant 0 : index
    %211 = vector.load %arg8[%c0_48, %c0_49] : memref<178x648xbf16, #tpu.memory_space<vmem>>, vector<178x648xbf16>
    %cst_50 = arith.constant dense<0.000000e+00> : vector<4x648xf32>
    %212 = tpu.matmul %210, %211, %cst_50 {dimension_numbers = #tpu.dot_dimension_numbers<[1], [0], [0], [1], [0, 0, 1, 1], [], []>} : vector<4x178xbf16>, vector<178x648xbf16>, vector<4x648xf32> -> vector<4x648xf32>
    %213 = arith.addf %3, %212 : vector<4x648xf32>
    %cst_51 = arith.constant 0.000000e+00 : f32
    %214 = vector.broadcast %cst_51 : f32 to vector<4x648xf32>
    %215 = arith.maximumf %213, %214 : vector<4x648xf32>
    %216 = vector.extract_strided_slice %215 {offsets = [0, 0], sizes = [4, 610], strides = [1, 1]} : vector<4x648xf32> to vector<4x610xf32>
    %217 = vector.extract_strided_slice %215 {offsets = [0, 1], sizes = [4, 610], strides = [1, 1]} : vector<4x648xf32> to vector<4x610xf32>
    %218 = vector.extract_strided_slice %215 {offsets = [0, 2], sizes = [4, 610], strides = [1, 1]} : vector<4x648xf32> to vector<4x610xf32>
    %219 = vector.extract_strided_slice %215 {offsets = [0, 18], sizes = [4, 610], strides = [1, 1]} : vector<4x648xf32> to vector<4x610xf32>
    %220 = vector.extract_strided_slice %215 {offsets = [0, 19], sizes = [4, 610], strides = [1, 1]} : vector<4x648xf32> to vector<4x610xf32>
    %221 = vector.extract_strided_slice %215 {offsets = [0, 20], sizes = [4, 610], strides = [1, 1]} : vector<4x648xf32> to vector<4x610xf32>
    %222 = vector.extract_strided_slice %215 {offsets = [0, 36], sizes = [4, 610], strides = [1, 1]} : vector<4x648xf32> to vector<4x610xf32>
    %223 = vector.extract_strided_slice %215 {offsets = [0, 37], sizes = [4, 610], strides = [1, 1]} : vector<4x648xf32> to vector<4x610xf32>
    %224 = vector.extract_strided_slice %215 {offsets = [0, 38], sizes = [4, 610], strides = [1, 1]} : vector<4x648xf32> to vector<4x610xf32>
    %225 = tpu.concatenate %216, %217, %218, %219, %220, %221, %222, %223, %224 in 0 : vector<4x610xf32>, vector<4x610xf32>, vector<4x610xf32>, vector<4x610xf32>, vector<4x610xf32>, vector<4x610xf32>, vector<4x610xf32>, vector<4x610xf32>, vector<4x610xf32> -> vector<36x610xf32>
    %226 = vector.extract_strided_slice %0 {offsets = [20, 0], sizes = [4, 36], strides = [1, 1]} : vector<24x36xf32> to vector<4x36xf32>
    %cst_52 = arith.constant dense<0.000000e+00> : vector<4x610xf32>
    %227 = tpu.matmul %226, %225, %cst_52 {dimension_numbers = #tpu.dot_dimension_numbers<[1], [0], [0], [1], [0, 0, 1, 1], [], []>} : vector<4x36xf32>, vector<36x610xf32>, vector<4x610xf32> -> vector<4x610xf32>
    %228 = vector.extract_strided_slice %2 {offsets = [5, 0], sizes = [1, 610], strides = [1, 1]} : vector<6x640xf32> to vector<1x610xf32>
    %229 = vector.broadcast %228 : vector<1x610xf32> to vector<4x610xf32>
    %230 = arith.mulf %227, %229 : vector<4x610xf32>
    %cst_53 = arith.constant dense<0.000000e+00> : vector<4xf32>
    %231 = vector.multi_reduction <add>, %230, %cst_53 [1] : vector<4x610xf32> to vector<4xf32>
    %232 = vector.shape_cast %231 : vector<4xf32> to vector<4x1xf32>
    %cst_54 = arith.constant 0.001953125 : f32
    %233 = vector.broadcast %cst_54 : f32 to vector<4x1xf32>
    %234 = arith.mulf %232, %233 : vector<4x1xf32>
    %235 = arith.mulf %230, %227 : vector<4x610xf32>
    %cst_55 = arith.constant dense<0.000000e+00> : vector<4xf32>
    %236 = vector.multi_reduction <add>, %235, %cst_55 [1] : vector<4x610xf32> to vector<4xf32>
    %237 = vector.shape_cast %236 : vector<4xf32> to vector<4x1xf32>
    %cst_56 = arith.constant 0.001953125 : f32
    %238 = vector.broadcast %cst_56 : f32 to vector<4x1xf32>
    %239 = arith.mulf %237, %238 : vector<4x1xf32>
    %240 = vector.extract_strided_slice %1 {offsets = [0, 5], sizes = [4, 1], strides = [1, 1]} : vector<4x12xf32> to vector<4x1xf32>
    %241 = arith.mulf %234, %234 : vector<4x1xf32>
    %242 = arith.subf %239, %241 : vector<4x1xf32>
    %cst_57 = arith.constant 9.99999974E-6 : f32
    %243 = vector.broadcast %cst_57 : f32 to vector<4x1xf32>
    %244 = arith.addf %242, %243 : vector<4x1xf32>
    %245 = math.rsqrt %244 : vector<4x1xf32>
    %246 = arith.mulf %240, %245 : vector<4x1xf32>
    %247 = vector.broadcast %246 : vector<4x1xf32> to vector<4x610xf32>
    %248 = arith.mulf %227, %247 : vector<4x610xf32>
    %249 = vector.extract_strided_slice %1 {offsets = [0, 11], sizes = [4, 1], strides = [1, 1]} : vector<4x12xf32> to vector<4x1xf32>
    %250 = arith.mulf %234, %246 : vector<4x1xf32>
    %251 = arith.subf %249, %250 : vector<4x1xf32>
    %252 = vector.broadcast %251 : vector<4x1xf32> to vector<4x610xf32>
    %253 = arith.addf %248, %252 : vector<4x610xf32>
    %254 = vector.extract_strided_slice %2 {offsets = [5, 0], sizes = [1, 610], strides = [1, 1]} : vector<6x640xf32> to vector<1x610xf32>
    %255 = vector.broadcast %254 : vector<1x610xf32> to vector<4x610xf32>
    %256 = arith.mulf %253, %255 : vector<4x610xf32>
    %cst_58 = arith.constant 0.000000e+00 : f32
    %257 = vector.broadcast %cst_58 : f32 to vector<8x640xf32>
    %c0_59 = arith.constant 0 : index
    %c0_60 = arith.constant 0 : index
    %258 = vector.load %arg9[%c0_59, %c0_60] : memref<8x640xf32, #tpu.memory_space<vmem>>, vector<8x640xf32>
    tpu.vector_store %arg9[%c0_59, %c0_60], %257 {strides = array<i32>} : memref<8x640xf32, #tpu.memory_space<vmem>>, vector<8x640xf32>,
    %c0_61 = arith.constant 0 : index
    %c0_62 = arith.constant 0 : index
    %259 = vector.load %arg9[%c0_61, %c0_62] : memref<8x640xf32, #tpu.memory_space<vmem>>, vector<4x610xf32>
    tpu.vector_store %arg9[%c0_61, %c0_62], %256 {strides = array<i32>} : memref<8x640xf32, #tpu.memory_space<vmem>>, vector<4x610xf32>,
    return
  }
}

</mosaic_0001>

<llo_original>
// kernel: usrm3_forward.1
$region0: #{usrm3_forward.1}
  #allocation0 [shape = 'u32[]', space=smem, size = 0x4, offset = 0x4, fixed_abs, tag = 'smem constant byte address 0x4 - core index']
  #allocation1 [shape = 'u32[144,128]{1,0:T(1,128)}', space=vmem, size = 0x12000, scoped, tag = 'internal scratch']
  %s0 = inlined_call_operand.vmem [shape: f32[4,648], index: 0, kind: input, shape index: {}]
  %s1 = inlined_call_operand.vmem [shape: f32[24,36], index: 1, kind: input, shape index: {}]
  %s2 = inlined_call_operand.vmem [shape: f32[4,12], index: 2, kind: input, shape index: {}]
  %s3 = inlined_call_operand.vmem [shape: f32[6,640], index: 3, kind: input, shape index: {}]
  %s4 = inlined_call_operand.vmem [shape: bf16[610,200], index: 4, kind: input, shape index: {}]
  %s5 = inlined_call_operand.vmem [shape: bf16[178,200], index: 5, kind: input, shape index: {}]
  %s6 = inlined_call_operand.vmem [shape: bf16[92,72], index: 6, kind: input, shape index: {}]
  %s7 = inlined_call_operand.vmem [shape: bf16[58,200], index: 7, kind: input, shape index: {}]
  %s8 = inlined_call_operand.vmem [shape: bf16[178,648], index: 8, kind: input, shape index: {}]
  %s9 = inlined_call_operand.vmem [shape: f32[8,640], index: 9, kind: output, shape index: {}]
  %s10 = sld [smem:[#allocation0]]
  $region46: #{usrm3_forward.1} parent=0
    _
  %s12 = ssub.s32 1, %s10
  %s13 = scalar_select 0, %s12, %s10
  // Predicated region
  $region2: #{usrm3_forward.1} parent=0 // pred_check
    _
  $region3: #{usrm3_forward.1} parent=0 // pred_check_branch
    %15 = sbr.rel (0) target = $region5
  $region4: #{usrm3_forward.1} parent=0 // pred_region
    _
  $region5: #{usrm3_forward.1} parent=0 // pred_fallthru
    _
  // Predicated region
  $region6: #{usrm3_forward.1} parent=0 // pred_check
    _
  $region7: #{usrm3_forward.1} parent=0 // pred_check_branch
    %17 = sbr.rel (0) target = $region9
  $region8: #{usrm3_forward.1} parent=0 // pred_region
    _
  $region9: #{usrm3_forward.1} parent=0 // pred_fallthru
    _
  // Predicated region
  $region10: #{usrm3_forward.1} parent=0 // pred_check
    _
  $region11: #{usrm3_forward.1} parent=0 // pred_check_branch
    %19 = sbr.rel (0) target = $region13
  $region12: #{usrm3_forward.1} parent=0 // pred_region
    _
  $region13: #{usrm3_forward.1} parent=0 // pred_fallthru
    _
  // Predicated region
  $region14: #{usrm3_forward.1} parent=0 // pred_check
    _
  $region15: #{usrm3_forward.1} parent=0 // pred_check_branch
    %21 = sbr.rel (0) target = $region17
  $region16: #{usrm3_forward.1} parent=0 // pred_region
    _
  $region17: #{usrm3_forward.1} parent=0 // pred_fallthru
    _
  // Predicated region
  $region18: #{usrm3_forward.1} parent=0 // pred_check
    _
  $region19: #{usrm3_forward.1} parent=0 // pred_check_branch
    %23 = sbr.rel (0) target = $region21
  $region20: #{usrm3_forward.1} parent=0 // pred_region
    _
  $region21: #{usrm3_forward.1} parent=0 // pred_fallthru
    _
  // Predicated region
  $region22: #{usrm3_forward.1} parent=0 // pred_check
    _
  $region23: #{usrm3_forward.1} parent=0 // pred_check_branch
    %25 = sbr.rel (0) target = $region25
  $region24: #{usrm3_forward.1} parent=0 // pred_region
    _
  $region25: #{usrm3_forward.1} parent=0 // pred_fallthru
    _
  // Predicated region
  $region26: #{usrm3_forward.1} parent=0 // pred_check
    _
  $region27: #{usrm3_forward.1} parent=0 // pred_check_branch
    %27 = sbr.rel (0) target = $region29
  $region28: #{usrm3_forward.1} parent=0 // pred_region
    _
  $region29: #{usrm3_forward.1} parent=0 // pred_fallthru
    _
  // Predicated region
  $region30: #{usrm3_forward.1} parent=0 // pred_check
    _
  $region31: #{usrm3_forward.1} parent=0 // pred_check_branch
    %29 = sbr.rel (0) target = $region33
  $region32: #{usrm3_forward.1} parent=0 // pred_region
    _
  $region33: #{usrm3_forward.1} parent=0 // pred_fallthru
    _
  // Predicated region
  $region34: #{usrm3_forward.1} parent=0 // pred_check
    _
  $region35: #{usrm3_forward.1} parent=0 // pred_check_branch
    %31 = sbr.rel (0) target = $region37
  $region36: #{usrm3_forward.1} parent=0 // pred_region
    _
  $region37: #{usrm3_forward.1} parent=0 // pred_fallthru
    _
  %v33 = vld [vmem:[%s1] sm:$0xff]
  %v34 = vld [vmem:[%s1 + $0x8] sm:$0xff]
  %v35 = vld [vmem:[%s1 + $0x10] sm:$0xff]
  %v36 = vld [vmem:[%s2] sm:$0xf]
  %v37 = vld [vmem:[%s3] sm:$0x3f]
  %v38 = vld [vmem:[%s3 + $0x8] sm:$0x3f]
  %v39 = vld [vmem:[%s3 + $0x10] sm:$0x3f]
  %v40 = vld [vmem:[%s3 + $0x18] sm:$0x3f]
  %v41 = vld [vmem:[%s3 + $0x20] sm:$0x3f]
  %v42 = vld [vmem:[%s0] sm:$0xff]
  %v43 = vld [vmem:[%s0 + $0x8] sm:$0xff]
  %v44 = vld [vmem:[%s0 + $0x10] sm:$0xff]
  %v48 = vcombine.high %v42, %v42
  %v49 = vcombine.high %v43, %v43
  %v52 = vcombine.low %v42, %v42
  %v53 = vcombine.low %v43, %v43
  %v54 = vcombine.low %v44, %v44
  %55 = vrot.lane.b32.xlu0 %v52, 127
  %v56 = vpop.permute.xlu0 %55
  %57 = vrot.lane.b32.xlu0 %v42, 127
  %v58 = vpop.permute.xlu0 %57
  %59 = vrot.lane.b32.xlu0 %v53, 127
  %v60 = vpop.permute.xlu0 %59
  %61 = vrot.lane.b32.xlu0 %v43, 127
  %v62 = vpop.permute.xlu0 %61
  %63 = vrot.lane.b32.xlu0 %v54, 127
  %v64 = vpop.permute.xlu0 %63
  %vm65 = vcmask 1039360
  %v66 = vsel %vm65, %v56, %v58
  %v67 = vsel %vm65, %v58, %v60
  %v68 = vsel %vm65, %v60, %v62
  %v69 = vsel %vm65, %v62, %v64
  %75 = vrot.lane.b32.xlu0 %v42, 126
  %v76 = vpop.permute.xlu0 %75
  %77 = vrot.lane.b32.xlu0 %v48, 126
  %v78 = vpop.permute.xlu0 %77
  %79 = vrot.lane.b32.xlu0 %v43, 126
  %v80 = vpop.permute.xlu0 %79
  %81 = vrot.lane.b32.xlu0 %v49, 126
  %v82 = vpop.permute.xlu0 %81
  %83 = vrot.lane.b32.xlu0 %v44, 126
  %v84 = vpop.permute.xlu0 %83
  %vm85 = vcmask 1031168
  %v86 = vsel %vm85, %v76, %v78
  %v87 = vsel %vm85, %v78, %v80
  %v88 = vsel %vm85, %v80, %v82
  %v89 = vsel %vm85, %v82, %v84
  %95 = vrot.lane.b32.xlu0 %v52, 110
  %v96 = vpop.permute.xlu0 %95
  %97 = vrot.lane.b32.xlu0 %v42, 110
  %v98 = vpop.permute.xlu0 %97
  %99 = vrot.lane.b32.xlu0 %v53, 110
  %v100 = vpop.permute.xlu0 %99
  %101 = vrot.lane.b32.xlu0 %v43, 110
  %v102 = vpop.permute.xlu0 %101
  %103 = vrot.lane.b32.xlu0 %v54, 110
  %v104 = vpop.permute.xlu0 %103
  %vm105 = vcmask 900096
  %v106 = vsel %vm105, %v96, %v98
  %v107 = vsel %vm105, %v98, %v100
  %v108 = vsel %vm105, %v100, %v102
  %v109 = vsel %vm105, %v102, %v104
  %115 = vrot.lane.b32.xlu0 %v42, 109
  %v116 = vpop.permute.xlu0 %115
  %117 = vrot.lane.b32.xlu0 %v48, 109
  %v118 = vpop.permute.xlu0 %117
  %119 = vrot.lane.b32.xlu0 %v43, 109
  %v120 = vpop.permute.xlu0 %119
  %121 = vrot.lane.b32.xlu0 %v49, 109
  %v122 = vpop.permute.xlu0 %121
  %123 = vrot.lane.b32.xlu0 %v44, 109
  %v124 = vpop.permute.xlu0 %123
  %vm125 = vcmask 891904
  %v126 = vsel %vm125, %v116, %v118
  %v127 = vsel %vm125, %v118, %v120
  %v128 = vsel %vm125, %v120, %v122
  %v129 = vsel %vm125, %v122, %v124
  %135 = vrot.lane.b32.xlu0 %v52, 108
  %v136 = vpop.permute.xlu0 %135
  %137 = vrot.lane.b32.xlu0 %v42, 108
  %v138 = vpop.permute.xlu0 %137
  %139 = vrot.lane.b32.xlu0 %v53, 108
  %v140 = vpop.permute.xlu0 %139
  %141 = vrot.lane.b32.xlu0 %v43, 108
  %v142 = vpop.permute.xlu0 %141
  %143 = vrot.lane.b32.xlu0 %v54, 108
  %v144 = vpop.permute.xlu0 %143
  %vm145 = vcmask 883712
  %v146 = vsel %vm145, %v136, %v138
  %v147 = vsel %vm145, %v138, %v140
  %v148 = vsel %vm145, %v140, %v142
  %v149 = vsel %vm145, %v142, %v144
  %v155 = vcombine.high %v44, %v44
  %156 = vrot.lane.b32.xlu0 %v42, 92
  %v157 = vpop.permute.xlu0 %156
  %158 = vrot.lane.b32.xlu0 %v48, 92
  %v159 = vpop.permute.xlu0 %158
  %160 = vrot.lane.b32.xlu0 %v43, 92
  %v161 = vpop.permute.xlu0 %160
  %162 = vrot.lane.b32.xlu0 %v49, 92
  %v163 = vpop.permute.xlu0 %162
  %164 = vrot.lane.b32.xlu0 %v44, 92
  %v165 = vpop.permute.xlu0 %164
  %166 = vrot.lane.b32.xlu0 %v155, 92
  %v167 = vpop.permute.xlu0 %166
  %vm168 = vcmask 752640
  %v169 = vsel %vm168, %v157, %v159
  %v170 = vsel %vm168, %v159, %v161
  %v171 = vsel %vm168, %v161, %v163
  %v172 = vsel %vm168, %v163, %v165
  %v173 = vsel %vm168, %v165, %v167
  %179 = vrot.lane.b32.xlu0 %v52, 91
  %v180 = vpop.permute.xlu0 %179
  %181 = vrot.lane.b32.xlu0 %v42, 91
  %v182 = vpop.permute.xlu0 %181
  %183 = vrot.lane.b32.xlu0 %v53, 91
  %v184 = vpop.permute.xlu0 %183
  %185 = vrot.lane.b32.xlu0 %v43, 91
  %v186 = vpop.permute.xlu0 %185
  %187 = vrot.lane.b32.xlu0 %v54, 91
  %v188 = vpop.permute.xlu0 %187
  %189 = vrot.lane.b32.xlu0 %v44, 91
  %v190 = vpop.permute.xlu0 %189
  %vm191 = vcmask 744448
  %v192 = vsel %vm191, %v180, %v182
  %v193 = vsel %vm191, %v182, %v184
  %v194 = vsel %vm191, %v184, %v186
  %v195 = vsel %vm191, %v186, %v188
  %v196 = vsel %vm191, %v188, %v190
  %202 = vrot.lane.b32.xlu0 %v42, 90
  %v203 = vpop.permute.xlu0 %202
  %204 = vrot.lane.b32.xlu0 %v48, 90
  %v205 = vpop.permute.xlu0 %204
  %206 = vrot.lane.b32.xlu0 %v43, 90
  %v207 = vpop.permute.xlu0 %206
  %208 = vrot.lane.b32.xlu0 %v49, 90
  %v209 = vpop.permute.xlu0 %208
  %210 = vrot.lane.b32.xlu0 %v44, 90
  %v211 = vpop.permute.xlu0 %210
  %212 = vrot.lane.b32.xlu0 %v155, 90
  %v213 = vpop.permute.xlu0 %212
  %vm214 = vcmask 736256
  %v215 = vsel %vm214, %v203, %v205
  %v216 = vsel %vm214, %v205, %v207
  %v217 = vsel %vm214, %v207, %v209
  %v218 = vsel %vm214, %v209, %v211
  %v219 = vsel %vm214, %v211, %v213
  %vm220 = vcmask 1043456
  %v221 = vsel %vm220, %v42, %v66
  %v222 = vsel %vm220, %v48, %v67
  %v223 = vsel %vm220, %v43, %v68
  %v224 = vsel %vm220, %v49, %v69
  %v225 = vsel %vm220, %v44, %v64
  %v226 = vsel %vm220, %v86, %v106
  %v227 = vsel %vm220, %v87, %v107
  %v228 = vsel %vm220, %v88, %v108
  %v229 = vsel %vm220, %v89, %v109
  %v230 = vsel %vm220, %v84, %v104
  %v231 = vsel %vm220, %v126, %v146
  %v232 = vsel %vm220, %v127, %v147
  %v233 = vsel %vm220, %v128, %v148
  %v234 = vsel %vm220, %v129, %v149
  %v235 = vsel %vm220, %v124, %v144
  %v236 = vsel %vm220, %v169, %v192
  %v237 = vsel %vm220, %v170, %v193
  %v238 = vsel %vm220, %v171, %v194
  %v239 = vsel %vm220, %v172, %v195
  %v240 = vsel %vm220, %v173, %v196
  %vm241 = vcmask 293888
  %v243 = vsel %vm241, %v33, 0
  %v245 = vsel %vm220, %v215, 0
  %v247 = vsel %vm220, %v216, 0
  %v249 = vsel %vm220, %v217, 0
  %v251 = vsel %vm220, %v218, 0
  %v253 = vsel %vm220, %v219, 0
  %255 = vmatprep.subr.mxu0 0.0
  %256 = vmatpush1.msra.mxu0 0.0
  %257 = vmatprep.subr.mxu0 0.0
  %258 = vmatpush1.msra.mxu0 0.0
  %259 = vmatprep.subr.mxu0 0.0
  %260 = vmatpush1.msra.mxu0 0.0
  %261 = vmatprep.subr.mxu0 0.0
  %262 = vmatpush1.msra.mxu0 0.0
  %263 = vmatprep.subr.mxu0 0.0
  %264 = vmatpush1.msra.mxu0 0.0
  %265 = vmatprep.subr.mxu0 0.0
  %266 = vmatpush1.msra.mxu0 0.0
  %267 = vmatprep.subr.mxu0 0.0
  %268 = vmatpush1.msra.mxu0 0.0
  %269 = vmatprep.subr.mxu0 0.0
  %270 = vmatpush1.msra.mxu0 0.0
  %271 = vmatprep.subr.mxu0 0.0
  %272 = vmatpush1.msra.mxu0 0.0
  %273 = vmatprep.subr.mxu0 0.0
  %274 = vmatpush1.msra.mxu0 0.0
  %275 = vmatprep.subr.mxu0 0.0
  %276 = vmatpush1.msra.mxu0 0.0
  %277 = vmatprep.subr.mxu0 %v247
  %278 = vmatpush1.msra.mxu0 %v245
  %279 = vmatprep.subr.mxu0 %v237
  %280 = vmatpush1.msra.mxu0 %v236
  %281 = vmatprep.subr.mxu0 %v232
  %282 = vmatpush1.msra.mxu0 %v231
  %283 = vmatprep.subr.mxu0 %v227
  %284 = vmatpush1.msra.mxu0 %v226
  %285 = vmatprep.subr.mxu0 %v222
  %286 = vmatpush1.msra.mxu0 %v221
  %287 = vmatprep.subr.mxu0 0.0
  %288 = vmatpush2.msra.mxu0 0.0
  %289 = vmatprep.subr.mxu0 0.0
  %290 = vmatpush2.msra.mxu0 0.0
  %291 = vmatprep.subr.mxu0 0.0
  %292 = vmatpush2.msra.mxu0 0.0
  %293 = vmatprep.subr.mxu0 0.0
  %294 = vmatpush2.msra.mxu0 0.0
  %295 = vmatprep.subr.mxu0 0.0
  %296 = vmatpush2.msra.mxu0 0.0
  %297 = vmatprep.subr.mxu0 0.0
  %298 = vmatpush2.msra.mxu0 0.0
  %299 = vmatprep.subr.mxu0 0.0
  %300 = vmatpush2.msra.mxu0 0.0
  %301 = vmatprep.subr.mxu0 0.0
  %302 = vmatpush2.msra.mxu0 0.0
  %303 = vmatprep.subr.mxu0 0.0
  %304 = vmatpush2.msra.mxu0 0.0
  %305 = vmatprep.subr.mxu0 0.0
  %306 = vmatpush2.msra.mxu0 0.0
  %307 = vmatprep.subr.mxu0 0.0
  %308 = vmatpush2.msra.mxu0 0.0
  %309 = vmatprep.subr.mxu0 0.0
  %310 = vmatpush2.msra.mxu0 0.0
  %311 = vmatprep.subr.mxu0 0.0
  %312 = vmatpush2.msra.mxu0 0.0
  %313 = vmatprep.subr.mxu0 0.0
  %314 = vmatpush2.msra.mxu0 0.0
  %315 = vmatprep.subr.mxu0 0.0
  %316 = vmatpush2.msra.mxu0 0.0
  %317 = vmatprep.subr.mxu0 0.0
  %318 = vmatpush2.msra.mxu0 0.0
  %319 = vmatprep.mubr.f32.mxu0 0.0
  %320 = vmatmul.mubr.f32.gmra.mxu0 %v243
  %v321 = vpop.f32.mrf.mxu0
  %v322 = vadd.f32 0.0, %v321
  %v323 = vpop.f32.mrf.mxu0
  %v324 = vadd.f32 0.0, %v323
  %325 = vdwg.mxu0
  %326 = vmatprep.subr.mxu0 0.0
  %327 = vmatpush1.msra.mxu0 0.0
  %328 = vmatprep.subr.mxu0 0.0
  %329 = vmatpush1.msra.mxu0 0.0
  %330 = vmatprep.subr.mxu0 0.0
  %331 = vmatpush1.msra.mxu0 0.0
  %332 = vmatprep.subr.mxu0 0.0
  %333 = vmatpush1.msra.mxu0 0.0
  %334 = vmatprep.subr.mxu0 0.0
  %335 = vmatpush1.msra.mxu0 0.0
  %336 = vmatprep.subr.mxu0 0.0
  %337 = vmatpush1.msra.mxu0 0.0
  %338 = vmatprep.subr.mxu0 0.0
  %339 = vmatpush1.msra.mxu0 0.0
  %340 = vmatprep.subr.mxu0 0.0
  %341 = vmatpush1.msra.mxu0 0.0
  %342 = vmatprep.subr.mxu0 0.0
  %343 = vmatpush1.msra.mxu0 0.0
  %344 = vmatprep.subr.mxu0 0.0
  %345 = vmatpush1.msra.mxu0 0.0
  %346 = vmatprep.subr.mxu0 0.0
  %347 = vmatpush1.msra.mxu0 0.0
  %348 = vmatprep.subr.mxu0 %v251
  %349 = vmatpush1.msra.mxu0 %v249
  %350 = vmatprep.subr.mxu0 %v239
  %351 = vmatpush1.msra.mxu0 %v238
  %352 = vmatprep.subr.mxu0 %v234
  %353 = vmatpush1.msra.mxu0 %v233
  %354 = vmatprep.subr.mxu0 %v229
  %355 = vmatpush1.msra.mxu0 %v228
  %356 = vmatprep.subr.mxu0 %v224
  %357 = vmatpush1.msra.mxu0 %v223
  %358 = vmatprep.subr.mxu0 0.0
  %359 = vmatpush2.msra.mxu0 0.0
  %360 = vmatprep.subr.mxu0 0.0
  %361 = vmatpush2.msra.mxu0 0.0
  %362 = vmatprep.subr.mxu0 0.0
  %363 = vmatpush2.msra.mxu0 0.0
  %364 = vmatprep.subr.mxu0 0.0
  %365 = vmatpush2.msra.mxu0 0.0
  %366 = vmatprep.subr.mxu0 0.0
  %367 = vmatpush2.msra.mxu0 0.0
  %368 = vmatprep.subr.mxu0 0.0
  %369 = vmatpush2.msra.mxu0 0.0
  %370 = vmatprep.subr.mxu0 0.0
  %371 = vmatpush2.msra.mxu0 0.0
  %372 = vmatprep.subr.mxu0 0.0
  %373 = vmatpush2.msra.mxu0 0.0
  %374 = vmatprep.subr.mxu0 0.0
  %375 = vmatpush2.msra.mxu0 0.0
  %376 = vmatprep.subr.mxu0 0.0
  %377 = vmatpush2.msra.mxu0 0.0
  %378 = vmatprep.subr.mxu0 0.0
  %379 = vmatpush2.msra.mxu0 0.0
  %380 = vmatprep.subr.mxu0 0.0
  %381 = vmatpush2.msra.mxu0 0.0
  %382 = vmatprep.subr.mxu0 0.0
  %383 = vmatpush2.msra.mxu0 0.0
  %384 = vmatprep.subr.mxu0 0.0
  %385 = vmatpush2.msra.mxu0 0.0
  %386 = vmatprep.subr.mxu0 0.0
  %387 = vmatpush2.msra.mxu0 0.0
  %388 = vmatprep.subr.mxu0 0.0
  %389 = vmatpush2.msra.mxu0 0.0
  %390 = vmatprep.mubr.f32.mxu0 0.0
  %391 = vmatmul.mubr.f32.gmra.mxu0 %v243
  %v392 = vpop.f32.mrf.mxu0
  %v393 = vadd.f32 0.0, %v392
  %v394 = vpop.f32.mrf.mxu0
  %v395 = vadd.f32 0.0, %v394
  %396 = vdwg.mxu0
  %397 = vmatprep.subr.mxu0 0.0
  %398 = vmatpush1.msra.mxu0 0.0
  %399 = vmatprep.subr.mxu0 0.0
  %400 = vmatpush1.msra.mxu0 0.0
  %401 = vmatprep.subr.mxu0 0.0
  %402 = vmatpush1.msra.mxu0 0.0
  %403 = vmatprep.subr.mxu0 0.0
  %404 = vmatpush1.msra.mxu0 0.0
  %405 = vmatprep.subr.mxu0 0.0
  %406 = vmatpush1.msra.mxu0 0.0
  %407 = vmatprep.subr.mxu0 0.0
  %408 = vmatpush1.msra.mxu0 0.0
  %409 = vmatprep.subr.mxu0 0.0
  %410 = vmatpush1.msra.mxu0 0.0
  %411 = vmatprep.subr.mxu0 0.0
  %412 = vmatpush1.msra.mxu0 0.0
  %413 = vmatprep.subr.mxu0 0.0
  %414 = vmatpush1.msra.mxu0 0.0
  %415 = vmatprep.subr.mxu0 0.0
  %416 = vmatpush1.msra.mxu0 0.0
  %417 = vmatprep.subr.mxu0 0.0
  %418 = vmatpush1.msra.mxu0 0.0
  %419 = vmatprep.subr.mxu0 0.0
  %420 = vmatpush1.msra.mxu0 %v253
  %421 = vmatprep.subr.mxu0 0.0
  %422 = vmatpush1.msra.mxu0 %v240
  %423 = vmatprep.subr.mxu0 0.0
  %424 = vmatpush1.msra.mxu0 %v235
  %425 = vmatprep.subr.mxu0 0.0
  %426 = vmatpush1.msra.mxu0 %v230
  %427 = vmatprep.subr.mxu0 0.0
  %428 = vmatpush1.msra.mxu0 %v225
  %429 = vmatprep.subr.mxu0 0.0
  %430 = vmatpush2.msra.mxu0 0.0
  %431 = vmatprep.subr.mxu0 0.0
  %432 = vmatpush2.msra.mxu0 0.0
  %433 = vmatprep.subr.mxu0 0.0
  %434 = vmatpush2.msra.mxu0 0.0
  %435 = vmatprep.subr.mxu0 0.0
  %436 = vmatpush2.msra.mxu0 0.0
  %437 = vmatprep.subr.mxu0 0.0
  %438 = vmatpush2.msra.mxu0 0.0
  %439 = vmatprep.subr.mxu0 0.0
  %440 = vmatpush2.msra.mxu0 0.0
  %441 = vmatprep.subr.mxu0 0.0
  %442 = vmatpush2.msra.mxu0 0.0
  %443 = vmatprep.subr.mxu0 0.0
  %444 = vmatpush2.msra.mxu0 0.0
  %445 = vmatprep.subr.mxu0 0.0
  %446 = vmatpush2.msra.mxu0 0.0
  %447 = vmatprep.subr.mxu0 0.0
  %448 = vmatpush2.msra.mxu0 0.0
  %449 = vmatprep.subr.mxu0 0.0
  %450 = vmatpush2.msra.mxu0 0.0
  %451 = vmatprep.subr.mxu0 0.0
  %452 = vmatpush2.msra.mxu0 0.0
  %453 = vmatprep.subr.mxu0 0.0
  %454 = vmatpush2.msra.mxu0 0.0
  %455 = vmatprep.subr.mxu0 0.0
  %456 = vmatpush2.msra.mxu0 0.0
  %457 = vmatprep.subr.mxu0 0.0
  %458 = vmatpush2.msra.mxu0 0.0
  %459 = vmatprep.subr.mxu0 0.0
  %460 = vmatpush2.msra.mxu0 0.0
  %461 = vmatprep.mubr.f32.mxu0 0.0
  %462 = vmatmul.mubr.f32.gmra.mxu0 %v243
  %v463 = vpop.f32.mrf.mxu0
  %v464 = vadd.f32 0.0, %v463
  %v465 = vpop.f32.mrf.mxu0
  %466 = vdwg.mxu0
  %v467 = vlaneseq
  %v468 = vshrl.u32 %v467, 7
  %v469 = vsub.s32 0, %v468
  %v470 = vrot.slane %v37, %v469
  %v471 = vlaneseq
  %v472 = vshrl.u32 %v471, 7
  %v473 = vsub.s32 0, %v472
  %v474 = vrot.slane %v38, %v473
  %v475 = vlaneseq
  %v476 = vshrl.u32 %v475, 7
  %v477 = vsub.s32 0, %v476
  %v478 = vrot.slane %v39, %v477
  %v479 = vlaneseq
  %v480 = vshrl.u32 %v479, 7
  %v481 = vsub.s32 0, %v480
  %v482 = vrot.slane %v40, %v481
  %v483 = vlaneseq
  %v484 = vshrl.u32 %v483, 7
  %v485 = vsub.s32 0, %v484
  %v486 = vrot.slane %v41, %v485
  %v487 = vmul.f32 %v322, %v470
  %v488 = vmul.f32 %v324, %v474
  %v489 = vmul.f32 %v393, %v478
  %v490 = vmul.f32 %v395, %v482
  %v491 = vmul.f32 %v464, %v486
  %v492 = vsel %vm220, %v487, 0.0
  %v493 = vsel %vm220, %v488, 0.0
  %v494 = vadd.f32 %v492, %v493
  %v495 = vsel %vm220, %v489, 0.0
  %v496 = vadd.f32 %v494, %v495
  %v497 = vsel %vm220, %v490, 0.0
  %v498 = vadd.f32 %v496, %v497
  %vm499 = vcmask 797696
  %v500 = vsel %vm499, %v491, 0.0
  %v501 = vadd.f32 %v498, %v500
  %502 = vadd.xlane.f32.xlu0 %v501
  %v503 = vpop.xlane.xlu0 %502
  %v504 = vmul.f32 %v503, 0.0078125
  %v505 = vmul.f32 %v487, %v322
  %v506 = vmul.f32 %v488, %v324
  %v507 = vmul.f32 %v489, %v393
  %v508 = vmul.f32 %v490, %v395
  %v509 = vmul.f32 %v491, %v464
  %v510 = vsel %vm220, %v505, 0.0
  %v511 = vsel %vm220, %v506, 0.0
  %v512 = vadd.f32 %v510, %v511
  %v513 = vsel %vm220, %v507, 0.0
  %v514 = vadd.f32 %v512, %v513
  %v515 = vsel %vm220, %v508, 0.0
  %v516 = vadd.f32 %v514, %v515
  %v517 = vsel %vm499, %v509, 0.0
  %v518 = vadd.f32 %v516, %v517
  %519 = vadd.xlane.f32.xlu0 %v518
  %v520 = vpop.xlane.xlu0 %519
  %v521 = vmul.f32 %v520, 0.0078125
  %v522 = vmul.f32 %v504, %v504
  %v523 = vsub.f32 %v521, %v522
  %v524 = vadd.f32 %v523, 1e-05
  %v525 = vrsqrt.pop %v524
  %v526 = vmul.f32 %v36, %v525
  %528 = vset.pattern.permute.xlu0 0
  %529 = vperm.xlu0 %528, %v526
  %v530 = vpop.permute.xlu0 %529
  %v532 = vmul.f32 %v322, %v530
  %v533 = vmul.f32 %v324, %v530
  %v534 = vmul.f32 %v393, %v530
  %v535 = vmul.f32 %v395, %v530
  %v536 = vmul.f32 %v464, %v530
  %v537 = vmul.f32 %v504, %v526
  %539 = vrot.lane.b32.xlu0 %v537, 6
  %v540 = vpop.permute.xlu0 %539
  %v542 = vsub.f32 %v36, %v540
  %544 = vset.pattern.permute.xlu0 6
  %545 = vperm.xlu0 %544, %v542
  %v546 = vpop.permute.xlu0 %545
  %v548 = vadd.f32 %v532, %v546
  %v549 = vadd.f32 %v533, %v546
  %v550 = vadd.f32 %v534, %v546
  %v551 = vadd.f32 %v535, %v546
  %v552 = vadd.f32 %v536, %v546
  %v553 = vpack.c.bf16 %v548, %v548
  %v554 = vpack.c.bf16 %v549, %v549
  %v555 = vpack.c.bf16 %v550, %v550
  %v556 = vpack.c.bf16 %v551, %v551
  %v557 = vpack.c.bf16 %v552, %v552
  %v558 = vld [vmem:[%s4] sm:$0xff]
  %v559 = vld [vmem:[%s4 + $0x8] sm:$0xff]
  %v560 = vld [vmem:[%s4 + $0x10] sm:$0xff]
  %v561 = vld [vmem:[%s4 + $0x18] sm:$0xff]
  %v562 = vld [vmem:[%s4 + $0x20] sm:$0xff]
  %v563 = vld [vmem:[%s4 + $0x28] sm:$0xff]
  %v564 = vld [vmem:[%s4 + $0x30] sm:$0xff]
  %v565 = vld [vmem:[%s4 + $0x38] sm:$0xff]
  %v566 = vld [vmem:[%s4 + $0x40] sm:$0xff]
  %v567 = vld [vmem:[%s4 + $0x48] sm:$0xff]
  %v568 = vld [vmem:[%s4 + $0x50] sm:$0xff]
  %v569 = vld [vmem:[%s4 + $0x58] sm:$0xff]
  %v570 = vld [vmem:[%s4 + $0x60] sm:$0xff]
  %v571 = vld [vmem:[%s4 + $0x68] sm:$0xff]
  %v572 = vld [vmem:[%s4 + $0x70] sm:$0xff]
  %v573 = vld [vmem:[%s4 + $0x78] sm:$0xff]
  %v574 = vld [vmem:[%s4 + $0x80] sm:$0xff]
  %v575 = vld [vmem:[%s4 + $0x88] sm:$0xff]
  %v576 = vld [vmem:[%s4 + $0x90] sm:$0xff]
  %v577 = vld [vmem:[%s4 + $0x98] sm:$0xff]
  %v578 = vld [vmem:[%s4 + $0xa0] sm:$0xff]
  %v579 = vld [vmem:[%s4 + $0xa8] sm:$0xff]
  %v580 = vld [vmem:[%s4 + $0xb0] sm:$0xff]
  %v581 = vld [vmem:[%s4 + $0xb8] sm:$0xff]
  %v582 = vld [vmem:[%s4 + $0xc0] sm:$0xff]
  %v583 = vld [vmem:[%s4 + $0xc8] sm:$0xff]
  %v584 = vld [vmem:[%s4 + $0xd0] sm:$0xff]
  %v585 = vld [vmem:[%s4 + $0xd8] sm:$0xff]
  %v586 = vld [vmem:[%s4 + $0xe0] sm:$0xff]
  %v587 = vld [vmem:[%s4 + $0xe8] sm:$0xff]
  %v588 = vld [vmem:[%s4 + $0xf0] sm:$0xff]
  %v589 = vld [vmem:[%s4 + $0xf8] sm:$0xff]
  %v590 = vld [vmem:[%s4 + $0x100] sm:$0xff]
  %v591 = vld [vmem:[%s4 + $0x108] sm:$0xff]
  %v592 = vld [vmem:[%s4 + $0x110] sm:$0xff]
  %v593 = vld [vmem:[%s4 + $0x118] sm:$0xff]
  %v594 = vld [vmem:[%s4 + $0x120] sm:$0xff]
  %v595 = vld [vmem:[%s4 + $0x128] sm:$0xff]
  %v596 = vld [vmem:[%s4 + $0x130] sm:$0xff]
  %v597 = vld [vmem:[%s4 + $0x138] sm:$0xff]
  %v598 = vld [vmem:[%s4 + $0x140] sm:$0xff]
  %v599 = vld [vmem:[%s4 + $0x148] sm:$0xff]
  %v600 = vld [vmem:[%s4 + $0x150] sm:$0xff]
  %v601 = vld [vmem:[%s4 + $0x158] sm:$0xff]
  %v602 = vld [vmem:[%s4 + $0x160] sm:$0xff]
  %v603 = vld [vmem:[%s4 + $0x168] sm:$0xff]
  %v604 = vld [vmem:[%s4 + $0x170] sm:$0xff]
  %v605 = vld [vmem:[%s4 + $0x178] sm:$0xff]
  %v606 = vld [vmem:[%s4 + $0x180] sm:$0xff]
  %v607 = vld [vmem:[%s4 + $0x188] sm:$0xff]
  %v608 = vld [vmem:[%s4 + $0x190] sm:$0xff]
  %v609 = vld [vmem:[%s4 + $0x198] sm:$0xff]
  %v610 = vld [vmem:[%s4 + $0x1a0] sm:$0xff]
  %v611 = vld [vmem:[%s4 + $0x1a8] sm:$0xff]
  %v612 = vld [vmem:[%s4 + $0x1b0] sm:$0xff]
  %v613 = vld [vmem:[%s4 + $0x1b8] sm:$0xff]
  %v614 = vld [vmem:[%s4 + $0x1c0] sm:$0xff]
  %v615 = vld [vmem:[%s4 + $0x1c8] sm:$0xff]
  %v616 = vld [vmem:[%s4 + $0x1d0] sm:$0xff]
  %v617 = vld [vmem:[%s4 + $0x1d8] sm:$0xff]
  %v618 = vld [vmem:[%s4 + $0x1e0] sm:$0xff]
  %v619 = vld [vmem:[%s4 + $0x1e8] sm:$0xff]
  %v620 = vld [vmem:[%s4 + $0x1f0] sm:$0xff]
  %v621 = vld [vmem:[%s4 + $0x1f8] sm:$0xff]
  %v622 = vld [vmem:[%s4 + $0x200] sm:$0xff]
  %v623 = vld [vmem:[%s4 + $0x208] sm:$0xff]
  %v624 = vld [vmem:[%s4 + $0x210] sm:$0xff]
  %v625 = vld [vmem:[%s4 + $0x218] sm:$0xff]
  %v626 = vld [vmem:[%s4 + $0x220] sm:$0xff]
  %v627 = vld [vmem:[%s4 + $0x228] sm:$0xff]
  %v628 = vld [vmem:[%s4 + $0x230] sm:$0xff]
  %v629 = vld [vmem:[%s4 + $0x238] sm:$0xff]
  %v630 = vld [vmem:[%s4 + $0x240] sm:$0xff]
  %v631 = vld [vmem:[%s4 + $0x248] sm:$0xff]
  %v632 = vld [vmem:[%s4 + $0x250] sm:$0xff]
  %v633 = vld [vmem:[%s4 + $0x258] sm:$0xff]
  %v634 = vld [vmem:[%s4 + $0x260] sm:$0x11]
  %v712 = vunpack.c.l.b16 %v558
  %v713 = vunpack.c.h.b16 %v558
  %v714 = vunpack.c.l.b16 %v559
  %v715 = vunpack.c.h.b16 %v559
  %v716 = vunpack.c.l.b16 %v560
  %v717 = vunpack.c.h.b16 %v560
  %v718 = vunpack.c.l.b16 %v561
  %v719 = vunpack.c.h.b16 %v561
  %v720 = vunpack.c.l.b16 %v562
  %v721 = vunpack.c.h.b16 %v562
  %v722 = vunpack.c.l.b16 %v563
  %v723 = vunpack.c.h.b16 %v563
  %v724 = vunpack.c.l.b16 %v564
  %v725 = vunpack.c.h.b16 %v564
  %v726 = vunpack.c.l.b16 %v565
  %v727 = vunpack.c.h.b16 %v565
  %v728 = vunpack.c.l.b16 %v566
  %v729 = vunpack.c.h.b16 %v566
  %v730 = vunpack.c.l.b16 %v567
  %v731 = vunpack.c.h.b16 %v567
  %v732 = vunpack.c.l.b16 %v568
  %v733 = vunpack.c.h.b16 %v568
  %v734 = vunpack.c.l.b16 %v569
  %v735 = vunpack.c.h.b16 %v569
  %v736 = vunpack.c.l.b16 %v570
  %v737 = vunpack.c.h.b16 %v570
  %v738 = vunpack.c.l.b16 %v571
  %v739 = vunpack.c.h.b16 %v571
  %v740 = vunpack.c.l.b16 %v572
  %v741 = vunpack.c.h.b16 %v572
  %v742 = vunpack.c.l.b16 %v573
  %v743 = vunpack.c.h.b16 %v573
  %v744 = vunpack.c.l.b16 %v574
  %v745 = vunpack.c.h.b16 %v574
  %v746 = vunpack.c.l.b16 %v575
  %v747 = vunpack.c.h.b16 %v575
  %v748 = vunpack.c.l.b16 %v576
  %v749 = vunpack.c.h.b16 %v576
  %v750 = vunpack.c.l.b16 %v577
  %v751 = vunpack.c.h.b16 %v577
  %v752 = vunpack.c.l.b16 %v578
  %v753 = vunpack.c.h.b16 %v578
  %v754 = vunpack.c.l.b16 %v579
  %v755 = vunpack.c.h.b16 %v579
  %v756 = vunpack.c.l.b16 %v580
  %v757 = vunpack.c.h.b16 %v580
  %v758 = vunpack.c.l.b16 %v581
  %v759 = vunpack.c.h.b16 %v581
  %v760 = vunpack.c.l.b16 %v582
  %v761 = vunpack.c.h.b16 %v582
  %v762 = vunpack.c.l.b16 %v583
  %v763 = vunpack.c.h.b16 %v583
  %v764 = vunpack.c.l.b16 %v584
  %v765 = vunpack.c.h.b16 %v584
  %v766 = vunpack.c.l.b16 %v585
  %v767 = vunpack.c.h.b16 %v585
  %v768 = vunpack.c.l.b16 %v586
  %v769 = vunpack.c.h.b16 %v586
  %v770 = vunpack.c.l.b16 %v587
  %v771 = vunpack.c.h.b16 %v587
  %v772 = vunpack.c.l.b16 %v588
  %v773 = vunpack.c.h.b16 %v588
  %v774 = vunpack.c.l.b16 %v589
  %v775 = vunpack.c.h.b16 %v589
  %v776 = vunpack.c.l.b16 %v590
  %v777 = vunpack.c.h.b16 %v590
  %v778 = vunpack.c.l.b16 %v591
  %v779 = vunpack.c.h.b16 %v591
  %v780 = vunpack.c.l.b16 %v592
  %v781 = vunpack.c.h.b16 %v592
  %v782 = vunpack.c.l.b16 %v593
  %v783 = vunpack.c.h.b16 %v593
  %v784 = vunpack.c.l.b16 %v594
  %v785 = vunpack.c.h.b16 %v594
  %v786 = vunpack.c.l.b16 %v595
  %v787 = vunpack.c.h.b16 %v595
  %v788 = vunpack.c.l.b16 %v596
  %v789 = vunpack.c.h.b16 %v596
  %v790 = vunpack.c.l.b16 %v597
  %v791 = vunpack.c.h.b16 %v597
  %v792 = vunpack.c.l.b16 %v598
  %v793 = vunpack.c.h.b16 %v598
  %v794 = vunpack.c.l.b16 %v599
  %v795 = vunpack.c.h.b16 %v599
  %v796 = vunpack.c.l.b16 %v600
  %v797 = vunpack.c.h.b16 %v600
  %v798 = vunpack.c.l.b16 %v601
  %v799 = vunpack.c.h.b16 %v601
  %v800 = vunpack.c.l.b16 %v602
  %v801 = vunpack.c.h.b16 %v602
  %v802 = vunpack.c.l.b16 %v603
  %v803 = vunpack.c.h.b16 %v603
  %v804 = vunpack.c.l.b16 %v604
  %v805 = vunpack.c.h.b16 %v604
  %v806 = vunpack.c.l.b16 %v605
  %v807 = vunpack.c.h.b16 %v605
  %v808 = vunpack.c.l.b16 %v606
  %v809 = vunpack.c.h.b16 %v606
  %v810 = vunpack.c.l.b16 %v607
  %v811 = vunpack.c.h.b16 %v607
  %v812 = vunpack.c.l.b16 %v608
  %v813 = vunpack.c.h.b16 %v608
  %v814 = vunpack.c.l.b16 %v609
  %v815 = vunpack.c.h.b16 %v609
  %v816 = vunpack.c.l.b16 %v610
  %v817 = vunpack.c.h.b16 %v610
  %v818 = vunpack.c.l.b16 %v611
  %v819 = vunpack.c.h.b16 %v611
  %v820 = vunpack.c.l.b16 %v612
  %v821 = vunpack.c.h.b16 %v612
  %v822 = vunpack.c.l.b16 %v613
  %v823 = vunpack.c.h.b16 %v613
  %v824 = vunpack.c.l.b16 %v614
  %v825 = vunpack.c.h.b16 %v614
  %v826 = vunpack.c.l.b16 %v615
  %v827 = vunpack.c.h.b16 %v615
  %v828 = vunpack.c.l.b16 %v616
  %v829 = vunpack.c.h.b16 %v616
  %v830 = vunpack.c.l.b16 %v617
  %v831 = vunpack.c.h.b16 %v617
  %v832 = vunpack.c.l.b16 %v618
  %v833 = vunpack.c.h.b16 %v618
  %v834 = vunpack.c.l.b16 %v619
  %v835 = vunpack.c.h.b16 %v619
  %v836 = vunpack.c.l.b16 %v620
  %v837 = vunpack.c.h.b16 %v620
  %v838 = vunpack.c.l.b16 %v621
  %v839 = vunpack.c.h.b16 %v621
  %v840 = vunpack.c.l.b16 %v622
  %v841 = vunpack.c.h.b16 %v622
  %v842 = vunpack.c.l.b16 %v623
  %v843 = vunpack.c.h.b16 %v623
  %v844 = vunpack.c.l.b16 %v624
  %v845 = vunpack.c.h.b16 %v624
  %v846 = vunpack.c.l.b16 %v625
  %v847 = vunpack.c.h.b16 %v625
  %v848 = vunpack.c.l.b16 %v626
  %v849 = vunpack.c.h.b16 %v626
  %v850 = vunpack.c.l.b16 %v627
  %v851 = vunpack.c.h.b16 %v627
  %v852 = vunpack.c.l.b16 %v628
  %v853 = vunpack.c.h.b16 %v628
  %v854 = vunpack.c.l.b16 %v629
  %v855 = vunpack.c.h.b16 %v629
  %v856 = vunpack.c.l.b16 %v630
  %v857 = vunpack.c.h.b16 %v630
  %v858 = vunpack.c.l.b16 %v631
  %v859 = vunpack.c.h.b16 %v631
  %v860 = vunpack.c.l.b16 %v632
  %v861 = vunpack.c.h.b16 %v632
  %v862 = vunpack.c.l.b16 %v633
  %v863 = vunpack.c.h.b16 %v633
  %v864 = vunpack.c.l.b16 %v634
  %v865 = vunpack.c.h.b16 %v634
  %v866 = vpack.c.b16 %v714, %v712
  %v867 = vpack.c.b16 %v715, %v713
  %v868 = vpack.c.b16 %v718, %v716
  %v869 = vpack.c.b16 %v719, %v717
  %v870 = vpack.c.b16 %v722, %v720
  %v871 = vpack.c.b16 %v723, %v721
  %v872 = vpack.c.b16 %v726, %v724
  %v873 = vpack.c.b16 %v727, %v725
  %v874 = vpack.c.b16 %v730, %v728
  %v875 = vpack.c.b16 %v731, %v729
  %v876 = vpack.c.b16 %v734, %v732
  %v877 = vpack.c.b16 %v735, %v733
  %v878 = vpack.c.b16 %v738, %v736
  %v879 = vpack.c.b16 %v739, %v737
  %v880 = vpack.c.b16 %v742, %v740
  %v881 = vpack.c.b16 %v743, %v741
  %v882 = vpack.c.b16 %v746, %v744
  %v883 = vpack.c.b16 %v747, %v745
  %v884 = vpack.c.b16 %v750, %v748
  %v885 = vpack.c.b16 %v751, %v749
  %v886 = vpack.c.b16 %v754, %v752
  %v887 = vpack.c.b16 %v755, %v753
  %v888 = vpack.c.b16 %v758, %v756
  %v889 = vpack.c.b16 %v759, %v757
  %v890 = vpack.c.b16 %v762, %v760
  %v891 = vpack.c.b16 %v763, %v761
  %v892 = vpack.c.b16 %v766, %v764
  %v893 = vpack.c.b16 %v767, %v765
  %v894 = vpack.c.b16 %v770, %v768
  %v895 = vpack.c.b16 %v771, %v769
  %v896 = vpack.c.b16 %v774, %v772
  %v897 = vpack.c.b16 %v775, %v773
  %v898 = vpack.c.b16 %v778, %v776
  %v899 = vpack.c.b16 %v779, %v777
  %v900 = vpack.c.b16 %v782, %v780
  %v901 = vpack.c.b16 %v783, %v781
  %v902 = vpack.c.b16 %v786, %v784
  %v903 = vpack.c.b16 %v787, %v785
  %v904 = vpack.c.b16 %v790, %v788
  %v905 = vpack.c.b16 %v791, %v789
  %v906 = vpack.c.b16 %v794, %v792
  %v907 = vpack.c.b16 %v795, %v793
  %v908 = vpack.c.b16 %v798, %v796
  %v909 = vpack.c.b16 %v799, %v797
  %v910 = vpack.c.b16 %v802, %v800
  %v911 = vpack.c.b16 %v803, %v801
  %v912 = vpack.c.b16 %v806, %v804
  %v913 = vpack.c.b16 %v807, %v805
  %v914 = vpack.c.b16 %v810, %v808
  %v915 = vpack.c.b16 %v811, %v809
  %v916 = vpack.c.b16 %v814, %v812
  %v917 = vpack.c.b16 %v815, %v813
  %v918 = vpack.c.b16 %v818, %v816
  %v919 = vpack.c.b16 %v819, %v817
  %v920 = vpack.c.b16 %v822, %v820
  %v921 = vpack.c.b16 %v823, %v821
  %v922 = vpack.c.b16 %v826, %v824
  %v923 = vpack.c.b16 %v827, %v825
  %v924 = vpack.c.b16 %v830, %v828
  %v925 = vpack.c.b16 %v831, %v829
  %v926 = vpack.c.b16 %v834, %v832
  %v927 = vpack.c.b16 %v835, %v833
  %v928 = vpack.c.b16 %v838, %v836
  %v929 = vpack.c.b16 %v839, %v837
  %v930 = vpack.c.b16 %v842, %v840
  %v931 = vpack.c.b16 %v843, %v841
  %v932 = vpack.c.b16 %v846, %v844
  %v933 = vpack.c.b16 %v847, %v845
  %v934 = vpack.c.b16 %v850, %v848
  %v935 = vpack.c.b16 %v851, %v849
  %v936 = vpack.c.b16 %v854, %v852
  %v937 = vpack.c.b16 %v855, %v853
  %v938 = vpack.c.b16 %v858, %v856
  %v939 = vpack.c.b16 %v859, %v857
  %v940 = vpack.c.b16 %v862, %v860
  %v941 = vpack.c.b16 %v863, %v861
  %v942 = vpack.c.b16 %v864, %v864
  %v943 = vpack.c.b16 %v865, %v865
  %vm1020 = vcmask 801792
  %v1022 = vsel %vm1020, %v557, 0
  %vm1024 = vcmask 1040384
  %v1026 = vsel %vm1024, %v942, 0
  %v1029 = vsel %vm1024, %v943, 0
  %1031 = vmatprep.subr.bf16.mxu0 %v881
  %1032 = vmatpush1.bf16.msra.mxu0 %v880
  %1033 = vmatprep.subr.bf16.mxu0 %v879
  %1034 = vmatpush1.bf16.msra.mxu0 %v878
  %1035 = vmatprep.subr.bf16.mxu0 %v877
  %1036 = vmatpush1.bf16.msra.mxu0 %v876
  %1037 = vmatprep.subr.bf16.mxu0 %v875
  %1038 = vmatpush1.bf16.msra.mxu0 %v874
  %1039 = vmatprep.subr.bf16.mxu0 %v873
  %1040 = vmatpush1.bf16.msra.mxu0 %v872
  %1041 = vmatprep.subr.bf16.mxu0 %v871
  %1042 = vmatpush1.bf16.msra.mxu0 %v870
  %1043 = vmatprep.subr.bf16.mxu0 %v869
  %1044 = vmatpush1.bf16.msra.mxu0 %v868
  %1045 = vmatprep.subr.bf16.mxu0 %v867
  %1046 = vmatpush1.bf16.msra.mxu0 %v866
  %1047 = vmatprep.subr.bf16.mxu0 %v897
  %1048 = vmatpush2.bf16.msra.mxu0 %v896
  %1049 = vmatprep.subr.bf16.mxu0 %v895
  %1050 = vmatpush2.bf16.msra.mxu0 %v894
  %1051 = vmatprep.subr.bf16.mxu0 %v893
  %1052 = vmatpush2.bf16.msra.mxu0 %v892
  %1053 = vmatprep.subr.bf16.mxu0 %v891
  %1054 = vmatpush2.bf16.msra.mxu0 %v890
  %1055 = vmatprep.subr.bf16.mxu0 %v889
  %1056 = vmatpush2.bf16.msra.mxu0 %v888
  %1057 = vmatprep.subr.bf16.mxu0 %v887
  %1058 = vmatpush2.bf16.msra.mxu0 %v886
  %1059 = vmatprep.subr.bf16.mxu0 %v885
  %1060 = vmatpush2.bf16.msra.mxu0 %v884
  %1061 = vmatprep.subr.bf16.mxu0 %v883
  %1062 = vmatpush2.bf16.msra.mxu0 %v882
  %1063 = vmatprep.mubr.bf16.mxu0 %v554
  %1064 = vmatmul.mubr.bf16.gmra.mxu0 %v553
  %v1065 = vpop.f32.mrf.mxu0
  %v1066 = vadd.f32 0.0, %v1065
  %v1067 = vpop.f32.mrf.mxu0
  %v1068 = vadd.f32 0.0, %v1067
  %v1069 = vpop.f32.mrf.mxu0
  %v1070 = vpop.f32.mrf.mxu0
  %1071 = vdwg.mxu0
  %1072 = vmatprep.subr.bf16.mxu0 %v913
  %1073 = vmatpush1.bf16.msra.mxu0 %v912
  %1074 = vmatprep.subr.bf16.mxu0 %v911
  %1075 = vmatpush1.bf16.msra.mxu0 %v910
  %1076 = vmatprep.subr.bf16.mxu0 %v909
  %1077 = vmatpush1.bf16.msra.mxu0 %v908
  %1078 = vmatprep.subr.bf16.mxu0 %v907
  %1079 = vmatpush1.bf16.msra.mxu0 %v906
  %1080 = vmatprep.subr.bf16.mxu0 %v905
  %1081 = vmatpush1.bf16.msra.mxu0 %v904
  %1082 = vmatprep.subr.bf16.mxu0 %v903
  %1083 = vmatpush1.bf16.msra.mxu0 %v902
  %1084 = vmatprep.subr.bf16.mxu0 %v901
  %1085 = vmatpush1.bf16.msra.mxu0 %v900
  %1086 = vmatprep.subr.bf16.mxu0 %v899
  %1087 = vmatpush1.bf16.msra.mxu0 %v898
  %1088 = vmatprep.subr.bf16.mxu0 %v929
  %1089 = vmatpush2.bf16.msra.mxu0 %v928
  %1090 = vmatprep.subr.bf16.mxu0 %v927
  %1091 = vmatpush2.bf16.msra.mxu0 %v926
  %1092 = vmatprep.subr.bf16.mxu0 %v925
  %1093 = vmatpush2.bf16.msra.mxu0 %v924
  %1094 = vmatprep.subr.bf16.mxu0 %v923
  %1095 = vmatpush2.bf16.msra.mxu0 %v922
  %1096 = vmatprep.subr.bf16.mxu0 %v921
  %1097 = vmatpush2.bf16.msra.mxu0 %v920
  %1098 = vmatprep.subr.bf16.mxu0 %v919
  %1099 = vmatpush2.bf16.msra.mxu0 %v918
  %1100 = vmatprep.subr.bf16.mxu0 %v917
  %1101 = vmatpush2.bf16.msra.mxu0 %v916
  %1102 = vmatprep.subr.bf16.mxu0 %v915
  %1103 = vmatpush2.bf16.msra.mxu0 %v914
  %1104 = vmatprep.mubr.bf16.mxu0 %v556
  %1105 = vmatmul.mubr.bf16.gmra.mxu0 %v555
  %v1106 = vpop.f32.mrf.mxu0
  %v1107 = vadd.f32 %v1066, %v1106
  %v1108 = vpop.f32.mrf.mxu0
  %v1109 = vadd.f32 %v1068, %v1108
  %v1110 = vpop.f32.mrf.mxu0
  %v1111 = vpop.f32.mrf.mxu0
  %1112 = vdwg.mxu0
  %1113 = vmatprep.subr.bf16.mxu0 0
  %1114 = vmatpush1.bf16.msra.mxu0 0
  %1115 = vmatprep.subr.bf16.mxu0 %v1029
  %1116 = vmatpush1.bf16.msra.mxu0 %v1026
  %1117 = vmatprep.subr.bf16.mxu0 %v941
  %1118 = vmatpush1.bf16.msra.mxu0 %v940
  %1119 = vmatprep.subr.bf16.mxu0 %v939
  %1120 = vmatpush1.bf16.msra.mxu0 %v938
  %1121 = vmatprep.subr.bf16.mxu0 %v937
  %1122 = vmatpush1.bf16.msra.mxu0 %v936
  %1123 = vmatprep.subr.bf16.mxu0 %v935
  %1124 = vmatpush1.bf16.msra.mxu0 %v934
  %1125 = vmatprep.subr.bf16.mxu0 %v933
  %1126 = vmatpush1.bf16.msra.mxu0 %v932
  %1127 = vmatprep.subr.bf16.mxu0 %v931
  %1128 = vmatpush1.bf16.msra.mxu0 %v930
  %1129 = vmatprep.subr.bf16.mxu0 0
  %1130 = vmatpush2.bf16.msra.mxu0 0
  %1131 = vmatprep.subr.bf16.mxu0 0
  %1132 = vmatpush2.bf16.msra.mxu0 0
  %1133 = vmatprep.subr.bf16.mxu0 0
  %1134 = vmatpush2.bf16.msra.mxu0 0
  %1135 = vmatprep.subr.bf16.mxu0 0
  %1136 = vmatpush2.bf16.msra.mxu0 0
  %1137 = vmatprep.subr.bf16.mxu0 0
  %1138 = vmatpush2.bf16.msra.mxu0 0
  %1139 = vmatprep.subr.bf16.mxu0 0
  %1140 = vmatpush2.bf16.msra.mxu0 0
  %1141 = vmatprep.subr.bf16.mxu0 0
  %1142 = vmatpush2.bf16.msra.mxu0 0
  %1143 = vmatprep.subr.bf16.mxu0 0
  %1144 = vmatpush2.bf16.msra.mxu0 0
  %1145 = vmatprep.mubr.bf16.mxu0 0
  %1146 = vmatmul.mubr.bf16.gmra.mxu0 %v1022
  %v1147 = vpop.f32.mrf.mxu0
  %v1148 = vadd.f32 %v1107, %v1147
  %v1149 = vpop.f32.mrf.mxu0
  %v1150 = vadd.f32 %v1109, %v1149
  %v1151 = vpop.f32.mrf.mxu0
  %v1152 = vpop.f32.mrf.mxu0
  %1153 = vdwg.mxu0
  %v1156 = vrot.slane %v1148, 4
  %v1157 = vrot.slane %v1150, 4
  %1158 = vrot.lane.b32.xlu0 %v1156, 127
  %v1159 = vpop.permute.xlu0 %1158
  %1160 = vrot.lane.b32.xlu0 %v1157, 127
  %v1161 = vpop.permute.xlu0 %1160
  %v1162 = vsel %vm65, %v1159, %v1161
  %1165 = vrot.lane.b32.xlu0 %v1148, 126
  %v1166 = vpop.permute.xlu0 %1165
  %1167 = vrot.lane.b32.xlu0 %v1150, 126
  %v1168 = vpop.permute.xlu0 %1167
  %v1169 = vsel %vm85, %v1166, %v1168
  %1172 = vrot.lane.b32.xlu0 %v1156, 118
  %v1173 = vpop.permute.xlu0 %1172
  %1174 = vrot.lane.b32.xlu0 %v1157, 118
  %v1175 = vpop.permute.xlu0 %1174
  %vm1176 = vcmask 965632
  %v1177 = vsel %vm1176, %v1173, %v1175
  %1180 = vrot.lane.b32.xlu0 %v1148, 117
  %v1181 = vpop.permute.xlu0 %1180
  %1182 = vrot.lane.b32.xlu0 %v1150, 117
  %v1183 = vpop.permute.xlu0 %1182
  %vm1184 = vcmask 957440
  %v1185 = vsel %vm1184, %v1181, %v1183
  %1188 = vrot.lane.b32.xlu0 %v1156, 116
  %v1189 = vpop.permute.xlu0 %1188
  %1190 = vrot.lane.b32.xlu0 %v1157, 116
  %v1191 = vpop.permute.xlu0 %1190
  %vm1192 = vcmask 949248
  %v1193 = vsel %vm1192, %v1189, %v1191
  %1196 = vrot.lane.b32.xlu0 %v1148, 108
  %v1197 = vpop.permute.xlu0 %1196
  %1198 = vrot.lane.b32.xlu0 %v1150, 108
  %v1199 = vpop.permute.xlu0 %1198
  %v1200 = vsel %vm145, %v1197, %v1199
  %1203 = vrot.lane.b32.xlu0 %v1156, 107
  %v1204 = vpop.permute.xlu0 %1203
  %1205 = vrot.lane.b32.xlu0 %v1157, 107
  %v1206 = vpop.permute.xlu0 %1205
  %vm1207 = vcmask 875520
  %v1208 = vsel %vm1207, %v1204, %v1206
  %1211 = vrot.lane.b32.xlu0 %v1148, 106
  %v1212 = vpop.permute.xlu0 %1211
  %1213 = vrot.lane.b32.xlu0 %v1150, 106
  %v1214 = vpop.permute.xlu0 %1213
  %vm1215 = vcmask 867328
  %v1216 = vsel %vm1215, %v1212, %v1214
  %v1217 = vsel %vm220, %v1148, %v1162
  %v1218 = vsel %vm220, %v1150, %v1161
  %v1219 = vsel %vm220, %v1169, %v1177
  %v1220 = vsel %vm220, %v1168, %v1175
  %v1221 = vsel %vm220, %v1185, %v1193
  %v1222 = vsel %vm220, %v1183, %v1191
  %v1223 = vsel %vm220, %v1200, %v1208
  %v1224 = vsel %vm220, %v1199, %v1206
  %v1225 = vrot.slane %v33, 4
  %v1226 = vsel %vm241, %v1225, 0
  %v1228 = vsel %vm220, %v1216, 0
  %v1230 = vsel %vm220, %v1214, 0
  %1232 = vmatprep.subr.mxu0 0.0
  %1233 = vmatpush1.msra.mxu0 0.0
  %1234 = vmatprep.subr.mxu0 0.0
  %1235 = vmatpush1.msra.mxu0 0.0
  %1236 = vmatprep.subr.mxu0 0.0
  %1237 = vmatpush1.msra.mxu0 0.0
  %1238 = vmatprep.subr.mxu0 0.0
  %1239 = vmatpush1.msra.mxu0 0.0
  %1240 = vmatprep.subr.mxu0 0.0
  %1241 = vmatpush1.msra.mxu0 0.0
  %1242 = vmatprep.subr.mxu0 0.0
  %1243 = vmatpush1.msra.mxu0 0.0
  %1244 = vmatprep.subr.mxu0 0.0
  %1245 = vmatpush1.msra.mxu0 0.0
  %1246 = vmatprep.subr.mxu0 0.0
  %1247 = vmatpush1.msra.mxu0 0.0
  %1248 = vmatprep.subr.mxu0 0.0
  %1249 = vmatpush1.msra.mxu0 0.0
  %1250 = vmatprep.subr.mxu0 0.0
  %1251 = vmatpush1.msra.mxu0 0.0
  %1252 = vmatprep.subr.mxu0 0.0
  %1253 = vmatpush1.msra.mxu0 0.0
  %1254 = vmatprep.subr.mxu0 %v1230
  %1255 = vmatpush1.msra.mxu0 %v1228
  %1256 = vmatprep.subr.mxu0 %v1224
  %1257 = vmatpush1.msra.mxu0 %v1223
  %1258 = vmatprep.subr.mxu0 %v1222
  %1259 = vmatpush1.msra.mxu0 %v1221
  %1260 = vmatprep.subr.mxu0 %v1220
  %1261 = vmatpush1.msra.mxu0 %v1219
  %1262 = vmatprep.subr.mxu0 %v1218
  %1263 = vmatpush1.msra.mxu0 %v1217
  %1264 = vmatprep.subr.mxu0 0.0
  %1265 = vmatpush2.msra.mxu0 0.0
  %1266 = vmatprep.subr.mxu0 0.0
  %1267 = vmatpush2.msra.mxu0 0.0
  %1268 = vmatprep.subr.mxu0 0.0
  %1269 = vmatpush2.msra.mxu0 0.0
  %1270 = vmatprep.subr.mxu0 0.0
  %1271 = vmatpush2.msra.mxu0 0.0
  %1272 = vmatprep.subr.mxu0 0.0
  %1273 = vmatpush2.msra.mxu0 0.0
  %1274 = vmatprep.subr.mxu0 0.0
  %1275 = vmatpush2.msra.mxu0 0.0
  %1276 = vmatprep.subr.mxu0 0.0
  %1277 = vmatpush2.msra.mxu0 0.0
  %1278 = vmatprep.subr.mxu0 0.0
  %1279 = vmatpush2.msra.mxu0 0.0
  %1280 = vmatprep.subr.mxu0 0.0
  %1281 = vmatpush2.msra.mxu0 0.0
  %1282 = vmatprep.subr.mxu0 0.0
  %1283 = vmatpush2.msra.mxu0 0.0
  %1284 = vmatprep.subr.mxu0 0.0
  %1285 = vmatpush2.msra.mxu0 0.0
  %1286 = vmatprep.subr.mxu0 0.0
  %1287 = vmatpush2.msra.mxu0 0.0
  %1288 = vmatprep.subr.mxu0 0.0
  %1289 = vmatpush2.msra.mxu0 0.0
  %1290 = vmatprep.subr.mxu0 0.0
  %1291 = vmatpush2.msra.mxu0 0.0
  %1292 = vmatprep.subr.mxu0 0.0
  %1293 = vmatpush2.msra.mxu0 0.0
  %1294 = vmatprep.subr.mxu0 0.0
  %1295 = vmatpush2.msra.mxu0 0.0
  %1296 = vmatprep.mubr.f32.mxu0 0.0
  %1297 = vmatmul.mubr.f32.gmra.mxu0 %v1226
  %v1298 = vpop.f32.mrf.mxu0
  %v1299 = vadd.f32 0.0, %v1298
  %v1300 = vpop.f32.mrf.mxu0
  %v1301 = vadd.f32 0.0, %v1300
  %1302 = vdwg.mxu0
  %v1303 = vlaneseq
  %v1304 = vshrl.u32 %v1303, 7
  %v1305 = vsub.s32 1, %v1304
  %v1306 = vrot.slane %v37, %v1305
  %v1307 = vlaneseq
  %v1308 = vshrl.u32 %v1307, 7
  %v1309 = vsub.s32 1, %v1308
  %v1310 = vrot.slane %v38, %v1309
  %v1311 = vmul.f32 %v1299, %v1306
  %v1312 = vmul.f32 %v1301, %v1310
  %v1313 = vsel %vm220, %v1311, 0.0
  %vm1314 = vcmask 404480
  %v1315 = vsel %vm1314, %v1312, 0.0
  %v1316 = vadd.f32 %v1313, %v1315
  %1317 = vadd.xlane.f32.xlu0 %v1316
  %v1318 = vpop.xlane.xlu0 %1317
  %v1319 = vmul.f32 %v1318, 0.03125
  %v1320 = vmul.f32 %v1311, %v1299
  %v1321 = vmul.f32 %v1312, %v1301
  %v1322 = vsel %vm220, %v1320, 0.0
  %v1323 = vsel %vm1314, %v1321, 0.0
  %v1324 = vadd.f32 %v1322, %v1323
  %1325 = vadd.xlane.f32.xlu0 %v1324
  %v1326 = vpop.xlane.xlu0 %1325
  %v1327 = vmul.f32 %v1326, 0.03125
  %v1328 = vmul.f32 %v1319, %v1319
  %v1329 = vsub.f32 %v1327, %v1328
  %v1330 = vadd.f32 %v1329, 1e-05
  %v1331 = vrsqrt.pop %v1330
  %v1332 = vmul.f32 %v36, %v1331
  %1334 = vset.pattern.permute.xlu0 1
  %1335 = vperm.xlu0 %1334, %v1332
  %v1336 = vpop.permute.xlu0 %1335
  %v1338 = vmul.f32 %v1299, %v1336
  %v1339 = vmul.f32 %v1301, %v1336
  %v1340 = vmul.f32 %v1319, %v1332
  %1342 = vrot.lane.b32.xlu0 %v1340, 6
  %v1343 = vpop.permute.xlu0 %1342
  %v1345 = vsub.f32 %v36, %v1343
  %1347 = vset.pattern.permute.xlu0 7
  %1348 = vperm.xlu0 %1347, %v1345
  %v1349 = vpop.permute.xlu0 %1348
  %v1351 = vadd.f32 %v1338, %v1349
  %v1352 = vadd.f32 %v1339, %v1349
  %v1353 = vpack.c.bf16 %v1351, %v1351
  %v1354 = vpack.c.bf16 %v1352, %v1352
  %v1355 = vld [vmem:[%s5] sm:$0xff]
  %v1356 = vld [vmem:[%s5 + $0x8] sm:$0xff]
  %v1357 = vld [vmem:[%s5 + $0x10] sm:$0xff]
  %v1358 = vld [vmem:[%s5 + $0x18] sm:$0xff]
  %v1359 = vld [vmem:[%s5 + $0x20] sm:$0xff]
  %v1360 = vld [vmem:[%s5 + $0x28] sm:$0xff]
  %v1361 = vld [vmem:[%s5 + $0x30] sm:$0xff]
  %v1362 = vld [vmem:[%s5 + $0x38] sm:$0xff]
  %v1363 = vld [vmem:[%s5 + $0x40] sm:$0xff]
  %v1364 = vld [vmem:[%s5 + $0x48] sm:$0xff]
  %v1365 = vld [vmem:[%s5 + $0x50] sm:$0xff]
  %v1366 = vld [vmem:[%s5 + $0x58] sm:$0xff]
  %v1367 = vld [vmem:[%s5 + $0x60] sm:$0xff]
  %v1368 = vld [vmem:[%s5 + $0x68] sm:$0xff]
  %v1369 = vld [vmem:[%s5 + $0x70] sm:$0xff]
  %v1370 = vld [vmem:[%s5 + $0x78] sm:$0xff]
  %v1371 = vld [vmem:[%s5 + $0x80] sm:$0xff]
  %v1372 = vld [vmem:[%s5 + $0x88] sm:$0xff]
  %v1373 = vld [vmem:[%s5 + $0x90] sm:$0xff]
  %v1374 = vld [vmem:[%s5 + $0x98] sm:$0xff]
  %v1375 = vld [vmem:[%s5 + $0xa0] sm:$0xff]
  %v1376 = vld [vmem:[%s5 + $0xa8] sm:$0xff]
  %v1377 = vld [vmem:[%s5 + $0xb0] sm:$0x11]
  %v1401 = vunpack.c.l.b16 %v1355
  %v1402 = vunpack.c.h.b16 %v1355
  %v1403 = vunpack.c.l.b16 %v1356
  %v1404 = vunpack.c.h.b16 %v1356
  %v1405 = vunpack.c.l.b16 %v1357
  %v1406 = vunpack.c.h.b16 %v1357
  %v1407 = vunpack.c.l.b16 %v1358
  %v1408 = vunpack.c.h.b16 %v1358
  %v1409 = vunpack.c.l.b16 %v1359
  %v1410 = vunpack.c.h.b16 %v1359
  %v1411 = vunpack.c.l.b16 %v1360
  %v1412 = vunpack.c.h.b16 %v1360
  %v1413 = vunpack.c.l.b16 %v1361
  %v1414 = vunpack.c.h.b16 %v1361
  %v1415 = vunpack.c.l.b16 %v1362
  %v1416 = vunpack.c.h.b16 %v1362
  %v1417 = vunpack.c.l.b16 %v1363
  %v1418 = vunpack.c.h.b16 %v1363
  %v1419 = vunpack.c.l.b16 %v1364
  %v1420 = vunpack.c.h.b16 %v1364
  %v1421 = vunpack.c.l.b16 %v1365
  %v1422 = vunpack.c.h.b16 %v1365
  %v1423 = vunpack.c.l.b16 %v1366
  %v1424 = vunpack.c.h.b16 %v1366
  %v1425 = vunpack.c.l.b16 %v1367
  %v1426 = vunpack.c.h.b16 %v1367
  %v1427 = vunpack.c.l.b16 %v1368
  %v1428 = vunpack.c.h.b16 %v1368
  %v1429 = vunpack.c.l.b16 %v1369
  %v1430 = vunpack.c.h.b16 %v1369
  %v1431 = vunpack.c.l.b16 %v1370
  %v1432 = vunpack.c.h.b16 %v1370
  %v1433 = vunpack.c.l.b16 %v1371
  %v1434 = vunpack.c.h.b16 %v1371
  %v1435 = vunpack.c.l.b16 %v1372
  %v1436 = vunpack.c.h.b16 %v1372
  %v1437 = vunpack.c.l.b16 %v1373
  %v1438 = vunpack.c.h.b16 %v1373
  %v1439 = vunpack.c.l.b16 %v1374
  %v1440 = vunpack.c.h.b16 %v1374
  %v1441 = vunpack.c.l.b16 %v1375
  %v1442 = vunpack.c.h.b16 %v1375
  %v1443 = vunpack.c.l.b16 %v1376
  %v1444 = vunpack.c.h.b16 %v1376
  %v1445 = vunpack.c.l.b16 %v1377
  %v1446 = vunpack.c.h.b16 %v1377
  %v1447 = vpack.c.b16 %v1403, %v1401
  %v1448 = vpack.c.b16 %v1404, %v1402
  %v1449 = vpack.c.b16 %v1407, %v1405
  %v1450 = vpack.c.b16 %v1408, %v1406
  %v1451 = vpack.c.b16 %v1411, %v1409
  %v1452 = vpack.c.b16 %v1412, %v1410
  %v1453 = vpack.c.b16 %v1415, %v1413
  %v1454 = vpack.c.b16 %v1416, %v1414
  %v1455 = vpack.c.b16 %v1419, %v1417
  %v1456 = vpack.c.b16 %v1420, %v1418
  %v1457 = vpack.c.b16 %v1423, %v1421
  %v1458 = vpack.c.b16 %v1424, %v1422
  %v1459 = vpack.c.b16 %v1427, %v1425
  %v1460 = vpack.c.b16 %v1428, %v1426
  %v1461 = vpack.c.b16 %v1431, %v1429
  %v1462 = vpack.c.b16 %v1432, %v1430
  %v1463 = vpack.c.b16 %v1435, %v1433
  %v1464 = vpack.c.b16 %v1436, %v1434
  %v1465 = vpack.c.b16 %v1439, %v1437
  %v1466 = vpack.c.b16 %v1440, %v1438
  %v1467 = vpack.c.b16 %v1443, %v1441
  %v1468 = vpack.c.b16 %v1444, %v1442
  %v1469 = vpack.c.b16 %v1445, %v1445
  %v1470 = vpack.c.b16 %v1446, %v1446
  %vm1493 = vcmask 408576
  %v1495 = vsel %vm1493, %v1354, 0
  %v1498 = vsel %vm1024, %v1469, 0
  %v1501 = vsel %vm1024, %v1470, 0
  %1503 = vmatprep.subr.bf16.mxu0 %v1462
  %1504 = vmatpush1.bf16.msra.mxu0 %v1461
  %1505 = vmatprep.subr.bf16.mxu0 %v1460
  %1506 = vmatpush1.bf16.msra.mxu0 %v1459
  %1507 = vmatprep.subr.bf16.mxu0 %v1458
  %1508 = vmatpush1.bf16.msra.mxu0 %v1457
  %1509 = vmatprep.subr.bf16.mxu0 %v1456
  %1510 = vmatpush1.bf16.msra.mxu0 %v1455
  %1511 = vmatprep.subr.bf16.mxu0 %v1454
  %1512 = vmatpush1.bf16.msra.mxu0 %v1453
  %1513 = vmatprep.subr.bf16.mxu0 %v1452
  %1514 = vmatpush1.bf16.msra.mxu0 %v1451
  %1515 = vmatprep.subr.bf16.mxu0 %v1450
  %1516 = vmatpush1.bf16.msra.mxu0 %v1449
  %1517 = vmatprep.subr.bf16.mxu0 %v1448
  %1518 = vmatpush1.bf16.msra.mxu0 %v1447
  %1519 = vmatprep.subr.bf16.mxu0 0
  %1520 = vmatpush2.bf16.msra.mxu0 0
  %1521 = vmatprep.subr.bf16.mxu0 0
  %1522 = vmatpush2.bf16.msra.mxu0 0
  %1523 = vmatprep.subr.bf16.mxu0 0
  %1524 = vmatpush2.bf16.msra.mxu0 0
  %1525 = vmatprep.subr.bf16.mxu0 0
  %1526 = vmatpush2.bf16.msra.mxu0 0
  %1527 = vmatprep.subr.bf16.mxu0 %v1501
  %1528 = vmatpush2.bf16.msra.mxu0 %v1498
  %1529 = vmatprep.subr.bf16.mxu0 %v1468
  %1530 = vmatpush2.bf16.msra.mxu0 %v1467
  %1531 = vmatprep.subr.bf16.mxu0 %v1466
  %1532 = vmatpush2.bf16.msra.mxu0 %v1465
  %1533 = vmatprep.subr.bf16.mxu0 %v1464
  %1534 = vmatpush2.bf16.msra.mxu0 %v1463
  %1535 = vmatprep.mubr.bf16.mxu0 %v1495
  %1536 = vmatmul.mubr.bf16.gmra.mxu0 %v1353
  %v1537 = vpop.f32.mrf.mxu0
  %v1538 = vadd.f32 0.0, %v1537
  %v1539 = vpop.f32.mrf.mxu0
  %v1540 = vadd.f32 0.0, %v1539
  %v1541 = vpop.f32.mrf.mxu0
  %v1542 = vpop.f32.mrf.mxu0
  %1543 = vdwg.mxu0
  %v1546 = vrot.slane %v1538, 4
  %v1547 = vrot.slane %v1540, 4
  %1548 = vrot.lane.b32.xlu0 %v1546, 126
  %v1549 = vpop.permute.xlu0 %1548
  %1550 = vrot.lane.b32.xlu0 %v1547, 126
  %v1551 = vpop.permute.xlu0 %1550
  %v1552 = vsel %vm85, %v1549, %v1551
  %1555 = vrot.lane.b32.xlu0 %v1538, 124
  %v1556 = vpop.permute.xlu0 %1555
  %1557 = vrot.lane.b32.xlu0 %v1540, 124
  %v1558 = vpop.permute.xlu0 %1557
  %vm1559 = vcmask 1014784
  %v1560 = vsel %vm1559, %v1556, %v1558
  %1563 = vrot.lane.b32.xlu0 %v1546, 112
  %v1564 = vpop.permute.xlu0 %1563
  %1565 = vrot.lane.b32.xlu0 %v1547, 112
  %v1566 = vpop.permute.xlu0 %1565
  %vm1567 = vcmask 916480
  %v1568 = vsel %vm1567, %v1564, %v1566
  %1571 = vrot.lane.b32.xlu0 %v1538, 110
  %v1572 = vpop.permute.xlu0 %1571
  %1573 = vrot.lane.b32.xlu0 %v1540, 110
  %v1574 = vpop.permute.xlu0 %1573
  %v1575 = vsel %vm105, %v1572, %v1574
  %1578 = vrot.lane.b32.xlu0 %v1546, 108
  %v1579 = vpop.permute.xlu0 %1578
  %1580 = vrot.lane.b32.xlu0 %v1547, 108
  %v1581 = vpop.permute.xlu0 %1580
  %v1582 = vsel %vm145, %v1579, %v1581
  %1585 = vrot.lane.b32.xlu0 %v1538, 96
  %v1586 = vpop.permute.xlu0 %1585
  %1587 = vrot.lane.b32.xlu0 %v1540, 96
  %v1588 = vpop.permute.xlu0 %1587
  %vm1589 = vcmask 785408
  %v1590 = vsel %vm1589, %v1586, %v1588
  %1593 = vrot.lane.b32.xlu0 %v1546, 94
  %v1594 = vpop.permute.xlu0 %1593
  %1595 = vrot.lane.b32.xlu0 %v1547, 94
  %v1596 = vpop.permute.xlu0 %1595
  %vm1597 = vcmask 769024
  %v1598 = vsel %vm1597, %v1594, %v1596
  %1601 = vrot.lane.b32.xlu0 %v1538, 92
  %v1602 = vpop.permute.xlu0 %1601
  %1603 = vrot.lane.b32.xlu0 %v1540, 92
  %v1604 = vpop.permute.xlu0 %1603
  %v1605 = vsel %vm168, %v1602, %v1604
  %v1606 = vsel %vm220, %v1538, %v1552
  %v1607 = vsel %vm220, %v1540, %v1551
  %v1608 = vsel %vm220, %v1560, %v1568
  %v1609 = vsel %vm220, %v1558, %v1566
  %v1610 = vsel %vm220, %v1575, %v1582
  %v1611 = vsel %vm220, %v1574, %v1581
  %v1612 = vsel %vm220, %v1590, %v1598
  %v1613 = vsel %vm220, %v1588, %v1596
  %1622 = vrot.lane.b32.xlu0 %v1606, 56
  %v1623 = vpop.permute.xlu0 %1622
  %1624 = vrot.lane.b32.xlu0 %v1607, 56
  %v1625 = vpop.permute.xlu0 %1624
  %1626 = vrot.lane.b32.xlu0 %v1608, 56
  %v1627 = vpop.permute.xlu0 %1626
  %1628 = vrot.lane.b32.xlu0 %v1609, 56
  %v1629 = vpop.permute.xlu0 %1628
  %1630 = vrot.lane.b32.xlu0 %v1610, 56
  %v1631 = vpop.permute.xlu0 %1630
  %1632 = vrot.lane.b32.xlu0 %v1611, 56
  %v1633 = vpop.permute.xlu0 %1632
  %1634 = vrot.lane.b32.xlu0 %v1612, 56
  %v1635 = vpop.permute.xlu0 %1634
  %1636 = vrot.lane.b32.xlu0 %v1613, 56
  %v1637 = vpop.permute.xlu0 %1636
  %1638 = vrot.lane.b32.xlu0 %v1605, 56
  %v1639 = vpop.permute.xlu0 %1638
  %1640 = vrot.lane.b32.xlu0 %v1604, 56
  %v1641 = vpop.permute.xlu0 %1640
  %vm1642 = vcmask 457728
  %v1643 = vsel %vm1642, %v1623, %v1625
  %v1644 = vsel %vm1642, %v1627, %v1629
  %v1645 = vsel %vm1642, %v1631, %v1633
  %v1646 = vsel %vm1642, %v1635, %v1637
  %v1647 = vsel %vm1642, %v1639, %v1641
  %v1653 = vsel %vm241, %v34, 0
  %v1655 = vsel %vm220, %v1647, 0
  %1657 = vmatprep.subr.mxu0 0.0
  %1658 = vmatpush1.msra.mxu0 0.0
  %1659 = vmatprep.subr.mxu0 0.0
  %1660 = vmatpush1.msra.mxu0 0.0
  %1661 = vmatprep.subr.mxu0 0.0
  %1662 = vmatpush1.msra.mxu0 0.0
  %1663 = vmatprep.subr.mxu0 0.0
  %1664 = vmatpush1.msra.mxu0 0.0
  %1665 = vmatprep.subr.mxu0 0.0
  %1666 = vmatpush1.msra.mxu0 0.0
  %1667 = vmatprep.subr.mxu0 0.0
  %1668 = vmatpush1.msra.mxu0 0.0
  %1669 = vmatprep.subr.mxu0 0.0
  %1670 = vmatpush1.msra.mxu0 0.0
  %1671 = vmatprep.subr.mxu0 0.0
  %1672 = vmatpush1.msra.mxu0 0.0
  %1673 = vmatprep.subr.mxu0 0.0
  %1674 = vmatpush1.msra.mxu0 0.0
  %1675 = vmatprep.subr.mxu0 0.0
  %1676 = vmatpush1.msra.mxu0 0.0
  %1677 = vmatprep.subr.mxu0 0.0
  %1678 = vmatpush1.msra.mxu0 0.0
  %1679 = vmatprep.subr.mxu0 0.0
  %1680 = vmatpush1.msra.mxu0 %v1655
  %1681 = vmatprep.subr.mxu0 0.0
  %1682 = vmatpush1.msra.mxu0 %v1646
  %1683 = vmatprep.subr.mxu0 0.0
  %1684 = vmatpush1.msra.mxu0 %v1645
  %1685 = vmatprep.subr.mxu0 0.0
  %1686 = vmatpush1.msra.mxu0 %v1644
  %1687 = vmatprep.subr.mxu0 0.0
  %1688 = vmatpush1.msra.mxu0 %v1643
  %1689 = vmatprep.subr.mxu0 0.0
  %1690 = vmatpush2.msra.mxu0 0.0
  %1691 = vmatprep.subr.mxu0 0.0
  %1692 = vmatpush2.msra.mxu0 0.0
  %1693 = vmatprep.subr.mxu0 0.0
  %1694 = vmatpush2.msra.mxu0 0.0
  %1695 = vmatprep.subr.mxu0 0.0
  %1696 = vmatpush2.msra.mxu0 0.0
  %1697 = vmatprep.subr.mxu0 0.0
  %1698 = vmatpush2.msra.mxu0 0.0
  %1699 = vmatprep.subr.mxu0 0.0
  %1700 = vmatpush2.msra.mxu0 0.0
  %1701 = vmatprep.subr.mxu0 0.0
  %1702 = vmatpush2.msra.mxu0 0.0
  %1703 = vmatprep.subr.mxu0 0.0
  %1704 = vmatpush2.msra.mxu0 0.0
  %1705 = vmatprep.subr.mxu0 0.0
  %1706 = vmatpush2.msra.mxu0 0.0
  %1707 = vmatprep.subr.mxu0 0.0
  %1708 = vmatpush2.msra.mxu0 0.0
  %1709 = vmatprep.subr.mxu0 0.0
  %1710 = vmatpush2.msra.mxu0 0.0
  %1711 = vmatprep.subr.mxu0 0.0
  %1712 = vmatpush2.msra.mxu0 0.0
  %1713 = vmatprep.subr.mxu0 0.0
  %1714 = vmatpush2.msra.mxu0 0.0
  %1715 = vmatprep.subr.mxu0 0.0
  %1716 = vmatpush2.msra.mxu0 0.0
  %1717 = vmatprep.subr.mxu0 0.0
  %1718 = vmatpush2.msra.mxu0 0.0
  %1719 = vmatprep.subr.mxu0 0.0
  %1720 = vmatpush2.msra.mxu0 0.0
  %1721 = vmatprep.mubr.f32.mxu0 0.0
  %1722 = vmatmul.mubr.f32.gmra.mxu0 %v1653
  %v1723 = vpop.f32.mrf.mxu0
  %v1724 = vadd.f32 0.0, %v1723
  %v1725 = vpop.f32.mrf.mxu0
  %1726 = vdwg.mxu0
  %v1727 = vlaneseq
  %v1728 = vshrl.u32 %v1727, 7
  %v1729 = vsub.s32 2, %v1728
  %v1730 = vrot.slane %v37, %v1729
  %v1731 = vmul.f32 %v1724, %v1730
  %vm1732 = vcmask 748544
  %v1733 = vsel %vm1732, %v1731, 0.0
  %1734 = vadd.xlane.f32.xlu0 %v1733
  %v1735 = vpop.xlane.xlu0 %1734
  %v1736 = vmul.f32 %v1735, 0.03125
  %v1737 = vmul.f32 %v1731, %v1724
  %v1738 = vsel %vm1732, %v1737, 0.0
  %1739 = vadd.xlane.f32.xlu0 %v1738
  %v1740 = vpop.xlane.xlu0 %1739
  %v1741 = vmul.f32 %v1740, 0.03125
  %v1742 = vmul.f32 %v1736, %v1736
  %v1743 = vsub.f32 %v1741, %v1742
  %v1744 = vadd.f32 %v1743, 1e-05
  %v1745 = vrsqrt.pop %v1744
  %v1746 = vmul.f32 %v36, %v1745
  %1748 = vset.pattern.permute.xlu0 2
  %1749 = vperm.xlu0 %1748, %v1746
  %v1750 = vpop.permute.xlu0 %1749
  %v1752 = vmul.f32 %v1724, %v1750
  %v1753 = vmul.f32 %v1736, %v1746
  %1755 = vrot.lane.b32.xlu0 %v1753, 6
  %v1756 = vpop.permute.xlu0 %1755
  %v1758 = vsub.f32 %v36, %v1756
  %1760 = vset.pattern.permute.xlu0 8
  %1761 = vperm.xlu0 %1760, %v1758
  %v1762 = vpop.permute.xlu0 %1761
  %v1764 = vadd.f32 %v1752, %v1762
  %v1765 = vpack.c.bf16 %v1764, %v1764
  %v1766 = vld [vmem:[%s6] sm:$0xf]
  %v1767 = vld [vmem:[%s6 + $0x4] sm:$0xf]
  %v1768 = vld [vmem:[%s6 + $0x8] sm:$0xf]
  %v1769 = vld [vmem:[%s6 + $0xc] sm:$0xf]
  %v1770 = vld [vmem:[%s6 + $0x10] sm:$0xf]
  %v1771 = vld [vmem:[%s6 + $0x14] sm:$0xf]
  %v1772 = vld [vmem:[%s6 + $0x18] sm:$0xf]
  %v1773 = vld [vmem:[%s6 + $0x1c] sm:$0xf]
  %v1774 = vld [vmem:[%s6 + $0x20] sm:$0xf]
  %v1775 = vld [vmem:[%s6 + $0x24] sm:$0xf]
  %v1776 = vld [vmem:[%s6 + $0x28] sm:$0xf]
  %v1777 = vld [vmem:[%s6 + $0x2c] sm:$0x3]
  %v1790 = vunpack.c.l.b16 %v1766
  %v1791 = vunpack.c.l.b16 %v1767
  %v1792 = vunpack.c.l.b16 %v1768
  %v1793 = vunpack.c.l.b16 %v1769
  %v1794 = vunpack.c.l.b16 %v1770
  %v1795 = vunpack.c.l.b16 %v1771
  %v1796 = vunpack.c.l.b16 %v1772
  %v1797 = vunpack.c.l.b16 %v1773
  %v1798 = vunpack.c.l.b16 %v1774
  %v1799 = vunpack.c.l.b16 %v1775
  %v1800 = vunpack.c.l.b16 %v1776
  %v1801 = vunpack.c.l.b16 %v1777
  %v1802 = vpack.c.b16 %v1791, %v1790
  %v1803 = vpack.c.b16 %v1793, %v1792
  %v1804 = vpack.c.b16 %v1795, %v1794
  %v1805 = vpack.c.b16 %v1797, %v1796
  %v1806 = vpack.c.b16 %v1799, %v1798
  %v1807 = vpack.c.b16 %v1801, %v1800
  %v1814 = vsel %vm168, %v1765, 0
  %vm1816 = vcmask 1045504
  %v1818 = vsel %vm1816, %v1807, 0
  %1820 = vmatprep.subr.bf16.mxu0 0
  %1821 = vmatpush1.bf16.msra.mxu0 0
  %1822 = vmatprep.subr.bf16.mxu0 0
  %1823 = vmatpush1.bf16.msra.mxu0 0
  %1824 = vmatprep.subr.bf16.mxu0 0
  %1825 = vmatpush1.bf16.msra.mxu0 %v1818
  %1826 = vmatprep.subr.bf16.mxu0 0
  %1827 = vmatpush1.bf16.msra.mxu0 %v1806
  %1828 = vmatprep.subr.bf16.mxu0 0
  %1829 = vmatpush1.bf16.msra.mxu0 %v1805
  %1830 = vmatprep.subr.bf16.mxu0 0
  %1831 = vmatpush1.bf16.msra.mxu0 %v1804
  %1832 = vmatprep.subr.bf16.mxu0 0
  %1833 = vmatpush1.bf16.msra.mxu0 %v1803
  %1834 = vmatprep.subr.bf16.mxu0 0
  %1835 = vmatpush1.bf16.msra.mxu0 %v1802
  %1836 = vmatprep.subr.bf16.mxu0 0
  %1837 = vmatpush2.bf16.msra.mxu0 0
  %1838 = vmatprep.subr.bf16.mxu0 0
  %1839 = vmatpush2.bf16.msra.mxu0 0
  %1840 = vmatprep.subr.bf16.mxu0 0
  %1841 = vmatpush2.bf16.msra.mxu0 0
  %1842 = vmatprep.subr.bf16.mxu0 0
  %1843 = vmatpush2.bf16.msra.mxu0 0
  %1844 = vmatprep.subr.bf16.mxu0 0
  %1845 = vmatpush2.bf16.msra.mxu0 0
  %1846 = vmatprep.subr.bf16.mxu0 0
  %1847 = vmatpush2.bf16.msra.mxu0 0
  %1848 = vmatprep.subr.bf16.mxu0 0
  %1849 = vmatpush2.bf16.msra.mxu0 0
  %1850 = vmatprep.subr.bf16.mxu0 0
  %1851 = vmatpush2.bf16.msra.mxu0 0
  %1852 = vmatprep.mubr.bf16.mxu0 0
  %1853 = vmatmul.mubr.bf16.gmra.mxu0 %v1814
  %v1854 = vpop.f32.mrf.mxu0
  %v1855 = vadd.f32 0.0, %v1854
  %v1856 = vpop.f32.mrf.mxu0
  %v1857 = vpop.f32.mrf.mxu0
  %v1858 = vpop.f32.mrf.mxu0
  %1859 = vdwg.mxu0
  %v1860 = vadd.f32 %v1538, %v1855
  %v1862 = vrot.slane %v1860, 4
  %1863 = vrot.lane.b32.xlu0 %v1862, 127
  %v1864 = vpop.permute.xlu0 %1863
  %1866 = vrot.lane.b32.xlu0 %v1860, 126
  %v1867 = vpop.permute.xlu0 %1866
  %1869 = vrot.lane.b32.xlu0 %v1862, 122
  %v1870 = vpop.permute.xlu0 %1869
  %1872 = vrot.lane.b32.xlu0 %v1860, 121
  %v1873 = vpop.permute.xlu0 %1872
  %1875 = vrot.lane.b32.xlu0 %v1862, 120
  %v1876 = vpop.permute.xlu0 %1875
  %1878 = vrot.lane.b32.xlu0 %v1860, 116
  %v1879 = vpop.permute.xlu0 %1878
  %1881 = vrot.lane.b32.xlu0 %v1862, 115
  %v1882 = vpop.permute.xlu0 %1881
  %1884 = vrot.lane.b32.xlu0 %v1860, 114
  %v1885 = vpop.permute.xlu0 %1884
  %v1886 = vsel %vm220, %v1860, %v1864
  %v1887 = vsel %vm220, %v1867, %v1870
  %v1888 = vsel %vm220, %v1873, %v1876
  %v1889 = vsel %vm220, %v1879, %v1882
  %v1890 = vrot.slane %v34, 4
  %v1891 = vsel %vm241, %v1890, 0
  %v1893 = vsel %vm220, %v1885, 0
  %1895 = vmatprep.subr.mxu0 0.0
  %1896 = vmatpush1.msra.mxu0 0.0
  %1897 = vmatprep.subr.mxu0 0.0
  %1898 = vmatpush1.msra.mxu0 0.0
  %1899 = vmatprep.subr.mxu0 0.0
  %1900 = vmatpush1.msra.mxu0 0.0
  %1901 = vmatprep.subr.mxu0 0.0
  %1902 = vmatpush1.msra.mxu0 0.0
  %1903 = vmatprep.subr.mxu0 0.0
  %1904 = vmatpush1.msra.mxu0 0.0
  %1905 = vmatprep.subr.mxu0 0.0
  %1906 = vmatpush1.msra.mxu0 0.0
  %1907 = vmatprep.subr.mxu0 0.0
  %1908 = vmatpush1.msra.mxu0 0.0
  %1909 = vmatprep.subr.mxu0 0.0
  %1910 = vmatpush1.msra.mxu0 0.0
  %1911 = vmatprep.subr.mxu0 0.0
  %1912 = vmatpush1.msra.mxu0 0.0
  %1913 = vmatprep.subr.mxu0 0.0
  %1914 = vmatpush1.msra.mxu0 0.0
  %1915 = vmatprep.subr.mxu0 0.0
  %1916 = vmatpush1.msra.mxu0 0.0
  %1917 = vmatprep.subr.mxu0 0.0
  %1918 = vmatpush1.msra.mxu0 %v1893
  %1919 = vmatprep.subr.mxu0 0.0
  %1920 = vmatpush1.msra.mxu0 %v1889
  %1921 = vmatprep.subr.mxu0 0.0
  %1922 = vmatpush1.msra.mxu0 %v1888
  %1923 = vmatprep.subr.mxu0 0.0
  %1924 = vmatpush1.msra.mxu0 %v1887
  %1925 = vmatprep.subr.mxu0 0.0
  %1926 = vmatpush1.msra.mxu0 %v1886
  %1927 = vmatprep.subr.mxu0 0.0
  %1928 = vmatpush2.msra.mxu0 0.0
  %1929 = vmatprep.subr.mxu0 0.0
  %1930 = vmatpush2.msra.mxu0 0.0
  %1931 = vmatprep.subr.mxu0 0.0
  %1932 = vmatpush2.msra.mxu0 0.0
  %1933 = vmatprep.subr.mxu0 0.0
  %1934 = vmatpush2.msra.mxu0 0.0
  %1935 = vmatprep.subr.mxu0 0.0
  %1936 = vmatpush2.msra.mxu0 0.0
  %1937 = vmatprep.subr.mxu0 0.0
  %1938 = vmatpush2.msra.mxu0 0.0
  %1939 = vmatprep.subr.mxu0 0.0
  %1940 = vmatpush2.msra.mxu0 0.0
  %1941 = vmatprep.subr.mxu0 0.0
  %1942 = vmatpush2.msra.mxu0 0.0
  %1943 = vmatprep.subr.mxu0 0.0
  %1944 = vmatpush2.msra.mxu0 0.0
  %1945 = vmatprep.subr.mxu0 0.0
  %1946 = vmatpush2.msra.mxu0 0.0
  %1947 = vmatprep.subr.mxu0 0.0
  %1948 = vmatpush2.msra.mxu0 0.0
  %1949 = vmatprep.subr.mxu0 0.0
  %1950 = vmatpush2.msra.mxu0 0.0
  %1951 = vmatprep.subr.mxu0 0.0
  %1952 = vmatpush2.msra.mxu0 0.0
  %1953 = vmatprep.subr.mxu0 0.0
  %1954 = vmatpush2.msra.mxu0 0.0
  %1955 = vmatprep.subr.mxu0 0.0
  %1956 = vmatpush2.msra.mxu0 0.0
  %1957 = vmatprep.subr.mxu0 0.0
  %1958 = vmatpush2.msra.mxu0 0.0
  %1959 = vmatprep.mubr.f32.mxu0 0.0
  %1960 = vmatmul.mubr.f32.gmra.mxu0 %v1891
  %v1961 = vpop.f32.mrf.mxu0
  %v1962 = vadd.f32 0.0, %v1961
  %v1963 = vpop.f32.mrf.mxu0
  %1964 = vdwg.mxu0
  %v1965 = vlaneseq
  %v1966 = vshrl.u32 %v1965, 7
  %v1967 = vsub.s32 3, %v1966
  %v1968 = vrot.slane %v37, %v1967
  %v1969 = vmul.f32 %v1962, %v1968
  %vm1970 = vcmask 470016
  %v1971 = vsel %vm1970, %v1969, 0.0
  %1972 = vadd.xlane.f32.xlu0 %v1971
  %v1973 = vpop.xlane.xlu0 %1972
  %v1974 = vmul.f32 %v1973, 0.03125
  %v1975 = vmul.f32 %v1969, %v1962
  %v1976 = vsel %vm1970, %v1975, 0.0
  %1977 = vadd.xlane.f32.xlu0 %v1976
  %v1978 = vpop.xlane.xlu0 %1977
  %v1979 = vmul.f32 %v1978, 0.03125
  %v1980 = vmul.f32 %v1974, %v1974
  %v1981 = vsub.f32 %v1979, %v1980
  %v1982 = vadd.f32 %v1981, 1e-05
  %v1983 = vrsqrt.pop %v1982
  %v1984 = vmul.f32 %v36, %v1983
  %1986 = vset.pattern.permute.xlu0 3
  %1987 = vperm.xlu0 %1986, %v1984
  %v1988 = vpop.permute.xlu0 %1987
  %v1990 = vmul.f32 %v1962, %v1988
  %v1991 = vmul.f32 %v1974, %v1984
  %1993 = vrot.lane.b32.xlu0 %v1991, 6
  %v1994 = vpop.permute.xlu0 %1993
  %v1996 = vsub.f32 %v36, %v1994
  %1998 = vset.pattern.permute.xlu0 9
  %1999 = vperm.xlu0 %1998, %v1996
  %v2000 = vpop.permute.xlu0 %1999
  %v2002 = vadd.f32 %v1990, %v2000
  %v2003 = vpack.c.bf16 %v2002, %v2002
  %v2004 = vld [vmem:[%s7] sm:$0xff]
  %v2005 = vld [vmem:[%s7 + $0x8] sm:$0xff]
  %v2006 = vld [vmem:[%s7 + $0x10] sm:$0xff]
  %v2007 = vld [vmem:[%s7 + $0x18] sm:$0xff]
  %v2008 = vld [vmem:[%s7 + $0x20] sm:$0xff]
  %v2009 = vld [vmem:[%s7 + $0x28] sm:$0xff]
  %v2010 = vld [vmem:[%s7 + $0x30] sm:$0xff]
  %v2011 = vld [vmem:[%s7 + $0x38] sm:$0x11]
  %v2020 = vunpack.c.l.b16 %v2004
  %v2021 = vunpack.c.h.b16 %v2004
  %v2022 = vunpack.c.l.b16 %v2005
  %v2023 = vunpack.c.h.b16 %v2005
  %v2024 = vunpack.c.l.b16 %v2006
  %v2025 = vunpack.c.h.b16 %v2006
  %v2026 = vunpack.c.l.b16 %v2007
  %v2027 = vunpack.c.h.b16 %v2007
  %v2028 = vunpack.c.l.b16 %v2008
  %v2029 = vunpack.c.h.b16 %v2008
  %v2030 = vunpack.c.l.b16 %v2009
  %v2031 = vunpack.c.h.b16 %v2009
  %v2032 = vunpack.c.l.b16 %v2010
  %v2033 = vunpack.c.h.b16 %v2010
  %v2034 = vunpack.c.l.b16 %v2011
  %v2035 = vunpack.c.h.b16 %v2011
  %v2036 = vpack.c.b16 %v2022, %v2020
  %v2037 = vpack.c.b16 %v2023, %v2021
  %v2038 = vpack.c.b16 %v2026, %v2024
  %v2039 = vpack.c.b16 %v2027, %v2025
  %v2040 = vpack.c.b16 %v2030, %v2028
  %v2041 = vpack.c.b16 %v2031, %v2029
  %v2042 = vpack.c.b16 %v2034, %v2032
  %v2043 = vpack.c.b16 %v2035, %v2033
  %vm2050 = vcmask 474112
  %v2052 = vsel %vm2050, %v2003, 0
  %vm2054 = vcmask 1044480
  %v2056 = vsel %vm2054, %v2042, 0
  %v2059 = vsel %vm2054, %v2043, 0
  %2061 = vmatprep.subr.bf16.mxu0 0
  %2062 = vmatpush1.bf16.msra.mxu0 0
  %2063 = vmatprep.subr.bf16.mxu0 0
  %2064 = vmatpush1.bf16.msra.mxu0 0
  %2065 = vmatprep.subr.bf16.mxu0 0
  %2066 = vmatpush1.bf16.msra.mxu0 0
  %2067 = vmatprep.subr.bf16.mxu0 0
  %2068 = vmatpush1.bf16.msra.mxu0 0
  %2069 = vmatprep.subr.bf16.mxu0 %v2059
  %2070 = vmatpush1.bf16.msra.mxu0 %v2056
  %2071 = vmatprep.subr.bf16.mxu0 %v2041
  %2072 = vmatpush1.bf16.msra.mxu0 %v2040
  %2073 = vmatprep.subr.bf16.mxu0 %v2039
  %2074 = vmatpush1.bf16.msra.mxu0 %v2038
  %2075 = vmatprep.subr.bf16.mxu0 %v2037
  %2076 = vmatpush1.bf16.msra.mxu0 %v2036
  %2077 = vmatprep.subr.bf16.mxu0 0
  %2078 = vmatpush2.bf16.msra.mxu0 0
  %2079 = vmatprep.subr.bf16.mxu0 0
  %2080 = vmatpush2.bf16.msra.mxu0 0
  %2081 = vmatprep.subr.bf16.mxu0 0
  %2082 = vmatpush2.bf16.msra.mxu0 0
  %2083 = vmatprep.subr.bf16.mxu0 0
  %2084 = vmatpush2.bf16.msra.mxu0 0
  %2085 = vmatprep.subr.bf16.mxu0 0
  %2086 = vmatpush2.bf16.msra.mxu0 0
  %2087 = vmatprep.subr.bf16.mxu0 0
  %2088 = vmatpush2.bf16.msra.mxu0 0
  %2089 = vmatprep.subr.bf16.mxu0 0
  %2090 = vmatpush2.bf16.msra.mxu0 0
  %2091 = vmatprep.subr.bf16.mxu0 0
  %2092 = vmatpush2.bf16.msra.mxu0 0
  %2093 = vmatprep.mubr.bf16.mxu0 0
  %2094 = vmatmul.mubr.bf16.gmra.mxu0 %v2052
  %v2095 = vpop.f32.mrf.mxu0
  %v2096 = vadd.f32 0.0, %v2095
  %v2097 = vpop.f32.mrf.mxu0
  %v2098 = vadd.f32 0.0, %v2097
  %v2099 = vpop.f32.mrf.mxu0
  %v2100 = vpop.f32.mrf.mxu0
  %2101 = vdwg.mxu0
  %v2102 = vadd.f32 %v1148, %v2096
  %v2103 = vadd.f32 %v1150, %v2098
  %v2106 = vrot.slane %v2102, 4
  %v2107 = vrot.slane %v2103, 4
  %2108 = vrot.lane.b32.xlu0 %v2106, 127
  %v2109 = vpop.permute.xlu0 %2108
  %2110 = vrot.lane.b32.xlu0 %v2107, 127
  %v2111 = vpop.permute.xlu0 %2110
  %v2112 = vsel %vm65, %v2109, %v2111
  %2115 = vrot.lane.b32.xlu0 %v2102, 126
  %v2116 = vpop.permute.xlu0 %2115
  %2117 = vrot.lane.b32.xlu0 %v2103, 126
  %v2118 = vpop.permute.xlu0 %2117
  %v2119 = vsel %vm85, %v2116, %v2118
  %2122 = vrot.lane.b32.xlu0 %v2106, 118
  %v2123 = vpop.permute.xlu0 %2122
  %2124 = vrot.lane.b32.xlu0 %v2107, 118
  %v2125 = vpop.permute.xlu0 %2124
  %v2126 = vsel %vm1176, %v2123, %v2125
  %2129 = vrot.lane.b32.xlu0 %v2102, 117
  %v2130 = vpop.permute.xlu0 %2129
  %2131 = vrot.lane.b32.xlu0 %v2103, 117
  %v2132 = vpop.permute.xlu0 %2131
  %v2133 = vsel %vm1184, %v2130, %v2132
  %2136 = vrot.lane.b32.xlu0 %v2106, 116
  %v2137 = vpop.permute.xlu0 %2136
  %2138 = vrot.lane.b32.xlu0 %v2107, 116
  %v2139 = vpop.permute.xlu0 %2138
  %v2140 = vsel %vm1192, %v2137, %v2139
  %2143 = vrot.lane.b32.xlu0 %v2102, 108
  %v2144 = vpop.permute.xlu0 %2143
  %2145 = vrot.lane.b32.xlu0 %v2103, 108
  %v2146 = vpop.permute.xlu0 %2145
  %v2147 = vsel %vm145, %v2144, %v2146
  %2150 = vrot.lane.b32.xlu0 %v2106, 107
  %v2151 = vpop.permute.xlu0 %2150
  %2152 = vrot.lane.b32.xlu0 %v2107, 107
  %v2153 = vpop.permute.xlu0 %2152
  %v2154 = vsel %vm1207, %v2151, %v2153
  %2157 = vrot.lane.b32.xlu0 %v2102, 106
  %v2158 = vpop.permute.xlu0 %2157
  %2159 = vrot.lane.b32.xlu0 %v2103, 106
  %v2160 = vpop.permute.xlu0 %2159
  %v2161 = vsel %vm1215, %v2158, %v2160
  %v2162 = vsel %vm220, %v2102, %v2112
  %v2163 = vsel %vm220, %v2103, %v2111
  %v2164 = vsel %vm220, %v2119, %v2126
  %v2165 = vsel %vm220, %v2118, %v2125
  %v2166 = vsel %vm220, %v2133, %v2140
  %v2167 = vsel %vm220, %v2132, %v2139
  %v2168 = vsel %vm220, %v2147, %v2154
  %v2169 = vsel %vm220, %v2146, %v2153
  %v2171 = vsel %vm241, %v35, 0
  %v2173 = vsel %vm220, %v2161, 0
  %v2175 = vsel %vm220, %v2160, 0
  %2177 = vmatprep.subr.mxu0 0.0
  %2178 = vmatpush1.msra.mxu0 0.0
  %2179 = vmatprep.subr.mxu0 0.0
  %2180 = vmatpush1.msra.mxu0 0.0
  %2181 = vmatprep.subr.mxu0 0.0
  %2182 = vmatpush1.msra.mxu0 0.0
  %2183 = vmatprep.subr.mxu0 0.0
  %2184 = vmatpush1.msra.mxu0 0.0
  %2185 = vmatprep.subr.mxu0 0.0
  %2186 = vmatpush1.msra.mxu0 0.0
  %2187 = vmatprep.subr.mxu0 0.0
  %2188 = vmatpush1.msra.mxu0 0.0
  %2189 = vmatprep.subr.mxu0 0.0
  %2190 = vmatpush1.msra.mxu0 0.0
  %2191 = vmatprep.subr.mxu0 0.0
  %2192 = vmatpush1.msra.mxu0 0.0
  %2193 = vmatprep.subr.mxu0 0.0
  %2194 = vmatpush1.msra.mxu0 0.0
  %2195 = vmatprep.subr.mxu0 0.0
  %2196 = vmatpush1.msra.mxu0 0.0
  %2197 = vmatprep.subr.mxu0 0.0
  %2198 = vmatpush1.msra.mxu0 0.0
  %2199 = vmatprep.subr.mxu0 %v2175
  %2200 = vmatpush1.msra.mxu0 %v2173
  %2201 = vmatprep.subr.mxu0 %v2169
  %2202 = vmatpush1.msra.mxu0 %v2168
  %2203 = vmatprep.subr.mxu0 %v2167
  %2204 = vmatpush1.msra.mxu0 %v2166
  %2205 = vmatprep.subr.mxu0 %v2165
  %2206 = vmatpush1.msra.mxu0 %v2164
  %2207 = vmatprep.subr.mxu0 %v2163
  %2208 = vmatpush1.msra.mxu0 %v2162
  %2209 = vmatprep.subr.mxu0 0.0
  %2210 = vmatpush2.msra.mxu0 0.0
  %2211 = vmatprep.subr.mxu0 0.0
  %2212 = vmatpush2.msra.mxu0 0.0
  %2213 = vmatprep.subr.mxu0 0.0
  %2214 = vmatpush2.msra.mxu0 0.0
  %2215 = vmatprep.subr.mxu0 0.0
  %2216 = vmatpush2.msra.mxu0 0.0
  %2217 = vmatprep.subr.mxu0 0.0
  %2218 = vmatpush2.msra.mxu0 0.0
  %2219 = vmatprep.subr.mxu0 0.0
  %2220 = vmatpush2.msra.mxu0 0.0
  %2221 = vmatprep.subr.mxu0 0.0
  %2222 = vmatpush2.msra.mxu0 0.0
  %2223 = vmatprep.subr.mxu0 0.0
  %2224 = vmatpush2.msra.mxu0 0.0
  %2225 = vmatprep.subr.mxu0 0.0
  %2226 = vmatpush2.msra.mxu0 0.0
  %2227 = vmatprep.subr.mxu0 0.0
  %2228 = vmatpush2.msra.mxu0 0.0
  %2229 = vmatprep.subr.mxu0 0.0
  %2230 = vmatpush2.msra.mxu0 0.0
  %2231 = vmatprep.subr.mxu0 0.0
  %2232 = vmatpush2.msra.mxu0 0.0
  %2233 = vmatprep.subr.mxu0 0.0
  %2234 = vmatpush2.msra.mxu0 0.0
  %2235 = vmatprep.subr.mxu0 0.0
  %2236 = vmatpush2.msra.mxu0 0.0
  %2237 = vmatprep.subr.mxu0 0.0
  %2238 = vmatpush2.msra.mxu0 0.0
  %2239 = vmatprep.subr.mxu0 0.0
  %2240 = vmatpush2.msra.mxu0 0.0
  %2241 = vmatprep.mubr.f32.mxu0 0.0
  %2242 = vmatmul.mubr.f32.gmra.mxu0 %v2171
  %v2243 = vpop.f32.mrf.mxu0
  %v2244 = vadd.f32 0.0, %v2243
  %v2245 = vpop.f32.mrf.mxu0
  %v2246 = vadd.f32 0.0, %v2245
  %2247 = vdwg.mxu0
  %v2248 = vlaneseq
  %v2249 = vshrl.u32 %v2248, 7
  %v2250 = vsub.s32 4, %v2249
  %v2251 = vrot.slane %v37, %v2250
  %v2252 = vlaneseq
  %v2253 = vshrl.u32 %v2252, 7
  %v2254 = vsub.s32 4, %v2253
  %v2255 = vrot.slane %v38, %v2254
  %v2256 = vmul.f32 %v2244, %v2251
  %v2257 = vmul.f32 %v2246, %v2255
  %v2258 = vsel %vm220, %v2256, 0.0
  %v2259 = vsel %vm1314, %v2257, 0.0
  %v2260 = vadd.f32 %v2258, %v2259
  %2261 = vadd.xlane.f32.xlu0 %v2260
  %v2262 = vpop.xlane.xlu0 %2261
  %v2263 = vmul.f32 %v2262, 0.0078125
  %v2264 = vmul.f32 %v2256, %v2244
  %v2265 = vmul.f32 %v2257, %v2246
  %v2266 = vsel %vm220, %v2264, 0.0
  %v2267 = vsel %vm1314, %v2265, 0.0
  %v2268 = vadd.f32 %v2266, %v2267
  %2269 = vadd.xlane.f32.xlu0 %v2268
  %v2270 = vpop.xlane.xlu0 %2269
  %v2271 = vmul.f32 %v2270, 0.0078125
  %v2272 = vmul.f32 %v2263, %v2263
  %v2273 = vsub.f32 %v2271, %v2272
  %v2274 = vadd.f32 %v2273, 1e-05
  %v2275 = vrsqrt.pop %v2274
  %v2276 = vmul.f32 %v36, %v2275
  %2278 = vset.pattern.permute.xlu0 4
  %2279 = vperm.xlu0 %2278, %v2276
  %v2280 = vpop.permute.xlu0 %2279
  %v2282 = vmul.f32 %v2244, %v2280
  %v2283 = vmul.f32 %v2246, %v2280
  %v2284 = vmul.f32 %v2263, %v2276
  %2286 = vrot.lane.b32.xlu0 %v2284, 6
  %v2287 = vpop.permute.xlu0 %2286
  %v2289 = vsub.f32 %v36, %v2287
  %2291 = vset.pattern.permute.xlu0 10
  %2292 = vperm.xlu0 %2291, %v2289
  %v2293 = vpop.permute.xlu0 %2292
  %v2295 = vadd.f32 %v2282, %v2293
  %v2296 = vadd.f32 %v2283, %v2293
  %v2297 = vpack.c.bf16 %v2295, %v2295
  %v2298 = vpack.c.bf16 %v2296, %v2296
  %v2299 = vld [vmem:[%s8] sm:$0xff]
  %v2300 = vld [vmem:[%s8 + $0x8] sm:$0xff]
  %v2301 = vld [vmem:[%s8 + $0x10] sm:$0xff]
  %v2302 = vld [vmem:[%s8 + $0x18] sm:$0xff]
  %v2303 = vld [vmem:[%s8 + $0x20] sm:$0xff]
  %v2304 = vld [vmem:[%s8 + $0x28] sm:$0xff]
  %v2305 = vld [vmem:[%s8 + $0x30] sm:$0xff]
  %v2306 = vld [vmem:[%s8 + $0x38] sm:$0xff]
  %v2307 = vld [vmem:[%s8 + $0x40] sm:$0xff]
  %v2308 = vld [vmem:[%s8 + $0x48] sm:$0xff]
  %v2309 = vld [vmem:[%s8 + $0x50] sm:$0xff]
  %v2310 = vld [vmem:[%s8 + $0x58] sm:$0xff]
  %v2311 = vld [vmem:[%s8 + $0x60] sm:$0xff]
  %v2312 = vld [vmem:[%s8 + $0x68] sm:$0xff]
  %v2313 = vld [vmem:[%s8 + $0x70] sm:$0xff]
  %v2314 = vld [vmem:[%s8 + $0x78] sm:$0xff]
  %v2315 = vld [vmem:[%s8 + $0x80] sm:$0xff]
  %v2316 = vld [vmem:[%s8 + $0x88] sm:$0xff]
  %v2317 = vld [vmem:[%s8 + $0x90] sm:$0xff]
  %v2318 = vld [vmem:[%s8 + $0x98] sm:$0xff]
  %v2319 = vld [vmem:[%s8 + $0xa0] sm:$0xff]
  %v2320 = vld [vmem:[%s8 + $0xa8] sm:$0xff]
  %v2321 = vld [vmem:[%s8 + $0xb0] sm:$0xff]
  %v2322 = vld [vmem:[%s8 + $0xb8] sm:$0xff]
  %v2323 = vld [vmem:[%s8 + $0xc0] sm:$0xff]
  %v2324 = vld [vmem:[%s8 + $0xc8] sm:$0xff]
  %v2325 = vld [vmem:[%s8 + $0xd0] sm:$0xff]
  %v2326 = vld [vmem:[%s8 + $0xd8] sm:$0xff]
  %v2327 = vld [vmem:[%s8 + $0xe0] sm:$0xff]
  %v2328 = vld [vmem:[%s8 + $0xe8] sm:$0xff]
  %v2329 = vld [vmem:[%s8 + $0xf0] sm:$0xff]
  %v2330 = vld [vmem:[%s8 + $0xf8] sm:$0xff]
  %v2331 = vld [vmem:[%s8 + $0x100] sm:$0xff]
  %v2332 = vld [vmem:[%s8 + $0x108] sm:$0xff]
  %v2333 = vld [vmem:[%s8 + $0x110] sm:$0xff]
  %v2334 = vld [vmem:[%s8 + $0x118] sm:$0xff]
  %v2335 = vld [vmem:[%s8 + $0x120] sm:$0xff]
  %v2336 = vld [vmem:[%s8 + $0x128] sm:$0xff]
  %v2337 = vld [vmem:[%s8 + $0x130] sm:$0xff]
  %v2338 = vld [vmem:[%s8 + $0x138] sm:$0xff]
  %v2339 = vld [vmem:[%s8 + $0x140] sm:$0xff]
  %v2340 = vld [vmem:[%s8 + $0x148] sm:$0xff]
  %v2341 = vld [vmem:[%s8 + $0x150] sm:$0xff]
  %v2342 = vld [vmem:[%s8 + $0x158] sm:$0xff]
  %v2343 = vld [vmem:[%s8 + $0x160] sm:$0xff]
  %v2344 = vld [vmem:[%s8 + $0x168] sm:$0xff]
  %v2345 = vld [vmem:[%s8 + $0x170] sm:$0xff]
  %v2346 = vld [vmem:[%s8 + $0x178] sm:$0xff]
  %v2347 = vld [vmem:[%s8 + $0x180] sm:$0xff]
  %v2348 = vld [vmem:[%s8 + $0x188] sm:$0xff]
  %v2349 = vld [vmem:[%s8 + $0x190] sm:$0xff]
  %v2350 = vld [vmem:[%s8 + $0x198] sm:$0xff]
  %v2351 = vld [vmem:[%s8 + $0x1a0] sm:$0xff]
  %v2352 = vld [vmem:[%s8 + $0x1a8] sm:$0xff]
  %v2353 = vld [vmem:[%s8 + $0x1b0] sm:$0xff]
  %v2354 = vld [vmem:[%s8 + $0x1b8] sm:$0xff]
  %v2355 = vld [vmem:[%s8 + $0x1c0] sm:$0xff]
  %v2356 = vld [vmem:[%s8 + $0x1c8] sm:$0xff]
  %v2357 = vld [vmem:[%s8 + $0x1d0] sm:$0xff]
  %v2358 = vld [vmem:[%s8 + $0x1d8] sm:$0xff]
  %v2359 = vld [vmem:[%s8 + $0x1e0] sm:$0xff]
  %v2360 = vld [vmem:[%s8 + $0x1e8] sm:$0xff]
  %v2361 = vld [vmem:[%s8 + $0x1f0] sm:$0xff]
  %v2362 = vld [vmem:[%s8 + $0x1f8] sm:$0xff]
  %v2363 = vld [vmem:[%s8 + $0x200] sm:$0xff]
  %v2364 = vld [vmem:[%s8 + $0x208] sm:$0xff]
  %v2365 = vld [vmem:[%s8 + $0x210] sm:$0x11]
  %v2366 = vld [vmem:[%s8 + $0x218] sm:$0x11]
  %v2367 = vld [vmem:[%s8 + $0x220] sm:$0x11]
  %v2437 = vunpack.c.l.b16 %v2299
  %v2438 = vunpack.c.h.b16 %v2299
  %v2439 = vunpack.c.l.b16 %v2300
  %v2440 = vunpack.c.h.b16 %v2300
  %v2441 = vunpack.c.l.b16 %v2301
  %v2442 = vunpack.c.h.b16 %v2301
  %v2443 = vunpack.c.l.b16 %v2302
  %v2444 = vunpack.c.h.b16 %v2302
  %v2445 = vunpack.c.l.b16 %v2303
  %v2446 = vunpack.c.h.b16 %v2303
  %v2447 = vunpack.c.l.b16 %v2304
  %v2448 = vunpack.c.h.b16 %v2304
  %v2449 = vunpack.c.l.b16 %v2305
  %v2450 = vunpack.c.h.b16 %v2305
  %v2451 = vunpack.c.l.b16 %v2306
  %v2452 = vunpack.c.h.b16 %v2306
  %v2453 = vunpack.c.l.b16 %v2307
  %v2454 = vunpack.c.h.b16 %v2307
  %v2455 = vunpack.c.l.b16 %v2308
  %v2456 = vunpack.c.h.b16 %v2308
  %v2457 = vunpack.c.l.b16 %v2309
  %v2458 = vunpack.c.h.b16 %v2309
  %v2459 = vunpack.c.l.b16 %v2310
  %v2460 = vunpack.c.h.b16 %v2310
  %v2461 = vunpack.c.l.b16 %v2311
  %v2462 = vunpack.c.h.b16 %v2311
  %v2463 = vunpack.c.l.b16 %v2312
  %v2464 = vunpack.c.h.b16 %v2312
  %v2465 = vunpack.c.l.b16 %v2313
  %v2466 = vunpack.c.h.b16 %v2313
  %v2467 = vunpack.c.l.b16 %v2314
  %v2468 = vunpack.c.h.b16 %v2314
  %v2469 = vunpack.c.l.b16 %v2315
  %v2470 = vunpack.c.h.b16 %v2315
  %v2471 = vunpack.c.l.b16 %v2316
  %v2472 = vunpack.c.h.b16 %v2316
  %v2473 = vunpack.c.l.b16 %v2317
  %v2474 = vunpack.c.h.b16 %v2317
  %v2475 = vunpack.c.l.b16 %v2318
  %v2476 = vunpack.c.h.b16 %v2318
  %v2477 = vunpack.c.l.b16 %v2319
  %v2478 = vunpack.c.h.b16 %v2319
  %v2479 = vunpack.c.l.b16 %v2320
  %v2480 = vunpack.c.h.b16 %v2320
  %v2481 = vunpack.c.l.b16 %v2321
  %v2482 = vunpack.c.h.b16 %v2321
  %v2483 = vunpack.c.l.b16 %v2322
  %v2484 = vunpack.c.h.b16 %v2322
  %v2485 = vunpack.c.l.b16 %v2323
  %v2486 = vunpack.c.h.b16 %v2323
  %v2487 = vunpack.c.l.b16 %v2324
  %v2488 = vunpack.c.h.b16 %v2324
  %v2489 = vunpack.c.l.b16 %v2325
  %v2490 = vunpack.c.h.b16 %v2325
  %v2491 = vunpack.c.l.b16 %v2326
  %v2492 = vunpack.c.h.b16 %v2326
  %v2493 = vunpack.c.l.b16 %v2327
  %v2494 = vunpack.c.h.b16 %v2327
  %v2495 = vunpack.c.l.b16 %v2328
  %v2496 = vunpack.c.h.b16 %v2328
  %v2497 = vunpack.c.l.b16 %v2329
  %v2498 = vunpack.c.h.b16 %v2329
  %v2499 = vunpack.c.l.b16 %v2330
  %v2500 = vunpack.c.h.b16 %v2330
  %v2501 = vunpack.c.l.b16 %v2331
  %v2502 = vunpack.c.h.b16 %v2331
  %v2503 = vunpack.c.l.b16 %v2332
  %v2504 = vunpack.c.h.b16 %v2332
  %v2505 = vunpack.c.l.b16 %v2333
  %v2506 = vunpack.c.h.b16 %v2333
  %v2507 = vunpack.c.l.b16 %v2334
  %v2508 = vunpack.c.h.b16 %v2334
  %v2509 = vunpack.c.l.b16 %v2335
  %v2510 = vunpack.c.h.b16 %v2335
  %v2511 = vunpack.c.l.b16 %v2336
  %v2512 = vunpack.c.h.b16 %v2336
  %v2513 = vunpack.c.l.b16 %v2337
  %v2514 = vunpack.c.h.b16 %v2337
  %v2515 = vunpack.c.l.b16 %v2338
  %v2516 = vunpack.c.h.b16 %v2338
  %v2517 = vunpack.c.l.b16 %v2339
  %v2518 = vunpack.c.h.b16 %v2339
  %v2519 = vunpack.c.l.b16 %v2340
  %v2520 = vunpack.c.h.b16 %v2340
  %v2521 = vunpack.c.l.b16 %v2341
  %v2522 = vunpack.c.h.b16 %v2341
  %v2523 = vunpack.c.l.b16 %v2342
  %v2524 = vunpack.c.h.b16 %v2342
  %v2525 = vunpack.c.l.b16 %v2343
  %v2526 = vunpack.c.h.b16 %v2343
  %v2527 = vunpack.c.l.b16 %v2344
  %v2528 = vunpack.c.h.b16 %v2344
  %v2529 = vunpack.c.l.b16 %v2345
  %v2530 = vunpack.c.h.b16 %v2345
  %v2531 = vunpack.c.l.b16 %v2346
  %v2532 = vunpack.c.h.b16 %v2346
  %v2533 = vunpack.c.l.b16 %v2347
  %v2534 = vunpack.c.h.b16 %v2347
  %v2535 = vunpack.c.l.b16 %v2348
  %v2536 = vunpack.c.h.b16 %v2348
  %v2537 = vunpack.c.l.b16 %v2349
  %v2538 = vunpack.c.h.b16 %v2349
  %v2539 = vunpack.c.l.b16 %v2350
  %v2540 = vunpack.c.h.b16 %v2350
  %v2541 = vunpack.c.l.b16 %v2351
  %v2542 = vunpack.c.h.b16 %v2351
  %v2543 = vunpack.c.l.b16 %v2352
  %v2544 = vunpack.c.h.b16 %v2352
  %v2545 = vunpack.c.l.b16 %v2353
  %v2546 = vunpack.c.h.b16 %v2353
  %v2547 = vunpack.c.l.b16 %v2354
  %v2548 = vunpack.c.h.b16 %v2354
  %v2549 = vunpack.c.l.b16 %v2355
  %v2550 = vunpack.c.h.b16 %v2355
  %v2551 = vunpack.c.l.b16 %v2356
  %v2552 = vunpack.c.h.b16 %v2356
  %v2553 = vunpack.c.l.b16 %v2357
  %v2554 = vunpack.c.h.b16 %v2357
  %v2555 = vunpack.c.l.b16 %v2358
  %v2556 = vunpack.c.h.b16 %v2358
  %v2557 = vunpack.c.l.b16 %v2359
  %v2558 = vunpack.c.h.b16 %v2359
  %v2559 = vunpack.c.l.b16 %v2360
  %v2560 = vunpack.c.h.b16 %v2360
  %v2561 = vunpack.c.l.b16 %v2361
  %v2562 = vunpack.c.h.b16 %v2361
  %v2563 = vunpack.c.l.b16 %v2362
  %v2564 = vunpack.c.h.b16 %v2362
  %v2565 = vunpack.c.l.b16 %v2363
  %v2566 = vunpack.c.h.b16 %v2363
  %v2567 = vunpack.c.l.b16 %v2364
  %v2568 = vunpack.c.h.b16 %v2364
  %v2569 = vunpack.c.l.b16 %v2365
  %v2570 = vunpack.c.h.b16 %v2365
  %v2571 = vunpack.c.l.b16 %v2366
  %v2572 = vunpack.c.h.b16 %v2366
  %v2573 = vunpack.c.l.b16 %v2367
  %v2574 = vunpack.c.h.b16 %v2367
  %v2575 = vpack.c.b16 %v2443, %v2437
  %v2576 = vpack.c.b16 %v2444, %v2438
  %v2577 = vpack.c.b16 %v2445, %v2439
  %v2578 = vpack.c.b16 %v2446, %v2440
  %v2579 = vpack.c.b16 %v2447, %v2441
  %v2580 = vpack.c.b16 %v2448, %v2442
  %v2581 = vpack.c.b16 %v2455, %v2449
  %v2582 = vpack.c.b16 %v2456, %v2450
  %v2583 = vpack.c.b16 %v2457, %v2451
  %v2584 = vpack.c.b16 %v2458, %v2452
  %v2585 = vpack.c.b16 %v2459, %v2453
  %v2586 = vpack.c.b16 %v2460, %v2454
  %v2587 = vpack.c.b16 %v2467, %v2461
  %v2588 = vpack.c.b16 %v2468, %v2462
  %v2589 = vpack.c.b16 %v2469, %v2463
  %v2590 = vpack.c.b16 %v2470, %v2464
  %v2591 = vpack.c.b16 %v2471, %v2465
  %v2592 = vpack.c.b16 %v2472, %v2466
  %v2593 = vpack.c.b16 %v2479, %v2473
  %v2594 = vpack.c.b16 %v2480, %v2474
  %v2595 = vpack.c.b16 %v2481, %v2475
  %v2596 = vpack.c.b16 %v2482, %v2476
  %v2597 = vpack.c.b16 %v2483, %v2477
  %v2598 = vpack.c.b16 %v2484, %v2478
  %v2599 = vpack.c.b16 %v2491, %v2485
  %v2600 = vpack.c.b16 %v2492, %v2486
  %v2601 = vpack.c.b16 %v2493, %v2487
  %v2602 = vpack.c.b16 %v2494, %v2488
  %v2603 = vpack.c.b16 %v2495, %v2489
  %v2604 = vpack.c.b16 %v2496, %v2490
  %v2605 = vpack.c.b16 %v2503, %v2497
  %v2606 = vpack.c.b16 %v2504, %v2498
  %v2607 = vpack.c.b16 %v2505, %v2499
  %v2608 = vpack.c.b16 %v2506, %v2500
  %v2609 = vpack.c.b16 %v2507, %v2501
  %v2610 = vpack.c.b16 %v2508, %v2502
  %v2611 = vpack.c.b16 %v2515, %v2509
  %v2612 = vpack.c.b16 %v2516, %v2510
  %v2613 = vpack.c.b16 %v2517, %v2511
  %v2614 = vpack.c.b16 %v2518, %v2512
  %v2615 = vpack.c.b16 %v2519, %v2513
  %v2616 = vpack.c.b16 %v2520, %v2514
  %v2617 = vpack.c.b16 %v2527, %v2521
  %v2618 = vpack.c.b16 %v2528, %v2522
  %v2619 = vpack.c.b16 %v2529, %v2523
  %v2620 = vpack.c.b16 %v2530, %v2524
  %v2621 = vpack.c.b16 %v2531, %v2525
  %v2622 = vpack.c.b16 %v2532, %v2526
  %v2623 = vpack.c.b16 %v2539, %v2533
  %v2624 = vpack.c.b16 %v2540, %v2534
  %v2625 = vpack.c.b16 %v2541, %v2535
  %v2626 = vpack.c.b16 %v2542, %v2536
  %v2627 = vpack.c.b16 %v2543, %v2537
  %v2628 = vpack.c.b16 %v2544, %v2538
  %v2629 = vpack.c.b16 %v2551, %v2545
  %v2630 = vpack.c.b16 %v2552, %v2546
  %v2631 = vpack.c.b16 %v2553, %v2547
  %v2632 = vpack.c.b16 %v2554, %v2548
  %v2633 = vpack.c.b16 %v2555, %v2549
  %v2634 = vpack.c.b16 %v2556, %v2550
  %v2635 = vpack.c.b16 %v2563, %v2557
  %v2636 = vpack.c.b16 %v2564, %v2558
  %v2637 = vpack.c.b16 %v2565, %v2559
  %v2638 = vpack.c.b16 %v2566, %v2560
  %v2639 = vpack.c.b16 %v2567, %v2561
  %v2640 = vpack.c.b16 %v2568, %v2562
  %v2641 = vpack.c.b16 %v2569, %v2569
  %v2642 = vpack.c.b16 %v2570, %v2570
  %v2643 = vpack.c.b16 %v2571, %v2571
  %v2644 = vpack.c.b16 %v2572, %v2572
  %v2645 = vpack.c.b16 %v2573, %v2573
  %v2646 = vpack.c.b16 %v2574, %v2574
  %v2714 = vsel %vm1493, %v2298, 0
  %v2717 = vsel %vm1024, %v2641, 0
  %v2720 = vsel %vm1024, %v2642, 0
  %v2723 = vsel %vm1024, %v2643, 0
  %v2726 = vsel %vm1024, %v2644, 0
  %v2729 = vsel %vm1024, %v2645, 0
  %v2732 = vsel %vm1024, %v2646, 0
  %2734 = vmatprep.subr.bf16.mxu0 %v2618
  %2735 = vmatpush1.bf16.msra.mxu0 %v2617
  %2736 = vmatprep.subr.bf16.mxu0 %v2612
  %2737 = vmatpush1.bf16.msra.mxu0 %v2611
  %2738 = vmatprep.subr.bf16.mxu0 %v2606
  %2739 = vmatpush1.bf16.msra.mxu0 %v2605
  %2740 = vmatprep.subr.bf16.mxu0 %v2600
  %2741 = vmatpush1.bf16.msra.mxu0 %v2599
  %2742 = vmatprep.subr.bf16.mxu0 %v2594
  %2743 = vmatpush1.bf16.msra.mxu0 %v2593
  %2744 = vmatprep.subr.bf16.mxu0 %v2588
  %2745 = vmatpush1.bf16.msra.mxu0 %v2587
  %2746 = vmatprep.subr.bf16.mxu0 %v2582
  %2747 = vmatpush1.bf16.msra.mxu0 %v2581
  %2748 = vmatprep.subr.bf16.mxu0 %v2576
  %2749 = vmatpush1.bf16.msra.mxu0 %v2575
  %2750 = vmatprep.subr.bf16.mxu0 0
  %2751 = vmatpush2.bf16.msra.mxu0 0
  %2752 = vmatprep.subr.bf16.mxu0 0
  %2753 = vmatpush2.bf16.msra.mxu0 0
  %2754 = vmatprep.subr.bf16.mxu0 0
  %2755 = vmatpush2.bf16.msra.mxu0 0
  %2756 = vmatprep.subr.bf16.mxu0 0
  %2757 = vmatpush2.bf16.msra.mxu0 0
  %2758 = vmatprep.subr.bf16.mxu0 %v2720
  %2759 = vmatpush2.bf16.msra.mxu0 %v2717
  %2760 = vmatprep.subr.bf16.mxu0 %v2636
  %2761 = vmatpush2.bf16.msra.mxu0 %v2635
  %2762 = vmatprep.subr.bf16.mxu0 %v2630
  %2763 = vmatpush2.bf16.msra.mxu0 %v2629
  %2764 = vmatprep.subr.bf16.mxu0 %v2624
  %2765 = vmatpush2.bf16.msra.mxu0 %v2623
  %2766 = vmatprep.mubr.bf16.mxu0 %v2714
  %2767 = vmatmul.mubr.bf16.gmra.mxu0 %v2297
  %v2768 = vpop.f32.mrf.mxu0
  %v2769 = vadd.f32 0.0, %v2768
  %v2770 = vpop.f32.mrf.mxu0
  %v2771 = vadd.f32 0.0, %v2770
  %v2772 = vpop.f32.mrf.mxu0
  %v2773 = vpop.f32.mrf.mxu0
  %2774 = vdwg.mxu0
  %2775 = vmatprep.subr.bf16.mxu0 %v2620
  %2776 = vmatpush1.bf16.msra.mxu0 %v2619
  %2777 = vmatprep.subr.bf16.mxu0 %v2614
  %2778 = vmatpush1.bf16.msra.mxu0 %v2613
  %2779 = vmatprep.subr.bf16.mxu0 %v2608
  %2780 = vmatpush1.bf16.msra.mxu0 %v2607
  %2781 = vmatprep.subr.bf16.mxu0 %v2602
  %2782 = vmatpush1.bf16.msra.mxu0 %v2601
  %2783 = vmatprep.subr.bf16.mxu0 %v2596
  %2784 = vmatpush1.bf16.msra.mxu0 %v2595
  %2785 = vmatprep.subr.bf16.mxu0 %v2590
  %2786 = vmatpush1.bf16.msra.mxu0 %v2589
  %2787 = vmatprep.subr.bf16.mxu0 %v2584
  %2788 = vmatpush1.bf16.msra.mxu0 %v2583
  %2789 = vmatprep.subr.bf16.mxu0 %v2578
  %2790 = vmatpush1.bf16.msra.mxu0 %v2577
  %2791 = vmatprep.subr.bf16.mxu0 0
  %2792 = vmatpush2.bf16.msra.mxu0 0
  %2793 = vmatprep.subr.bf16.mxu0 0
  %2794 = vmatpush2.bf16.msra.mxu0 0
  %2795 = vmatprep.subr.bf16.mxu0 0
  %2796 = vmatpush2.bf16.msra.mxu0 0
  %2797 = vmatprep.subr.bf16.mxu0 0
  %2798 = vmatpush2.bf16.msra.mxu0 0
  %2799 = vmatprep.subr.bf16.mxu0 %v2726
  %2800 = vmatpush2.bf16.msra.mxu0 %v2723
  %2801 = vmatprep.subr.bf16.mxu0 %v2638
  %2802 = vmatpush2.bf16.msra.mxu0 %v2637
  %2803 = vmatprep.subr.bf16.mxu0 %v2632
  %2804 = vmatpush2.bf16.msra.mxu0 %v2631
  %2805 = vmatprep.subr.bf16.mxu0 %v2626
  %2806 = vmatpush2.bf16.msra.mxu0 %v2625
  %2807 = vmatprep.mubr.bf16.mxu0 %v2714
  %2808 = vmatmul.mubr.bf16.gmra.mxu0 %v2297
  %v2809 = vpop.f32.mrf.mxu0
  %v2810 = vadd.f32 0.0, %v2809
  %v2811 = vpop.f32.mrf.mxu0
  %v2812 = vadd.f32 0.0, %v2811
  %v2813 = vpop.f32.mrf.mxu0
  %v2814 = vpop.f32.mrf.mxu0
  %2815 = vdwg.mxu0
  %2816 = vmatprep.subr.bf16.mxu0 %v2622
  %2817 = vmatpush1.bf16.msra.mxu0 %v2621
  %2818 = vmatprep.subr.bf16.mxu0 %v2616
  %2819 = vmatpush1.bf16.msra.mxu0 %v2615
  %2820 = vmatprep.subr.bf16.mxu0 %v2610
  %2821 = vmatpush1.bf16.msra.mxu0 %v2609
  %2822 = vmatprep.subr.bf16.mxu0 %v2604
  %2823 = vmatpush1.bf16.msra.mxu0 %v2603
  %2824 = vmatprep.subr.bf16.mxu0 %v2598
  %2825 = vmatpush1.bf16.msra.mxu0 %v2597
  %2826 = vmatprep.subr.bf16.mxu0 %v2592
  %2827 = vmatpush1.bf16.msra.mxu0 %v2591
  %2828 = vmatprep.subr.bf16.mxu0 %v2586
  %2829 = vmatpush1.bf16.msra.mxu0 %v2585
  %2830 = vmatprep.subr.bf16.mxu0 %v2580
  %2831 = vmatpush1.bf16.msra.mxu0 %v2579
  %2832 = vmatprep.subr.bf16.mxu0 0
  %2833 = vmatpush2.bf16.msra.mxu0 0
  %2834 = vmatprep.subr.bf16.mxu0 0
  %2835 = vmatpush2.bf16.msra.mxu0 0
  %2836 = vmatprep.subr.bf16.mxu0 0
  %2837 = vmatpush2.bf16.msra.mxu0 0
  %2838 = vmatprep.subr.bf16.mxu0 0
  %2839 = vmatpush2.bf16.msra.mxu0 0
  %2840 = vmatprep.subr.bf16.mxu0 %v2732
  %2841 = vmatpush2.bf16.msra.mxu0 %v2729
  %2842 = vmatprep.subr.bf16.mxu0 %v2640
  %2843 = vmatpush2.bf16.msra.mxu0 %v2639
  %2844 = vmatprep.subr.bf16.mxu0 %v2634
  %2845 = vmatpush2.bf16.msra.mxu0 %v2633
  %2846 = vmatprep.subr.bf16.mxu0 %v2628
  %2847 = vmatpush2.bf16.msra.mxu0 %v2627
  %2848 = vmatprep.mubr.bf16.mxu0 %v2714
  %2849 = vmatmul.mubr.bf16.gmra.mxu0 %v2297
  %v2850 = vpop.f32.mrf.mxu0
  %v2851 = vadd.f32 0.0, %v2850
  %v2852 = vpop.f32.mrf.mxu0
  %v2853 = vadd.f32 0.0, %v2852
  %v2854 = vpop.f32.mrf.mxu0
  %v2855 = vpop.f32.mrf.mxu0
  %2856 = vdwg.mxu0
  %v2863 = vcombine.low %v2769, %v2771
  %v2864 = vcombine.low %v2810, %v2812
  %v2865 = vcombine.low %v2851, %v2853
  %v2869 = vadd.f32 %v42, %v2863
  %v2870 = vadd.f32 %v43, %v2864
  %v2871 = vadd.f32 %v44, %v2865
  %v2872 = vmax.f32 %v2869, 0.0
  %v2873 = vmax.f32 %v2870, 0.0
  %v2874 = vmax.f32 %v2871, 0.0
  %v2878 = vcombine.high %v2872, %v2872
  %v2879 = vcombine.high %v2873, %v2873
  %v2882 = vcombine.low %v2872, %v2872
  %v2883 = vcombine.low %v2873, %v2873
  %v2884 = vcombine.low %v2874, %v2874
  %2885 = vrot.lane.b32.xlu0 %v2882, 127
  %v2886 = vpop.permute.xlu0 %2885
  %2887 = vrot.lane.b32.xlu0 %v2872, 127
  %v2888 = vpop.permute.xlu0 %2887
  %2889 = vrot.lane.b32.xlu0 %v2883, 127
  %v2890 = vpop.permute.xlu0 %2889
  %2891 = vrot.lane.b32.xlu0 %v2873, 127
  %v2892 = vpop.permute.xlu0 %2891
  %2893 = vrot.lane.b32.xlu0 %v2884, 127
  %v2894 = vpop.permute.xlu0 %2893
  %v2895 = vsel %vm65, %v2886, %v2888
  %v2896 = vsel %vm65, %v2888, %v2890
  %v2897 = vsel %vm65, %v2890, %v2892
  %v2898 = vsel %vm65, %v2892, %v2894
  %2904 = vrot.lane.b32.xlu0 %v2872, 126
  %v2905 = vpop.permute.xlu0 %2904
  %2906 = vrot.lane.b32.xlu0 %v2878, 126
  %v2907 = vpop.permute.xlu0 %2906
  %2908 = vrot.lane.b32.xlu0 %v2873, 126
  %v2909 = vpop.permute.xlu0 %2908
  %2910 = vrot.lane.b32.xlu0 %v2879, 126
  %v2911 = vpop.permute.xlu0 %2910
  %2912 = vrot.lane.b32.xlu0 %v2874, 126
  %v2913 = vpop.permute.xlu0 %2912
  %v2914 = vsel %vm85, %v2905, %v2907
  %v2915 = vsel %vm85, %v2907, %v2909
  %v2916 = vsel %vm85, %v2909, %v2911
  %v2917 = vsel %vm85, %v2911, %v2913
  %2923 = vrot.lane.b32.xlu0 %v2882, 110
  %v2924 = vpop.permute.xlu0 %2923
  %2925 = vrot.lane.b32.xlu0 %v2872, 110
  %v2926 = vpop.permute.xlu0 %2925
  %2927 = vrot.lane.b32.xlu0 %v2883, 110
  %v2928 = vpop.permute.xlu0 %2927
  %2929 = vrot.lane.b32.xlu0 %v2873, 110
  %v2930 = vpop.permute.xlu0 %2929
  %2931 = vrot.lane.b32.xlu0 %v2884, 110
  %v2932 = vpop.permute.xlu0 %2931
  %v2933 = vsel %vm105, %v2924, %v2926
  %v2934 = vsel %vm105, %v2926, %v2928
  %v2935 = vsel %vm105, %v2928, %v2930
  %v2936 = vsel %vm105, %v2930, %v2932
  %2942 = vrot.lane.b32.xlu0 %v2872, 109
  %v2943 = vpop.permute.xlu0 %2942
  %2944 = vrot.lane.b32.xlu0 %v2878, 109
  %v2945 = vpop.permute.xlu0 %2944
  %2946 = vrot.lane.b32.xlu0 %v2873, 109
  %v2947 = vpop.permute.xlu0 %2946
  %2948 = vrot.lane.b32.xlu0 %v2879, 109
  %v2949 = vpop.permute.xlu0 %2948
  %2950 = vrot.lane.b32.xlu0 %v2874, 109
  %v2951 = vpop.permute.xlu0 %2950
  %v2952 = vsel %vm125, %v2943, %v2945
  %v2953 = vsel %vm125, %v2945, %v2947
  %v2954 = vsel %vm125, %v2947, %v2949
  %v2955 = vsel %vm125, %v2949, %v2951
  %2961 = vrot.lane.b32.xlu0 %v2882, 108
  %v2962 = vpop.permute.xlu0 %2961
  %2963 = vrot.lane.b32.xlu0 %v2872, 108
  %v2964 = vpop.permute.xlu0 %2963
  %2965 = vrot.lane.b32.xlu0 %v2883, 108
  %v2966 = vpop.permute.xlu0 %2965
  %2967 = vrot.lane.b32.xlu0 %v2873, 108
  %v2968 = vpop.permute.xlu0 %2967
  %2969 = vrot.lane.b32.xlu0 %v2884, 108
  %v2970 = vpop.permute.xlu0 %2969
  %v2971 = vsel %vm145, %v2962, %v2964
  %v2972 = vsel %vm145, %v2964, %v2966
  %v2973 = vsel %vm145, %v2966, %v2968
  %v2974 = vsel %vm145, %v2968, %v2970
  %v2980 = vcombine.high %v2874, %v2874
  %2981 = vrot.lane.b32.xlu0 %v2872, 92
  %v2982 = vpop.permute.xlu0 %2981
  %2983 = vrot.lane.b32.xlu0 %v2878, 92
  %v2984 = vpop.permute.xlu0 %2983
  %2985 = vrot.lane.b32.xlu0 %v2873, 92
  %v2986 = vpop.permute.xlu0 %2985
  %2987 = vrot.lane.b32.xlu0 %v2879, 92
  %v2988 = vpop.permute.xlu0 %2987
  %2989 = vrot.lane.b32.xlu0 %v2874, 92
  %v2990 = vpop.permute.xlu0 %2989
  %2991 = vrot.lane.b32.xlu0 %v2980, 92
  %v2992 = vpop.permute.xlu0 %2991
  %v2993 = vsel %vm168, %v2982, %v2984
  %v2994 = vsel %vm168, %v2984, %v2986
  %v2995 = vsel %vm168, %v2986, %v2988
  %v2996 = vsel %vm168, %v2988, %v2990
  %v2997 = vsel %vm168, %v2990, %v2992
  %3003 = vrot.lane.b32.xlu0 %v2882, 91
  %v3004 = vpop.permute.xlu0 %3003
  %3005 = vrot.lane.b32.xlu0 %v2872, 91
  %v3006 = vpop.permute.xlu0 %3005
  %3007 = vrot.lane.b32.xlu0 %v2883, 91
  %v3008 = vpop.permute.xlu0 %3007
  %3009 = vrot.lane.b32.xlu0 %v2873, 91
  %v3010 = vpop.permute.xlu0 %3009
  %3011 = vrot.lane.b32.xlu0 %v2884, 91
  %v3012 = vpop.permute.xlu0 %3011
  %3013 = vrot.lane.b32.xlu0 %v2874, 91
  %v3014 = vpop.permute.xlu0 %3013
  %v3015 = vsel %vm191, %v3004, %v3006
  %v3016 = vsel %vm191, %v3006, %v3008
  %v3017 = vsel %vm191, %v3008, %v3010
  %v3018 = vsel %vm191, %v3010, %v3012
  %v3019 = vsel %vm191, %v3012, %v3014
  %3025 = vrot.lane.b32.xlu0 %v2872, 90
  %v3026 = vpop.permute.xlu0 %3025
  %3027 = vrot.lane.b32.xlu0 %v2878, 90
  %v3028 = vpop.permute.xlu0 %3027
  %3029 = vrot.lane.b32.xlu0 %v2873, 90
  %v3030 = vpop.permute.xlu0 %3029
  %3031 = vrot.lane.b32.xlu0 %v2879, 90
  %v3032 = vpop.permute.xlu0 %3031
  %3033 = vrot.lane.b32.xlu0 %v2874, 90
  %v3034 = vpop.permute.xlu0 %3033
  %3035 = vrot.lane.b32.xlu0 %v2980, 90
  %v3036 = vpop.permute.xlu0 %3035
  %v3037 = vsel %vm214, %v3026, %v3028
  %v3038 = vsel %vm214, %v3028, %v3030
  %v3039 = vsel %vm214, %v3030, %v3032
  %v3040 = vsel %vm214, %v3032, %v3034
  %v3041 = vsel %vm214, %v3034, %v3036
  %v3042 = vsel %vm220, %v2872, %v2895
  %v3043 = vsel %vm220, %v2878, %v2896
  %v3044 = vsel %vm220, %v2873, %v2897
  %v3045 = vsel %vm220, %v2879, %v2898
  %v3046 = vsel %vm220, %v2874, %v2894
  %v3047 = vsel %vm220, %v2914, %v2933
  %v3048 = vsel %vm220, %v2915, %v2934
  %v3049 = vsel %vm220, %v2916, %v2935
  %v3050 = vsel %vm220, %v2917, %v2936
  %v3051 = vsel %vm220, %v2913, %v2932
  %v3052 = vsel %vm220, %v2952, %v2971
  %v3053 = vsel %vm220, %v2953, %v2972
  %v3054 = vsel %vm220, %v2954, %v2973
  %v3055 = vsel %vm220, %v2955, %v2974
  %v3056 = vsel %vm220, %v2951, %v2970
  %v3057 = vsel %vm220, %v2993, %v3015
  %v3058 = vsel %vm220, %v2994, %v3016
  %v3059 = vsel %vm220, %v2995, %v3017
  %v3060 = vsel %vm220, %v2996, %v3018
  %v3061 = vsel %vm220, %v2997, %v3019
  %v3062 = vrot.slane %v35, 4
  %v3063 = vsel %vm241, %v3062, 0
  %v3065 = vsel %vm220, %v3037, 0
  %v3067 = vsel %vm220, %v3038, 0
  %v3069 = vsel %vm220, %v3039, 0
  %v3071 = vsel %vm220, %v3040, 0
  %v3073 = vsel %vm220, %v3041, 0
  %3075 = vmatprep.subr.mxu0 0.0
  %3076 = vmatpush1.msra.mxu0 0.0
  %3077 = vmatprep.subr.mxu0 0.0
  %3078 = vmatpush1.msra.mxu0 0.0
  %3079 = vmatprep.subr.mxu0 0.0
  %3080 = vmatpush1.msra.mxu0 0.0
  %3081 = vmatprep.subr.mxu0 0.0
  %3082 = vmatpush1.msra.mxu0 0.0
  %3083 = vmatprep.subr.mxu0 0.0
  %3084 = vmatpush1.msra.mxu0 0.0
  %3085 = vmatprep.subr.mxu0 0.0
  %3086 = vmatpush1.msra.mxu0 0.0
  %3087 = vmatprep.subr.mxu0 0.0
  %3088 = vmatpush1.msra.mxu0 0.0
  %3089 = vmatprep.subr.mxu0 0.0
  %3090 = vmatpush1.msra.mxu0 0.0
  %3091 = vmatprep.subr.mxu0 0.0
  %3092 = vmatpush1.msra.mxu0 0.0
  %3093 = vmatprep.subr.mxu0 0.0
  %3094 = vmatpush1.msra.mxu0 0.0
  %3095 = vmatprep.subr.mxu0 0.0
  %3096 = vmatpush1.msra.mxu0 0.0
  %3097 = vmatprep.subr.mxu0 %v3067
  %3098 = vmatpush1.msra.mxu0 %v3065
  %3099 = vmatprep.subr.mxu0 %v3058
  %3100 = vmatpush1.msra.mxu0 %v3057
  %3101 = vmatprep.subr.mxu0 %v3053
  %3102 = vmatpush1.msra.mxu0 %v3052
  %3103 = vmatprep.subr.mxu0 %v3048
  %3104 = vmatpush1.msra.mxu0 %v3047
  %3105 = vmatprep.subr.mxu0 %v3043
  %3106 = vmatpush1.msra.mxu0 %v3042
  %3107 = vmatprep.subr.mxu0 0.0
  %3108 = vmatpush2.msra.mxu0 0.0
  %3109 = vmatprep.subr.mxu0 0.0
  %3110 = vmatpush2.msra.mxu0 0.0
  %3111 = vmatprep.subr.mxu0 0.0
  %3112 = vmatpush2.msra.mxu0 0.0
  %3113 = vmatprep.subr.mxu0 0.0
  %3114 = vmatpush2.msra.mxu0 0.0
  %3115 = vmatprep.subr.mxu0 0.0
  %3116 = vmatpush2.msra.mxu0 0.0
  %3117 = vmatprep.subr.mxu0 0.0
  %3118 = vmatpush2.msra.mxu0 0.0
  %3119 = vmatprep.subr.mxu0 0.0
  %3120 = vmatpush2.msra.mxu0 0.0
  %3121 = vmatprep.subr.mxu0 0.0
  %3122 = vmatpush2.msra.mxu0 0.0
  %3123 = vmatprep.subr.mxu0 0.0
  %3124 = vmatpush2.msra.mxu0 0.0
  %3125 = vmatprep.subr.mxu0 0.0
  %3126 = vmatpush2.msra.mxu0 0.0
  %3127 = vmatprep.subr.mxu0 0.0
  %3128 = vmatpush2.msra.mxu0 0.0
  %3129 = vmatprep.subr.mxu0 0.0
  %3130 = vmatpush2.msra.mxu0 0.0
  %3131 = vmatprep.subr.mxu0 0.0
  %3132 = vmatpush2.msra.mxu0 0.0
  %3133 = vmatprep.subr.mxu0 0.0
  %3134 = vmatpush2.msra.mxu0 0.0
  %3135 = vmatprep.subr.mxu0 0.0
  %3136 = vmatpush2.msra.mxu0 0.0
  %3137 = vmatprep.subr.mxu0 0.0
  %3138 = vmatpush2.msra.mxu0 0.0
  %3139 = vmatprep.mubr.f32.mxu0 0.0
  %3140 = vmatmul.mubr.f32.gmra.mxu0 %v3063
  %v3141 = vpop.f32.mrf.mxu0
  %v3142 = vadd.f32 0.0, %v3141
  %v3143 = vpop.f32.mrf.mxu0
  %v3144 = vadd.f32 0.0, %v3143
  %3145 = vdwg.mxu0
  %3146 = vmatprep.subr.mxu0 0.0
  %3147 = vmatpush1.msra.mxu0 0.0
  %3148 = vmatprep.subr.mxu0 0.0
  %3149 = vmatpush1.msra.mxu0 0.0
  %3150 = vmatprep.subr.mxu0 0.0
  %3151 = vmatpush1.msra.mxu0 0.0
  %3152 = vmatprep.subr.mxu0 0.0
  %3153 = vmatpush1.msra.mxu0 0.0
  %3154 = vmatprep.subr.mxu0 0.0
  %3155 = vmatpush1.msra.mxu0 0.0
  %3156 = vmatprep.subr.mxu0 0.0
  %3157 = vmatpush1.msra.mxu0 0.0
  %3158 = vmatprep.subr.mxu0 0.0
  %3159 = vmatpush1.msra.mxu0 0.0
  %3160 = vmatprep.subr.mxu0 0.0
  %3161 = vmatpush1.msra.mxu0 0.0
  %3162 = vmatprep.subr.mxu0 0.0
  %3163 = vmatpush1.msra.mxu0 0.0
  %3164 = vmatprep.subr.mxu0 0.0
  %3165 = vmatpush1.msra.mxu0 0.0
  %3166 = vmatprep.subr.mxu0 0.0
  %3167 = vmatpush1.msra.mxu0 0.0
  %3168 = vmatprep.subr.mxu0 %v3071
  %3169 = vmatpush1.msra.mxu0 %v3069
  %3170 = vmatprep.subr.mxu0 %v3060
  %3171 = vmatpush1.msra.mxu0 %v3059
  %3172 = vmatprep.subr.mxu0 %v3055
  %3173 = vmatpush1.msra.mxu0 %v3054
  %3174 = vmatprep.subr.mxu0 %v3050
  %3175 = vmatpush1.msra.mxu0 %v3049
  %3176 = vmatprep.subr.mxu0 %v3045
  %3177 = vmatpush1.msra.mxu0 %v3044
  %3178 = vmatprep.subr.mxu0 0.0
  %3179 = vmatpush2.msra.mxu0 0.0
  %3180 = vmatprep.subr.mxu0 0.0
  %3181 = vmatpush2.msra.mxu0 0.0
  %3182 = vmatprep.subr.mxu0 0.0
  %3183 = vmatpush2.msra.mxu0 0.0
  %3184 = vmatprep.subr.mxu0 0.0
  %3185 = vmatpush2.msra.mxu0 0.0
  %3186 = vmatprep.subr.mxu0 0.0
  %3187 = vmatpush2.msra.mxu0 0.0
  %3188 = vmatprep.subr.mxu0 0.0
  %3189 = vmatpush2.msra.mxu0 0.0
  %3190 = vmatprep.subr.mxu0 0.0
  %3191 = vmatpush2.msra.mxu0 0.0
  %3192 = vmatprep.subr.mxu0 0.0
  %3193 = vmatpush2.msra.mxu0 0.0
  %3194 = vmatprep.subr.mxu0 0.0
  %3195 = vmatpush2.msra.mxu0 0.0
  %3196 = vmatprep.subr.mxu0 0.0
  %3197 = vmatpush2.msra.mxu0 0.0
  %3198 = vmatprep.subr.mxu0 0.0
  %3199 = vmatpush2.msra.mxu0 0.0
  %3200 = vmatprep.subr.mxu0 0.0
  %3201 = vmatpush2.msra.mxu0 0.0
  %3202 = vmatprep.subr.mxu0 0.0
  %3203 = vmatpush2.msra.mxu0 0.0
  %3204 = vmatprep.subr.mxu0 0.0
  %3205 = vmatpush2.msra.mxu0 0.0
  %3206 = vmatprep.subr.mxu0 0.0
  %3207 = vmatpush2.msra.mxu0 0.0
  %3208 = vmatprep.subr.mxu0 0.0
  %3209 = vmatpush2.msra.mxu0 0.0
  %3210 = vmatprep.mubr.f32.mxu0 0.0
  %3211 = vmatmul.mubr.f32.gmra.mxu0 %v3063
  %v3212 = vpop.f32.mrf.mxu0
  %v3213 = vadd.f32 0.0, %v3212
  %v3214 = vpop.f32.mrf.mxu0
  %v3215 = vadd.f32 0.0, %v3214
  %3216 = vdwg.mxu0
  %3217 = vmatprep.subr.mxu0 0.0
  %3218 = vmatpush1.msra.mxu0 0.0
  %3219 = vmatprep.subr.mxu0 0.0
  %3220 = vmatpush1.msra.mxu0 0.0
  %3221 = vmatprep.subr.mxu0 0.0
  %3222 = vmatpush1.msra.mxu0 0.0
  %3223 = vmatprep.subr.mxu0 0.0
  %3224 = vmatpush1.msra.mxu0 0.0
  %3225 = vmatprep.subr.mxu0 0.0
  %3226 = vmatpush1.msra.mxu0 0.0
  %3227 = vmatprep.subr.mxu0 0.0
  %3228 = vmatpush1.msra.mxu0 0.0
  %3229 = vmatprep.subr.mxu0 0.0
  %3230 = vmatpush1.msra.mxu0 0.0
  %3231 = vmatprep.subr.mxu0 0.0
  %3232 = vmatpush1.msra.mxu0 0.0
  %3233 = vmatprep.subr.mxu0 0.0
  %3234 = vmatpush1.msra.mxu0 0.0
  %3235 = vmatprep.subr.mxu0 0.0
  %3236 = vmatpush1.msra.mxu0 0.0
  %3237 = vmatprep.subr.mxu0 0.0
  %3238 = vmatpush1.msra.mxu0 0.0
  %3239 = vmatprep.subr.mxu0 0.0
  %3240 = vmatpush1.msra.mxu0 %v3073
  %3241 = vmatprep.subr.mxu0 0.0
  %3242 = vmatpush1.msra.mxu0 %v3061
  %3243 = vmatprep.subr.mxu0 0.0
  %3244 = vmatpush1.msra.mxu0 %v3056
  %3245 = vmatprep.subr.mxu0 0.0
  %3246 = vmatpush1.msra.mxu0 %v3051
  %3247 = vmatprep.subr.mxu0 0.0
  %3248 = vmatpush1.msra.mxu0 %v3046
  %3249 = vmatprep.subr.mxu0 0.0
  %3250 = vmatpush2.msra.mxu0 0.0
  %3251 = vmatprep.subr.mxu0 0.0
  %3252 = vmatpush2.msra.mxu0 0.0
  %3253 = vmatprep.subr.mxu0 0.0
  %3254 = vmatpush2.msra.mxu0 0.0
  %3255 = vmatprep.subr.mxu0 0.0
  %3256 = vmatpush2.msra.mxu0 0.0
  %3257 = vmatprep.subr.mxu0 0.0
  %3258 = vmatpush2.msra.mxu0 0.0
  %3259 = vmatprep.subr.mxu0 0.0
  %3260 = vmatpush2.msra.mxu0 0.0
  %3261 = vmatprep.subr.mxu0 0.0
  %3262 = vmatpush2.msra.mxu0 0.0
  %3263 = vmatprep.subr.mxu0 0.0
  %3264 = vmatpush2.msra.mxu0 0.0
  %3265 = vmatprep.subr.mxu0 0.0
  %3266 = vmatpush2.msra.mxu0 0.0
  %3267 = vmatprep.subr.mxu0 0.0
  %3268 = vmatpush2.msra.mxu0 0.0
  %3269 = vmatprep.subr.mxu0 0.0
  %3270 = vmatpush2.msra.mxu0 0.0
  %3271 = vmatprep.subr.mxu0 0.0
  %3272 = vmatpush2.msra.mxu0 0.0
  %3273 = vmatprep.subr.mxu0 0.0
  %3274 = vmatpush2.msra.mxu0 0.0
  %3275 = vmatprep.subr.mxu0 0.0
  %3276 = vmatpush2.msra.mxu0 0.0
  %3277 = vmatprep.subr.mxu0 0.0
  %3278 = vmatpush2.msra.mxu0 0.0
  %3279 = vmatprep.subr.mxu0 0.0
  %3280 = vmatpush2.msra.mxu0 0.0
  %3281 = vmatprep.mubr.f32.mxu0 0.0
  %3282 = vmatmul.mubr.f32.gmra.mxu0 %v3063
  %v3283 = vpop.f32.mrf.mxu0
  %v3284 = vadd.f32 0.0, %v3283
  %v3285 = vpop.f32.mrf.mxu0
  %3286 = vdwg.mxu0
  %v3287 = vlaneseq
  %v3288 = vshrl.u32 %v3287, 7
  %v3289 = vsub.s32 5, %v3288
  %v3290 = vrot.slane %v37, %v3289
  %v3291 = vlaneseq
  %v3292 = vshrl.u32 %v3291, 7
  %v3293 = vsub.s32 5, %v3292
  %v3294 = vrot.slane %v38, %v3293
  %v3295 = vlaneseq
  %v3296 = vshrl.u32 %v3295, 7
  %v3297 = vsub.s32 5, %v3296
  %v3298 = vrot.slane %v39, %v3297
  %v3299 = vlaneseq
  %v3300 = vshrl.u32 %v3299, 7
  %v3301 = vsub.s32 5, %v3300
  %v3302 = vrot.slane %v40, %v3301
  %v3303 = vlaneseq
  %v3304 = vshrl.u32 %v3303, 7
  %v3305 = vsub.s32 5, %v3304
  %v3306 = vrot.slane %v41, %v3305
  %v3307 = vmul.f32 %v3142, %v3290
  %v3308 = vmul.f32 %v3144, %v3294
  %v3309 = vmul.f32 %v3213, %v3298
  %v3310 = vmul.f32 %v3215, %v3302
  %v3311 = vmul.f32 %v3284, %v3306
  %v3312 = vsel %vm220, %v3307, 0.0
  %v3313 = vsel %vm220, %v3308, 0.0
  %v3314 = vadd.f32 %v3312, %v3313
  %v3315 = vsel %vm220, %v3309, 0.0
  %v3316 = vadd.f32 %v3314, %v3315
  %v3317 = vsel %vm220, %v3310, 0.0
  %v3318 = vadd.f32 %v3316, %v3317
  %v3319 = vsel %vm499, %v3311, 0.0
  %v3320 = vadd.f32 %v3318, %v3319
  %3321 = vadd.xlane.f32.xlu0 %v3320
  %v3322 = vpop.xlane.xlu0 %3321
  %v3323 = vmul.f32 %v3322, 0.001953125
  %v3324 = vmul.f32 %v3307, %v3142
  %v3325 = vmul.f32 %v3308, %v3144
  %v3326 = vmul.f32 %v3309, %v3213
  %v3327 = vmul.f32 %v3310, %v3215
  %v3328 = vmul.f32 %v3311, %v3284
  %v3329 = vsel %vm220, %v3324, 0.0
  %v3330 = vsel %vm220, %v3325, 0.0
  %v3331 = vadd.f32 %v3329, %v3330
  %v3332 = vsel %vm220, %v3326, 0.0
  %v3333 = vadd.f32 %v3331, %v3332
  %v3334 = vsel %vm220, %v3327, 0.0
  %v3335 = vadd.f32 %v3333, %v3334
  %v3336 = vsel %vm499, %v3328, 0.0
  %v3337 = vadd.f32 %v3335, %v3336
  %3338 = vadd.xlane.f32.xlu0 %v3337
  %v3339 = vpop.xlane.xlu0 %3338
  %v3340 = vmul.f32 %v3339, 0.001953125
  %v3341 = vmul.f32 %v3323, %v3323
  %v3342 = vsub.f32 %v3340, %v3341
  %v3343 = vadd.f32 %v3342, 1e-05
  %v3344 = vrsqrt.pop %v3343
  %v3345 = vmul.f32 %v36, %v3344
  %3347 = vset.pattern.permute.xlu0 5
  %3348 = vperm.xlu0 %3347, %v3345
  %v3349 = vpop.permute.xlu0 %3348
  %v3351 = vmul.f32 %v3142, %v3349
  %v3352 = vmul.f32 %v3144, %v3349
  %v3353 = vmul.f32 %v3213, %v3349
  %v3354 = vmul.f32 %v3215, %v3349
  %v3355 = vmul.f32 %v3284, %v3349
  %v3356 = vmul.f32 %v3323, %v3345
  %3358 = vrot.lane.b32.xlu0 %v3356, 6
  %v3359 = vpop.permute.xlu0 %3358
  %v3361 = vsub.f32 %v36, %v3359
  %3363 = vset.pattern.permute.xlu0 11
  %3364 = vperm.xlu0 %3363, %v3361
  %v3365 = vpop.permute.xlu0 %3364
  %v3367 = vadd.f32 %v3351, %v3365
  %v3368 = vadd.f32 %v3352, %v3365
  %v3369 = vadd.f32 %v3353, %v3365
  %v3370 = vadd.f32 %v3354, %v3365
  %v3371 = vadd.f32 %v3355, %v3365
  %v3372 = vmul.f32 %v3367, %v3290
  %v3373 = vmul.f32 %v3368, %v3294
  %v3374 = vmul.f32 %v3369, %v3298
  %v3375 = vmul.f32 %v3370, %v3302
  %v3376 = vmul.f32 %v3371, %v3306
  %3377 = vst [vmem:[%s9] sm:$0xff] 0.0
  %3378 = vst [vmem:[%s9 + $0x8] sm:$0xff] 0.0
  %3379 = vst [vmem:[%s9 + $0x10] sm:$0xff] 0.0
  %3380 = vst [vmem:[%s9 + $0x18] sm:$0xff] 0.0
  %3381 = vst [vmem:[%s9 + $0x20] sm:$0xff] 0.0
  %3382 = vst [vmem:[%s9] sm:$0xf] %v3372
  %3383 = vst [vmem:[%s9 + $0x8] sm:$0xf] %v3373
  %3384 = vst [vmem:[%s9 + $0x10] sm:$0xf] %v3374
  %3385 = vst [vmem:[%s9 + $0x18] sm:$0xf] %v3375
  %3386 = vst.msk [vmem:[%s9 + $0x20] sm:$0xf] %vm499, %v3376
  // Predicated region
  $region38: #{usrm3_forward.1} parent=0 // pred_check
    _
  $region39: #{usrm3_forward.1} parent=0 // pred_check_branch
    %3388 = sbr.rel (0) target = $region41
  $region40: #{usrm3_forward.1} parent=0 // pred_region
    _
  $region41: #{usrm3_forward.1} parent=0 // pred_fallthru
    _
  // Predicated region
  $region42: #{usrm3_forward.1} parent=0 // pred_check
    _
  $region43: #{usrm3_forward.1} parent=0 // pred_check_branch
    %3390 = sbr.rel (0) target = $region45
  $region44: #{usrm3_forward.1} parent=0 // pred_region
    _
  $region45: #{usrm3_forward.1} parent=0 // pred_fallthru
    _

</llo_original>
